<compile_context>
chip_gen: v7x
topology: tpu7x:2x2x1
jax: 0.10.0
libtpu: 0.0.40
codegen_flags: <defaults>
</compile_context>

<pallas_src>
import functools

import numpy as np
import jax
import jax.numpy as jnp
from jax.experimental import pallas as pl
from jax.experimental.pallas import tpu as pltpu

# ----------------------------- small config ---------------------------------
B = 2                  # batch
NUM_POINTS = 64        # num_points (2500 in the original, scaled down)
BOTTLENECK = 128       # bottleneck_size (1024 in the original, scaled down)
NB_PRIM1 = 2           # nb_primitives1 (5 in the original)
NB_PRIM2 = 2           # nb_primitives2 (5 in the original)
GRAPH_FEAT = 84        # GraphEncoder output channels (fixed by 3 + 84 + bottleneck)
OUT_PAD = 8            # decoder xyz output padded 3 -> 8 lanes (sliced in wrapper)
BN_EPS = 1e-5

DEC1_KEYS = ("w1p", "w1f", "b1", "w2", "b2", "w3", "b3", "w4", "b4")
DEC2_KEYS = ("w1c", "w1g", "w1f", "b1", "w2", "b2", "w3", "b3", "w4", "b4")


def _nbytes(*arrays):
    return int(sum(int(np.prod(a.shape)) * jnp.dtype(a.dtype).itemsize for a in arrays))


# ----------------------------- Pallas kernels --------------------------------
def _encoder_kernel(pts_ref, w1, b1, w2, b2, w3, b3, wl, bl, feat_ref):
    """PointNetfeat (trans=False) + Linear/BN/ReLU head, one batch per grid step."""
    x = pts_ref[0].astype(jnp.bfloat16)                               # (N, 3)
    h = jnp.dot(x, w1[...], preferred_element_type=jnp.float32) + b1[...]
    h = jnp.maximum(h, 0.0)                                           # relu(bn1(conv1))
    h = jnp.dot(h.astype(jnp.bfloat16), w2[...],
                preferred_element_type=jnp.float32) + b2[...]
    h = jnp.maximum(h, 0.0)                                           # relu(bn2(conv2))
    h = jnp.dot(h.astype(jnp.bfloat16), w3[...],
                preferred_element_type=jnp.float32) + b3[...]         # bn3(conv3), no relu
    g = jnp.max(h, axis=0, keepdims=True)                             # global max-pool (1, 1024)
    f = jnp.dot(g.astype(jnp.bfloat16), wl[...],
                preferred_element_type=jnp.float32) + bl[...]         # Linear + BN (folded)
    feat_ref[0] = jnp.maximum(f, 0.0)                                 # ReLU -> (1, bottleneck)


def _batch_one_hot(rows, batches, pts_per_batch):
    """(rows, batches) f32 one-hot: row r belongs to batch r // pts_per_batch.

    Built with 2-D iota + range compares (no integer division)."""
    r = jax.lax.broadcasted_iota(jnp.int32, (rows, batches), 0)
    b = jax.lax.broadcasted_iota(jnp.int32, (rows, batches), 1)
    lo = b * pts_per_batch
    return ((r >= lo) & (r < lo + pts_per_batch)).astype(jnp.float32)


def _respgc_tail(h1, w2, b2, w3, b3, w4, b4):
    """ResPointGenCon conv2..conv4: relu(bn2(conv2)), relu(bn3(conv3)), tanh(conv4)."""
    h = jnp.maximum(h1, 0.0)
    h = jnp.dot(h.astype(jnp.bfloat16), w2[0],
                preferred_element_type=jnp.float32) + b2[0]
    h = jnp.maximum(h, 0.0)
    h = jnp.dot(h.astype(jnp.bfloat16), w3[0],
                preferred_element_type=jnp.float32) + b3[0]
    h = jnp.maximum(h, 0.0)
    return jnp.tanh(jnp.dot(h.astype(jnp.bfloat16), w4[0],
                            preferred_element_type=jnp.float32) + b4[0])


def _dec1_kernel(grid_ref, feat_ref, w1p, w1f, b1, w2, b2, w3, b3, w4, b4,
                 out_ref, *, pts_per_batch):
    """Stage-1 ResPointGenCon, one primitive per grid step, all rows in one tile."""
    x = grid_ref[0]                                                   # (R, 2) f32
    feat = feat_ref[...].astype(jnp.bfloat16)                         # (B, K)
    # rank-1-per-batch feat contribution to conv1 (replaces the (B,K,N) broadcast)
    fp = jnp.dot(feat, w1f[0], preferred_element_type=jnp.float32)    # (B, C1)
    sel = _batch_one_hot(x.shape[0], feat.shape[0], pts_per_batch)    # (R, B)
    fp_rows = jnp.dot(sel, fp, preferred_element_type=jnp.float32)    # (R, C1)
    h1 = (jnp.dot(x.astype(jnp.bfloat16), w1p[0],
                  preferred_element_type=jnp.float32) + fp_rows + b1[0])
    # initial_points == 0 in the original stage-1 call -> no residual add.
    out_ref[0] = _respgc_tail(h1, w2, b2, w3, b3, w4, b4)             # (R, 8)


def _dec2_kernel(coarse_ref, feat_ref, wg, bg,
                 w1c, w1g, w1f, b1, w2, b2, w3, b3, w4, b4,
                 out_ref, *, pts_per_batch):
    """Stage-2 ResPointGenCon (+ fused graph-feature stand-in), one prim per step."""
    c = coarse_ref[...]                                               # (R, 8) f32, cols 3:8 = 0
    cb16 = c.astype(jnp.bfloat16)
    # TODO(synk): GraphEncoder (DGCNN kNN graph conv) source unavailable; per-point
    # linear+ReLU stand-in (identical values recomputed per prim, same shape).
    gf = jnp.maximum(jnp.dot(cb16, wg[...],
                             preferred_element_type=jnp.float32) + bg[...], 0.0)  # (R, 84)
    feat = feat_ref[...].astype(jnp.bfloat16)                         # (B, K)
    fp = jnp.dot(feat, w1f[0], preferred_element_type=jnp.float32)    # (B, C1)
    sel = _batch_one_hot(c.shape[0], feat.shape[0], pts_per_batch)    # (R, B)
    fp_rows = jnp.dot(sel, fp, preferred_element_type=jnp.float32)    # (R, C1)
    h1 = (jnp.dot(cb16, w1c[0], preferred_element_type=jnp.float32)
          + jnp.dot(gf.astype(jnp.bfloat16), w1g[0],
                    preferred_element_type=jnp.float32)
          + fp_rows + b1[0])
    # residual on the coarse points (padded lanes of c are zero).
    out_ref[0] = _respgc_tail(h1, w2, b2, w3, b3, w4, b4) + c


# ------------------------------ wrappers --------------------------------------
def encoder_pallas(points, enc_params):
    """points: (B, N, 3) -> bottleneck feature (B, K)."""
    Bb, N, _ = points.shape
    feat_dim = enc_params[-1].shape[-1]
    weight_specs = [pl.BlockSpec(p.shape, lambda b: (0, 0)) for p in enc_params]
    flops = 2 * Bb * N * (3 * 64 + 64 * 128 + 128 * 1024) + 2 * Bb * 1024 * feat_dim
    out = pl.pallas_call(
        _encoder_kernel,
        out_shape=jax.ShapeDtypeStruct((Bb, 1, feat_dim), jnp.float32),
        grid=(Bb,),
        in_specs=[pl.BlockSpec((1, N, 3), lambda b: (b, 0, 0))] + weight_specs,
        out_specs=pl.BlockSpec((1, 1, feat_dim), lambda b: (b, 0, 0)),
        compiler_params=pltpu.CompilerParams(dimension_semantics=("parallel",)),
        cost_estimate=pl.CostEstimate(
            flops=int(flops), transcendentals=0,
            bytes_accessed=_nbytes(points, *enc_params) + Bb * feat_dim * 4),
    )(points, *enc_params)
    return out.reshape(Bb, feat_dim)


def decoder1_pallas(rand_grid, feat, dp):
    """rand_grid: (NB1, B*Np, 2); feat: (B, K) -> (NB1, B*Np, OUT_PAD)."""
    NB, R, _ = rand_grid.shape
    Bb, feat_dim = feat.shape
    n_per = R // Bb
    stacked = [dp[k] for k in DEC1_KEYS]
    c1, c2, c3 = dp["b1"].shape[-1], dp["b2"].shape[-1], dp["b3"].shape[-1]
    macs = (Bb * feat_dim * c1 + R * (Bb * c1 + 2 * c1)
            + R * (c1 * c2 + c2 * c3 + c3 * OUT_PAD))
    kernel = functools.partial(_dec1_kernel, pts_per_batch=n_per)
    return pl.pallas_call(
        kernel,
        out_shape=jax.ShapeDtypeStruct((NB, R, OUT_PAD), jnp.float32),
        grid=(NB,),
        in_specs=([pl.BlockSpec((1, R, 2), lambda p: (p, 0, 0)),
                   pl.BlockSpec((Bb, feat_dim), lambda p: (0, 0))]
                  + [pl.BlockSpec((1,) + a.shape[1:], lambda p: (p, 0, 0))
                     for a in stacked]),
        out_specs=pl.BlockSpec((1, R, OUT_PAD), lambda p: (p, 0, 0)),
        compiler_params=pltpu.CompilerParams(dimension_semantics=("parallel",)),
        cost_estimate=pl.CostEstimate(
            flops=int(2 * NB * macs), transcendentals=int(NB * R * OUT_PAD),
            bytes_accessed=_nbytes(rand_grid, feat, *stacked) + NB * R * OUT_PAD * 4),
    )(rand_grid, feat, *stacked)


def decoder2_pallas(coarse8, feat, gf_w, gf_b, dp):
    """coarse8: (B*Nc, 8); feat: (B, K) -> (NB2, B*Nc, OUT_PAD)."""
    R = coarse8.shape[0]
    Bb, feat_dim = feat.shape
    NB = dp["b1"].shape[0]
    n_per = R // Bb
    stacked = [dp[k] for k in DEC2_KEYS]
    c1, c2, c3 = dp["b1"].shape[-1], dp["b2"].shape[-1], dp["b3"].shape[-1]
    macs = (R * OUT_PAD * GRAPH_FEAT + Bb * feat_dim * c1
            + R * (Bb * c1 + OUT_PAD * c1 + GRAPH_FEAT * c1)
            + R * (c1 * c2 + c2 * c3 + c3 * OUT_PAD))
    kernel = functools.partial(_dec2_kernel, pts_per_batch=n_per)
    return pl.pallas_call(
        kernel,
        out_shape=jax.ShapeDtypeStruct((NB, R, OUT_PAD), jnp.float32),
        grid=(NB,),
        in_specs=([pl.BlockSpec((R, OUT_PAD), lambda p: (0, 0)),
                   pl.BlockSpec((Bb, feat_dim), lambda p: (0, 0)),
                   pl.BlockSpec(gf_w.shape, lambda p: (0, 0)),
                   pl.BlockSpec(gf_b.shape, lambda p: (0, 0))]
                  + [pl.BlockSpec((1,) + a.shape[1:], lambda p: (p, 0, 0))
                     for a in stacked]),
        out_specs=pl.BlockSpec((1, R, OUT_PAD), lambda p: (p, 0, 0)),
        compiler_params=pltpu.CompilerParams(dimension_semantics=("parallel",)),
        cost_estimate=pl.CostEstimate(
            flops=int(2 * NB * macs), transcendentals=int(NB * R * OUT_PAD),
            bytes_accessed=(_nbytes(coarse8, feat, gf_w, gf_b, *stacked)
                            + NB * R * OUT_PAD * 4)),
    )(coarse8, feat, gf_w, gf_b, *stacked)


# --------------------------- parameter init ----------------------------------
def _bn_fold(key, cout):
    """Eval-mode BatchNorm folded to per-channel (scale, shift)."""
    kg, kb, km, kv = jax.random.split(key, 4)
    gamma = jax.random.uniform(kg, (cout,), jnp.float32, minval=0.5, maxval=1.5)
    beta = 0.1 * jax.random.normal(kb, (cout,), jnp.float32)
    rmean = 0.1 * jax.random.normal(km, (cout,), jnp.float32)
    rvar = jax.random.uniform(kv, (cout,), jnp.float32, minval=0.5, maxval=1.5)
    scale = gamma * jax.lax.rsqrt(rvar + BN_EPS)
    shift = beta - rmean * scale
    return scale, shift


def _conv_bn_layer(key, cin, cout):
    """1x1 Conv/Linear + BN folded: returns (bf16 W*scale, f32 (1,cout) b*scale+shift)."""
    kw, kb, kbn = jax.random.split(key, 3)
    w = jax.random.normal(kw, (cin, cout), jnp.float32) / np.sqrt(cin)
    b = 0.05 * jax.random.normal(kb, (cout,), jnp.float32)
    s, t = _bn_fold(kbn, cout)
    return (w * s[None, :]).astype(jnp.bfloat16), (b * s + t).reshape(1, cout)


def _conv_tanh_layer(key, cin):
    """conv4 (cin -> 3), output padded to OUT_PAD lanes with zero columns."""
    kw, kb = jax.random.split(key)
    w = jax.random.normal(kw, (cin, 3), jnp.float32) / np.sqrt(cin)
    b = 0.05 * jax.random.normal(kb, (3,), jnp.float32)
    w = jnp.pad(w, ((0, 0), (0, OUT_PAD - 3)))
    b = jnp.pad(b, (0, OUT_PAD - 3))
    return w.astype(jnp.bfloat16), b.reshape(1, OUT_PAD)


def _split_conv1(key_w, key_b, key_bn, cin, c1):
    """conv1 + bn1 folded; returns full (cin, c1) bf16-ready f32 weight and (1,c1) bias."""
    w1 = jax.random.normal(key_w, (cin, c1), jnp.float32) / np.sqrt(cin)
    b1 = 0.05 * jax.random.normal(key_b, (c1,), jnp.float32)
    s1, t1 = _bn_fold(key_bn, c1)
    return w1 * s1[None, :], (b1 * s1 + t1).reshape(1, c1)


def init_dec1_prim(key, feat_dim, c1):
    c2, c3 = c1 // 2, c1 // 4
    ks = jax.random.split(key, 6)
    w1, b1 = _split_conv1(ks[0], ks[1], ks[2], 2 + feat_dim, c1)
    w2, b2 = _conv_bn_layer(ks[3], c1, c2)
    w3, b3 = _conv_bn_layer(ks[4], c2, c3)
    w4, b4 = _conv_tanh_layer(ks[5], c3)
    return dict(w1p=w1[:2].astype(jnp.bfloat16),          # grid part of conv1
                w1f=w1[2:].astype(jnp.bfloat16),          # feat part of conv1
                b1=b1, w2=w2, b2=b2, w3=w3, b3=b3, w4=w4, b4=b4)


def init_dec2_prim(key, feat_dim, c1):
    c2, c3 = c1 // 2, c1 // 4
    ks = jax.random.split(key, 6)
    cin = 3 + GRAPH_FEAT + feat_dim
    w1, b1 = _split_conv1(ks[0], ks[1], ks[2], cin, c1)
    w1c = jnp.pad(w1[:3], ((0, OUT_PAD - 3), (0, 0))).astype(jnp.bfloat16)  # xyz part (8, c1)
    w1g = w1[3:3 + GRAPH_FEAT].astype(jnp.bfloat16)                          # graphfeat part
    w1f = w1[3 + GRAPH_FEAT:].astype(jnp.bfloat16)                           # feat part
    w2, b2 = _conv_bn_layer(ks[3], c1, c2)
    w3, b3 = _conv_bn_layer(ks[4], c2, c3)
    w4, b4 = _conv_tanh_layer(ks[5], c3)
    return dict(w1c=w1c, w1g=w1g, w1f=w1f, b1=b1,
                w2=w2, b2=b2, w3=w3, b3=b3, w4=w4, b4=b4)


def init_encoder_params(key, feat_dim):
    ks = jax.random.split(key, 4)
    w1, b1 = _conv_bn_layer(ks[0], 3, 64)        # conv1 + bn1
    w2, b2 = _conv_bn_layer(ks[1], 64, 128)      # conv2 + bn2
    w3, b3 = _conv_bn_layer(ks[2], 128, 1024)    # conv3 + bn3
    wl, bl = _conv_bn_layer(ks[3], 1024, feat_dim)  # Linear + BN (ReLU in kernel)
    return (w1, b1, w2, b2, w3, b3, wl, bl)


def init_params(key):
    k_enc, k_gf, k_d1, k_d2 = jax.random.split(key, 4)
    c1_1 = 2 + BOTTLENECK
    c1_2 = 3 + GRAPH_FEAT + BOTTLENECK
    dec1 = [init_dec1_prim(k, BOTTLENECK, c1_1) for k in jax.random.split(k_d1, NB_PRIM1)]
    dec2 = [init_dec2_prim(k, BOTTLENECK, c1_2) for k in jax.random.split(k_d2, NB_PRIM2)]
    kgw, kgb = jax.random.split(k_gf)
    gf_w = jnp.pad(0.5 * jax.random.normal(kgw, (3, GRAPH_FEAT), jnp.float32),
                   ((0, OUT_PAD - 3), (0, 0))).astype(jnp.bfloat16)
    gf_b = 0.05 * jax.random.normal(kgb, (1, GRAPH_FEAT), jnp.float32)
    return {
        "enc": init_encoder_params(k_enc, BOTTLENECK),
        "gf_w": gf_w, "gf_b": gf_b,
        "dec1": {k: jnp.stack([d[k] for d in dec1]) for k in DEC1_KEYS},
        "dec2": {k: jnp.stack([d[k] for d in dec2]) for k in DEC2_KEYS},
    }


# ------------------------------ full forward ---------------------------------
def ae_pointnet_dcg_forward(points, params, rng_key):
    """points: (B, num_points, 3) -> (coarse (B, Nc, 3), fine (B, Nc*NB2, 3))."""
    Bb = points.shape[0]
    feat = encoder_pallas(points, params["enc"])                      # (B, bottleneck)

    n_per = NUM_POINTS // (NB_PRIM1 * NB_PRIM2)
    rand_grid = jax.random.uniform(rng_key, (NB_PRIM1, Bb * n_per, 2), jnp.float32)
    out1 = decoder1_pallas(rand_grid, feat, params["dec1"])           # (NB1, B*n_per, 8)

    # torch.cat(outs, dim=2): per batch, concatenate primitives along the point axis.
    n_coarse = NB_PRIM1 * n_per
    coarse8 = (out1.reshape(NB_PRIM1, Bb, n_per, OUT_PAD)
               .transpose(1, 0, 2, 3).reshape(Bb * n_coarse, OUT_PAD))

    out2 = decoder2_pallas(coarse8, feat, params["gf_w"], params["gf_b"],
                           params["dec2"])                            # (NB2, B*Nc, 8)
    fine8 = (out2.reshape(NB_PRIM2, Bb, n_coarse, OUT_PAD)
             .transpose(1, 0, 2, 3).reshape(Bb, NB_PRIM2 * n_coarse, OUT_PAD))

    coarse = coarse8.reshape(Bb, n_coarse, OUT_PAD)[..., :3]
    fine = fine8[..., :3]
    return coarse, fine


# ---------------------------------- main --------------------------------------
if __name__ == "__main__":
    key = jax.random.PRNGKey(0)
    k_params, k_pts, k_grid = jax.random.split(key, 3)

    params = init_params(k_params)
    points = jax.random.normal(k_pts, (B, NUM_POINTS, 3), jnp.float32)

    fwd = jax.jit(ae_pointnet_dcg_forward)
    coarse, fine = fwd(points, params, k_grid)
    jax.block_until_ready((coarse, fine))

    n_coarse = NB_PRIM1 * (NUM_POINTS // (NB_PRIM1 * NB_PRIM2))
    assert coarse.shape == (B, n_coarse, 3), coarse.shape
    assert fine.shape == (B, n_coarse * NB_PRIM2, 3), fine.shape
    assert bool(jnp.all(jnp.isfinite(coarse))) and bool(jnp.all(jnp.isfinite(fine)))
    print("KERNEL_OK")
</pallas_src>

<mosaic_0001>
module attributes {stable_mosaic.version = 11 : i64} {
  func.func @_encoder_kernel(%arg0: i32, %arg1: memref<1x64x3xf32, #tpu.memory_space<vmem>>, %arg2: memref<3x64xbf16, #tpu.memory_space<vmem>>, %arg3: memref<1x64xf32, #tpu.memory_space<vmem>>, %arg4: memref<64x128xbf16, #tpu.memory_space<vmem>>, %arg5: memref<1x128xf32, #tpu.memory_space<vmem>>, %arg6: memref<128x1024xbf16, #tpu.memory_space<vmem>>, %arg7: memref<1x1024xf32, #tpu.memory_space<vmem>>, %arg8: memref<1024x128xbf16, #tpu.memory_space<vmem>>, %arg9: memref<1x128xf32, #tpu.memory_space<vmem>>, %arg10: memref<1x1x128xf32, #tpu.memory_space<vmem>>) attributes {dimension_semantics = [#tpu.dimension_semantics<parallel>], iteration_bounds = array<i64: 2>, scalar_prefetch = 0 : i64, scratch_operands = 0 : i64, tpu.core_type = #tpu.core_type<tc>, window_params = [{transform_indices = @transform_0, window_bounds = array<i64: 1, 64, 3>}, {pipeline_mode = #tpu.pipeline_mode<synchronous>, transform_indices = @transform_1, window_bounds = array<i64: 3, 64>}, {pipeline_mode = #tpu.pipeline_mode<synchronous>, transform_indices = @transform_2, window_bounds = array<i64: 1, 64>}, {pipeline_mode = #tpu.pipeline_mode<synchronous>, transform_indices = @transform_3, window_bounds = array<i64: 64, 128>}, {pipeline_mode = #tpu.pipeline_mode<synchronous>, transform_indices = @transform_4, window_bounds = array<i64: 1, 128>}, {pipeline_mode = #tpu.pipeline_mode<synchronous>, transform_indices = @transform_5, window_bounds = array<i64: 128, 1024>}, {pipeline_mode = #tpu.pipeline_mode<synchronous>, transform_indices = @transform_6, window_bounds = array<i64: 1, 1024>}, {pipeline_mode = #tpu.pipeline_mode<synchronous>, transform_indices = @transform_7, window_bounds = array<i64: 1024, 128>}, {pipeline_mode = #tpu.pipeline_mode<synchronous>, transform_indices = @transform_8, window_bounds = array<i64: 1, 128>}, {transform_indices = @transform_9, window_bounds = array<i64: 1, 1, 128>}]} {
    %c0 = arith.constant 0 : index
    %c0_0 = arith.constant 0 : index
    %c0_1 = arith.constant 0 : index
    %0 = vector.load %arg1[%c0, %c0_0, %c0_1] : memref<1x64x3xf32, #tpu.memory_space<vmem>>, vector<1x64x3xf32>
    %1 = vector.shape_cast %0 : vector<1x64x3xf32> to vector<64x3xf32>
    %2 = arith.truncf %1 : vector<64x3xf32> to vector<64x3xbf16>
    %c0_2 = arith.constant 0 : index
    %c0_3 = arith.constant 0 : index
    %3 = vector.load %arg2[%c0_2, %c0_3] : memref<3x64xbf16, #tpu.memory_space<vmem>>, vector<3x64xbf16>
    %cst = arith.constant dense<0.000000e+00> : vector<64x64xf32>
    %4 = tpu.matmul %2, %3, %cst {dimension_numbers = #tpu.dot_dimension_numbers<[1], [0], [0], [1], [0, 0, 1, 1], [], []>} : vector<64x3xbf16>, vector<3x64xbf16>, vector<64x64xf32> -> vector<64x64xf32>
    %c0_4 = arith.constant 0 : index
    %c0_5 = arith.constant 0 : index
    %5 = vector.load %arg3[%c0_4, %c0_5] : memref<1x64xf32, #tpu.memory_space<vmem>>, vector<1x64xf32>
    %6 = vector.broadcast %5 : vector<1x64xf32> to vector<64x64xf32>
    %7 = arith.addf %4, %6 : vector<64x64xf32>
    %cst_6 = arith.constant 0.000000e+00 : f32
    %8 = vector.broadcast %cst_6 : f32 to vector<64x64xf32>
    %9 = arith.maximumf %7, %8 : vector<64x64xf32>
    %10 = arith.truncf %9 : vector<64x64xf32> to vector<64x64xbf16>
    %c0_7 = arith.constant 0 : index
    %c0_8 = arith.constant 0 : index
    %11 = vector.load %arg4[%c0_7, %c0_8] : memref<64x128xbf16, #tpu.memory_space<vmem>>, vector<64x128xbf16>
    %cst_9 = arith.constant dense<0.000000e+00> : vector<64x128xf32>
    %12 = tpu.matmul %10, %11, %cst_9 {dimension_numbers = #tpu.dot_dimension_numbers<[1], [0], [0], [1], [0, 0, 1, 1], [], []>} : vector<64x64xbf16>, vector<64x128xbf16>, vector<64x128xf32> -> vector<64x128xf32>
    %c0_10 = arith.constant 0 : index
    %c0_11 = arith.constant 0 : index
    %13 = vector.load %arg5[%c0_10, %c0_11] : memref<1x128xf32, #tpu.memory_space<vmem>>, vector<1x128xf32>
    %14 = vector.broadcast %13 : vector<1x128xf32> to vector<64x128xf32>
    %15 = arith.addf %12, %14 : vector<64x128xf32>
    %cst_12 = arith.constant 0.000000e+00 : f32
    %16 = vector.broadcast %cst_12 : f32 to vector<64x128xf32>
    %17 = arith.maximumf %15, %16 : vector<64x128xf32>
    %18 = arith.truncf %17 : vector<64x128xf32> to vector<64x128xbf16>
    %c0_13 = arith.constant 0 : index
    %c0_14 = arith.constant 0 : index
    %19 = vector.load %arg6[%c0_13, %c0_14] : memref<128x1024xbf16, #tpu.memory_space<vmem>>, vector<128x1024xbf16>
    %cst_15 = arith.constant dense<0.000000e+00> : vector<64x1024xf32>
    %20 = tpu.matmul %18, %19, %cst_15 {dimension_numbers = #tpu.dot_dimension_numbers<[1], [0], [0], [1], [0, 0, 1, 1], [], []>} : vector<64x128xbf16>, vector<128x1024xbf16>, vector<64x1024xf32> -> vector<64x1024xf32>
    %c0_16 = arith.constant 0 : index
    %c0_17 = arith.constant 0 : index
    %21 = vector.load %arg7[%c0_16, %c0_17] : memref<1x1024xf32, #tpu.memory_space<vmem>>, vector<1x1024xf32>
    %22 = vector.broadcast %21 : vector<1x1024xf32> to vector<64x1024xf32>
    %23 = arith.addf %20, %22 : vector<64x1024xf32>
    %cst_18 = arith.constant dense<0xFF800000> : vector<1024xf32>
    %24 = vector.multi_reduction <maximumf>, %23, %cst_18 [0] : vector<64x1024xf32> to vector<1024xf32>
    %25 = vector.shape_cast %24 : vector<1024xf32> to vector<1x1024xf32>
    %26 = arith.truncf %25 : vector<1x1024xf32> to vector<1x1024xbf16>
    %c0_19 = arith.constant 0 : index
    %c0_20 = arith.constant 0 : index
    %27 = vector.load %arg8[%c0_19, %c0_20] : memref<1024x128xbf16, #tpu.memory_space<vmem>>, vector<1024x128xbf16>
    %cst_21 = arith.constant dense<0.000000e+00> : vector<1x128xf32>
    %28 = tpu.matmul %26, %27, %cst_21 {dimension_numbers = #tpu.dot_dimension_numbers<[1], [0], [0], [1], [0, 0, 1, 1], [], []>} : vector<1x1024xbf16>, vector<1024x128xbf16>, vector<1x128xf32> -> vector<1x128xf32>
    %c0_22 = arith.constant 0 : index
    %c0_23 = arith.constant 0 : index
    %29 = vector.load %arg9[%c0_22, %c0_23] : memref<1x128xf32, #tpu.memory_space<vmem>>, vector<1x128xf32>
    %30 = arith.addf %28, %29 : vector<1x128xf32>
    %cst_24 = arith.constant 0.000000e+00 : f32
    %31 = vector.broadcast %cst_24 : f32 to vector<1x128xf32>
    %32 = arith.maximumf %30, %31 : vector<1x128xf32>
    %c0_25 = arith.constant 0 : index
    %c0_26 = arith.constant 0 : index
    %c0_27 = arith.constant 0 : index
    %33 = vector.load %arg10[%c0_25, %c0_26, %c0_27] : memref<1x1x128xf32, #tpu.memory_space<vmem>>, vector<1x1x128xf32>
    %34 = vector.shape_cast %33 : vector<1x1x128xf32> to vector<1x128xf32>
    %35 = vector.shape_cast %32 : vector<1x128xf32> to vector<1x1x128xf32>
    tpu.vector_store %arg10[%c0_25, %c0_26, %c0_27], %35 {strides = array<i32>} : memref<1x1x128xf32, #tpu.memory_space<vmem>>, vector<1x1x128xf32>,
    return
  }
  func.func @transform_0(%arg0: i32) -> (i32, i32, i32) {
    %c0_i32 = arith.constant 0 : i32
    %c0_i32_0 = arith.constant 0 : i32
    %c0_i32_1 = arith.constant 0 : i32
    return %arg0, %c0_i32, %c0_i32_0 : i32, i32, i32
  }
  func.func @transform_1(%arg0: i32) -> (i32, i32) {
    %c0_i32 = arith.constant 0 : i32
    %c0_i32_0 = arith.constant 0 : i32
    %c0_i32_1 = arith.constant 0 : i32
    return %c0_i32, %c0_i32_0 : i32, i32
  }
  func.func @transform_2(%arg0: i32) -> (i32, i32) {
    %c0_i32 = arith.constant 0 : i32
    %c0_i32_0 = arith.constant 0 : i32
    %c0_i32_1 = arith.constant 0 : i32
    return %c0_i32, %c0_i32_0 : i32, i32
  }
  func.func @transform_3(%arg0: i32) -> (i32, i32) {
    %c0_i32 = arith.constant 0 : i32
    %c0_i32_0 = arith.constant 0 : i32
    %c0_i32_1 = arith.constant 0 : i32
    return %c0_i32, %c0_i32_0 : i32, i32
  }
  func.func @transform_4(%arg0: i32) -> (i32, i32) {
    %c0_i32 = arith.constant 0 : i32
    %c0_i32_0 = arith.constant 0 : i32
    %c0_i32_1 = arith.constant 0 : i32
    return %c0_i32, %c0_i32_0 : i32, i32
  }
  func.func @transform_5(%arg0: i32) -> (i32, i32) {
    %c0_i32 = arith.constant 0 : i32
    %c0_i32_0 = arith.constant 0 : i32
    %c0_i32_1 = arith.constant 0 : i32
    return %c0_i32, %c0_i32_0 : i32, i32
  }
  func.func @transform_6(%arg0: i32) -> (i32, i32) {
    %c0_i32 = arith.constant 0 : i32
    %c0_i32_0 = arith.constant 0 : i32
    %c0_i32_1 = arith.constant 0 : i32
    return %c0_i32, %c0_i32_0 : i32, i32
  }
  func.func @transform_7(%arg0: i32) -> (i32, i32) {
    %c0_i32 = arith.constant 0 : i32
    %c0_i32_0 = arith.constant 0 : i32
    %c0_i32_1 = arith.constant 0 : i32
    return %c0_i32, %c0_i32_0 : i32, i32
  }
  func.func @transform_8(%arg0: i32) -> (i32, i32) {
    %c0_i32 = arith.constant 0 : i32
    %c0_i32_0 = arith.constant 0 : i32
    %c0_i32_1 = arith.constant 0 : i32
    return %c0_i32, %c0_i32_0 : i32, i32
  }
  func.func @transform_9(%arg0: i32) -> (i32, i32, i32) {
    %c0_i32 = arith.constant 0 : i32
    %c0_i32_0 = arith.constant 0 : i32
    %c0_i32_1 = arith.constant 0 : i32
    return %arg0, %c0_i32, %c0_i32_0 : i32, i32, i32
  }
}

module attributes {stable_mosaic.version = 11 : i64} {
  func.func @_dec1_kernel(%arg0: i32, %arg1: memref<1x32x2xf32, #tpu.memory_space<vmem>>, %arg2: memref<2x128xf32, #tpu.memory_space<vmem>>, %arg3: memref<1x2x130xbf16, #tpu.memory_space<vmem>>, %arg4: memref<1x128x130xbf16, #tpu.memory_space<vmem>>, %arg5: memref<1x1x130xf32, #tpu.memory_space<vmem>>, %arg6: memref<1x130x65xbf16, #tpu.memory_space<vmem>>, %arg7: memref<1x1x65xf32, #tpu.memory_space<vmem>>, %arg8: memref<1x65x32xbf16, #tpu.memory_space<vmem>>, %arg9: memref<1x1x32xf32, #tpu.memory_space<vmem>>, %arg10: memref<1x32x8xbf16, #tpu.memory_space<vmem>>, %arg11: memref<1x1x8xf32, #tpu.memory_space<vmem>>, %arg12: memref<1x32x8xf32, #tpu.memory_space<vmem>>) attributes {dimension_semantics = [#tpu.dimension_semantics<parallel>], iteration_bounds = array<i64: 2>, scalar_prefetch = 0 : i64, scratch_operands = 0 : i64, tpu.core_type = #tpu.core_type<tc>, window_params = [{transform_indices = @transform_0, window_bounds = array<i64: 1, 32, 2>}, {pipeline_mode = #tpu.pipeline_mode<synchronous>, transform_indices = @transform_1, window_bounds = array<i64: 2, 128>}, {transform_indices = @transform_2, window_bounds = array<i64: 1, 2, 130>}, {transform_indices = @transform_3, window_bounds = array<i64: 1, 128, 130>}, {transform_indices = @transform_4, window_bounds = array<i64: 1, 1, 130>}, {transform_indices = @transform_5, window_bounds = array<i64: 1, 130, 65>}, {transform_indices = @transform_6, window_bounds = array<i64: 1, 1, 65>}, {transform_indices = @transform_7, window_bounds = array<i64: 1, 65, 32>}, {transform_indices = @transform_8, window_bounds = array<i64: 1, 1, 32>}, {transform_indices = @transform_9, window_bounds = array<i64: 1, 32, 8>}, {transform_indices = @transform_10, window_bounds = array<i64: 1, 1, 8>}, {transform_indices = @transform_11, window_bounds = array<i64: 1, 32, 8>}]} {
    %c0 = arith.constant 0 : index
    %c0_0 = arith.constant 0 : index
    %c0_1 = arith.constant 0 : index
    %0 = vector.load %arg1[%c0, %c0_0, %c0_1] : memref<1x32x2xf32, #tpu.memory_space<vmem>>, vector<1x32x2xf32>
    %1 = vector.shape_cast %0 : vector<1x32x2xf32> to vector<32x2xf32>
    %c0_2 = arith.constant 0 : index
    %c0_3 = arith.constant 0 : index
    %2 = vector.load %arg2[%c0_2, %c0_3] : memref<2x128xf32, #tpu.memory_space<vmem>>, vector<2x128xf32>
    %3 = arith.truncf %2 : vector<2x128xf32> to vector<2x128xbf16>
    %c0_4 = arith.constant 0 : index
    %c0_5 = arith.constant 0 : index
    %c0_6 = arith.constant 0 : index
    %4 = vector.load %arg4[%c0_4, %c0_5, %c0_6] : memref<1x128x130xbf16, #tpu.memory_space<vmem>>, vector<1x128x130xbf16>
    %5 = vector.shape_cast %4 : vector<1x128x130xbf16> to vector<128x130xbf16>
    %cst = arith.constant dense<0.000000e+00> : vector<2x130xf32>
    %6 = tpu.matmul %3, %5, %cst {dimension_numbers = #tpu.dot_dimension_numbers<[1], [0], [0], [1], [0, 0, 1, 1], [], []>} : vector<2x128xbf16>, vector<128x130xbf16>, vector<2x130xf32> -> vector<2x130xf32>
    %7 = tpu.iota {dimensions = array<i32: 0>} : vector<32x2xi32>
    %8 = tpu.iota {dimensions = array<i32: 1>} : vector<32x2xi32>
    %c16_i32 = arith.constant 16 : i32
    %9 = vector.broadcast %c16_i32 : i32 to vector<32x2xi32>
    %10 = arith.muli %8, %9 : vector<32x2xi32>
    %11 = arith.cmpi sge, %7, %10 : vector<32x2xi32>
    %c16_i32_7 = arith.constant 16 : i32
    %12 = vector.broadcast %c16_i32_7 : i32 to vector<32x2xi32>
    %13 = arith.addi %10, %12 : vector<32x2xi32>
    %14 = arith.cmpi slt, %7, %13 : vector<32x2xi32>
    %15 = arith.andi %11, %14 : vector<32x2xi1>
    %16 = arith.extui %15 : vector<32x2xi1> to vector<32x2xi32>
    %17 = arith.sitofp %16 : vector<32x2xi32> to vector<32x2xf32>
    %cst_8 = arith.constant dense<0.000000e+00> : vector<32x130xf32>
    %18 = tpu.matmul %17, %6, %cst_8 {dimension_numbers = #tpu.dot_dimension_numbers<[1], [0], [0], [1], [0, 0, 1, 1], [], []>} : vector<32x2xf32>, vector<2x130xf32>, vector<32x130xf32> -> vector<32x130xf32>
    %19 = arith.truncf %1 : vector<32x2xf32> to vector<32x2xbf16>
    %c0_9 = arith.constant 0 : index
    %c0_10 = arith.constant 0 : index
    %c0_11 = arith.constant 0 : index
    %20 = vector.load %arg3[%c0_9, %c0_10, %c0_11] : memref<1x2x130xbf16, #tpu.memory_space<vmem>>, vector<1x2x130xbf16>
    %21 = vector.shape_cast %20 : vector<1x2x130xbf16> to vector<2x130xbf16>
    %cst_12 = arith.constant dense<0.000000e+00> : vector<32x130xf32>
    %22 = tpu.matmul %19, %21, %cst_12 {dimension_numbers = #tpu.dot_dimension_numbers<[1], [0], [0], [1], [0, 0, 1, 1], [], []>} : vector<32x2xbf16>, vector<2x130xbf16>, vector<32x130xf32> -> vector<32x130xf32>
    %23 = arith.addf %22, %18 : vector<32x130xf32>
    %c0_13 = arith.constant 0 : index
    %c0_14 = arith.constant 0 : index
    %c0_15 = arith.constant 0 : index
    %24 = vector.load %arg5[%c0_13, %c0_14, %c0_15] : memref<1x1x130xf32, #tpu.memory_space<vmem>>, vector<1x1x130xf32>
    %25 = vector.shape_cast %24 : vector<1x1x130xf32> to vector<1x130xf32>
    %26 = vector.broadcast %25 : vector<1x130xf32> to vector<32x130xf32>
    %27 = arith.addf %23, %26 : vector<32x130xf32>
    %cst_16 = arith.constant 0.000000e+00 : f32
    %28 = vector.broadcast %cst_16 : f32 to vector<32x130xf32>
    %29 = arith.maximumf %27, %28 : vector<32x130xf32>
    %30 = arith.truncf %29 : vector<32x130xf32> to vector<32x130xbf16>
    %c0_17 = arith.constant 0 : index
    %c0_18 = arith.constant 0 : index
    %c0_19 = arith.constant 0 : index
    %31 = vector.load %arg6[%c0_17, %c0_18, %c0_19] : memref<1x130x65xbf16, #tpu.memory_space<vmem>>, vector<1x130x65xbf16>
    %32 = vector.shape_cast %31 : vector<1x130x65xbf16> to vector<130x65xbf16>
    %cst_20 = arith.constant dense<0.000000e+00> : vector<32x65xf32>
    %33 = tpu.matmul %30, %32, %cst_20 {dimension_numbers = #tpu.dot_dimension_numbers<[1], [0], [0], [1], [0, 0, 1, 1], [], []>} : vector<32x130xbf16>, vector<130x65xbf16>, vector<32x65xf32> -> vector<32x65xf32>
    %c0_21 = arith.constant 0 : index
    %c0_22 = arith.constant 0 : index
    %c0_23 = arith.constant 0 : index
    %34 = vector.load %arg7[%c0_21, %c0_22, %c0_23] : memref<1x1x65xf32, #tpu.memory_space<vmem>>, vector<1x1x65xf32>
    %35 = vector.shape_cast %34 : vector<1x1x65xf32> to vector<1x65xf32>
    %36 = vector.broadcast %35 : vector<1x65xf32> to vector<32x65xf32>
    %37 = arith.addf %33, %36 : vector<32x65xf32>
    %cst_24 = arith.constant 0.000000e+00 : f32
    %38 = vector.broadcast %cst_24 : f32 to vector<32x65xf32>
    %39 = arith.maximumf %37, %38 : vector<32x65xf32>
    %40 = arith.truncf %39 : vector<32x65xf32> to vector<32x65xbf16>
    %c0_25 = arith.constant 0 : index
    %c0_26 = arith.constant 0 : index
    %c0_27 = arith.constant 0 : index
    %41 = vector.load %arg8[%c0_25, %c0_26, %c0_27] : memref<1x65x32xbf16, #tpu.memory_space<vmem>>, vector<1x65x32xbf16>
    %42 = vector.shape_cast %41 : vector<1x65x32xbf16> to vector<65x32xbf16>
    %cst_28 = arith.constant dense<0.000000e+00> : vector<32x32xf32>
    %43 = tpu.matmul %40, %42, %cst_28 {dimension_numbers = #tpu.dot_dimension_numbers<[1], [0], [0], [1], [0, 0, 1, 1], [], []>} : vector<32x65xbf16>, vector<65x32xbf16>, vector<32x32xf32> -> vector<32x32xf32>
    %c0_29 = arith.constant 0 : index
    %c0_30 = arith.constant 0 : index
    %c0_31 = arith.constant 0 : index
    %44 = vector.load %arg9[%c0_29, %c0_30, %c0_31] : memref<1x1x32xf32, #tpu.memory_space<vmem>>, vector<1x1x32xf32>
    %45 = vector.shape_cast %44 : vector<1x1x32xf32> to vector<1x32xf32>
    %46 = vector.broadcast %45 : vector<1x32xf32> to vector<32x32xf32>
    %47 = arith.addf %43, %46 : vector<32x32xf32>
    %cst_32 = arith.constant 0.000000e+00 : f32
    %48 = vector.broadcast %cst_32 : f32 to vector<32x32xf32>
    %49 = arith.maximumf %47, %48 : vector<32x32xf32>
    %50 = arith.truncf %49 : vector<32x32xf32> to vector<32x32xbf16>
    %c0_33 = arith.constant 0 : index
    %c0_34 = arith.constant 0 : index
    %c0_35 = arith.constant 0 : index
    %51 = vector.load %arg10[%c0_33, %c0_34, %c0_35] : memref<1x32x8xbf16, #tpu.memory_space<vmem>>, vector<1x32x8xbf16>
    %52 = vector.shape_cast %51 : vector<1x32x8xbf16> to vector<32x8xbf16>
    %cst_36 = arith.constant dense<0.000000e+00> : vector<32x8xf32>
    %53 = tpu.matmul %50, %52, %cst_36 {dimension_numbers = #tpu.dot_dimension_numbers<[1], [0], [0], [1], [0, 0, 1, 1], [], []>} : vector<32x32xbf16>, vector<32x8xbf16>, vector<32x8xf32> -> vector<32x8xf32>
    %c0_37 = arith.constant 0 : index
    %c0_38 = arith.constant 0 : index
    %c0_39 = arith.constant 0 : index
    %54 = vector.load %arg11[%c0_37, %c0_38, %c0_39] : memref<1x1x8xf32, #tpu.memory_space<vmem>>, vector<1x1x8xf32>
    %55 = vector.shape_cast %54 : vector<1x1x8xf32> to vector<1x8xf32>
    %56 = vector.broadcast %55 : vector<1x8xf32> to vector<32x8xf32>
    %57 = arith.addf %53, %56 : vector<32x8xf32>
    %58 = math.tanh %57 : vector<32x8xf32>
    %c0_40 = arith.constant 0 : index
    %c0_41 = arith.constant 0 : index
    %c0_42 = arith.constant 0 : index
    %59 = vector.load %arg12[%c0_40, %c0_41, %c0_42] : memref<1x32x8xf32, #tpu.memory_space<vmem>>, vector<1x32x8xf32>
    %60 = vector.shape_cast %59 : vector<1x32x8xf32> to vector<32x8xf32>
    %61 = vector.shape_cast %58 : vector<32x8xf32> to vector<1x32x8xf32>
    tpu.vector_store %arg12[%c0_40, %c0_41, %c0_42], %61 {strides = array<i32>} : memref<1x32x8xf32, #tpu.memory_space<vmem>>, vector<1x32x8xf32>,
    return
  }
  func.func @transform_0(%arg0: i32) -> (i32, i32, i32) {
    %c0_i32 = arith.constant 0 : i32
    %c0_i32_0 = arith.constant 0 : i32
    %c0_i32_1 = arith.constant 0 : i32
    return %arg0, %c0_i32, %c0_i32_0 : i32, i32, i32
  }
  func.func @transform_1(%arg0: i32) -> (i32, i32) {
    %c0_i32 = arith.constant 0 : i32
    %c0_i32_0 = arith.constant 0 : i32
    %c0_i32_1 = arith.constant 0 : i32
    return %c0_i32, %c0_i32_0 : i32, i32
  }
  func.func @transform_2(%arg0: i32) -> (i32, i32, i32) {
    %c0_i32 = arith.constant 0 : i32
    %c0_i32_0 = arith.constant 0 : i32
    %c0_i32_1 = arith.constant 0 : i32
    return %arg0, %c0_i32, %c0_i32_0 : i32, i32, i32
  }
  func.func @transform_3(%arg0: i32) -> (i32, i32, i32) {
    %c0_i32 = arith.constant 0 : i32
    %c0_i32_0 = arith.constant 0 : i32
    %c0_i32_1 = arith.constant 0 : i32
    return %arg0, %c0_i32, %c0_i32_0 : i32, i32, i32
  }
  func.func @transform_4(%arg0: i32) -> (i32, i32, i32) {
    %c0_i32 = arith.constant 0 : i32
    %c0_i32_0 = arith.constant 0 : i32
    %c0_i32_1 = arith.constant 0 : i32
    return %arg0, %c0_i32, %c0_i32_0 : i32, i32, i32
  }
  func.func @transform_5(%arg0: i32) -> (i32, i32, i32) {
    %c0_i32 = arith.constant 0 : i32
    %c0_i32_0 = arith.constant 0 : i32
    %c0_i32_1 = arith.constant 0 : i32
    return %arg0, %c0_i32, %c0_i32_0 : i32, i32, i32
  }
  func.func @transform_6(%arg0: i32) -> (i32, i32, i32) {
    %c0_i32 = arith.constant 0 : i32
    %c0_i32_0 = arith.constant 0 : i32
    %c0_i32_1 = arith.constant 0 : i32
    return %arg0, %c0_i32, %c0_i32_0 : i32, i32, i32
  }
  func.func @transform_7(%arg0: i32) -> (i32, i32, i32) {
    %c0_i32 = arith.constant 0 : i32
    %c0_i32_0 = arith.constant 0 : i32
    %c0_i32_1 = arith.constant 0 : i32
    return %arg0, %c0_i32, %c0_i32_0 : i32, i32, i32
  }
  func.func @transform_8(%arg0: i32) -> (i32, i32, i32) {
    %c0_i32 = arith.constant 0 : i32
    %c0_i32_0 = arith.constant 0 : i32
    %c0_i32_1 = arith.constant 0 : i32
    return %arg0, %c0_i32, %c0_i32_0 : i32, i32, i32
  }
  func.func @transform_9(%arg0: i32) -> (i32, i32, i32) {
    %c0_i32 = arith.constant 0 : i32
    %c0_i32_0 = arith.constant 0 : i32
    %c0_i32_1 = arith.constant 0 : i32
    return %arg0, %c0_i32, %c0_i32_0 : i32, i32, i32
  }
  func.func @transform_10(%arg0: i32) -> (i32, i32, i32) {
    %c0_i32 = arith.constant 0 : i32
    %c0_i32_0 = arith.constant 0 : i32
    %c0_i32_1 = arith.constant 0 : i32
    return %arg0, %c0_i32, %c0_i32_0 : i32, i32, i32
  }
  func.func @transform_11(%arg0: i32) -> (i32, i32, i32) {
    %c0_i32 = arith.constant 0 : i32
    %c0_i32_0 = arith.constant 0 : i32
    %c0_i32_1 = arith.constant 0 : i32
    return %arg0, %c0_i32, %c0_i32_0 : i32, i32, i32
  }
}

module attributes {stable_mosaic.version = 11 : i64} {
  func.func @_dec2_kernel(%arg0: i32, %arg1: memref<64x8xf32, #tpu.memory_space<vmem>>, %arg2: memref<2x128xf32, #tpu.memory_space<vmem>>, %arg3: memref<8x84xbf16, #tpu.memory_space<vmem>>, %arg4: memref<1x84xf32, #tpu.memory_space<vmem>>, %arg5: memref<1x8x215xbf16, #tpu.memory_space<vmem>>, %arg6: memref<1x84x215xbf16, #tpu.memory_space<vmem>>, %arg7: memref<1x128x215xbf16, #tpu.memory_space<vmem>>, %arg8: memref<1x1x215xf32, #tpu.memory_space<vmem>>, %arg9: memref<1x215x107xbf16, #tpu.memory_space<vmem>>, %arg10: memref<1x1x107xf32, #tpu.memory_space<vmem>>, %arg11: memref<1x107x53xbf16, #tpu.memory_space<vmem>>, %arg12: memref<1x1x53xf32, #tpu.memory_space<vmem>>, %arg13: memref<1x53x8xbf16, #tpu.memory_space<vmem>>, %arg14: memref<1x1x8xf32, #tpu.memory_space<vmem>>, %arg15: memref<1x64x8xf32, #tpu.memory_space<vmem>>) attributes {dimension_semantics = [#tpu.dimension_semantics<parallel>], iteration_bounds = array<i64: 2>, scalar_prefetch = 0 : i64, scratch_operands = 0 : i64, tpu.core_type = #tpu.core_type<tc>, window_params = [{pipeline_mode = #tpu.pipeline_mode<synchronous>, transform_indices = @transform_0, window_bounds = array<i64: 64, 8>}, {pipeline_mode = #tpu.pipeline_mode<synchronous>, transform_indices = @transform_1, window_bounds = array<i64: 2, 128>}, {pipeline_mode = #tpu.pipeline_mode<synchronous>, transform_indices = @transform_2, window_bounds = array<i64: 8, 84>}, {pipeline_mode = #tpu.pipeline_mode<synchronous>, transform_indices = @transform_3, window_bounds = array<i64: 1, 84>}, {transform_indices = @transform_4, window_bounds = array<i64: 1, 8, 215>}, {transform_indices = @transform_5, window_bounds = array<i64: 1, 84, 215>}, {transform_indices = @transform_6, window_bounds = array<i64: 1, 128, 215>}, {transform_indices = @transform_7, window_bounds = array<i64: 1, 1, 215>}, {transform_indices = @transform_8, window_bounds = array<i64: 1, 215, 107>}, {transform_indices = @transform_9, window_bounds = array<i64: 1, 1, 107>}, {transform_indices = @transform_10, window_bounds = array<i64: 1, 107, 53>}, {transform_indices = @transform_11, window_bounds = array<i64: 1, 1, 53>}, {transform_indices = @transform_12, window_bounds = array<i64: 1, 53, 8>}, {transform_indices = @transform_13, window_bounds = array<i64: 1, 1, 8>}, {transform_indices = @transform_14, window_bounds = array<i64: 1, 64, 8>}]} {
    %c0 = arith.constant 0 : index
    %c0_0 = arith.constant 0 : index
    %0 = vector.load %arg1[%c0, %c0_0] : memref<64x8xf32, #tpu.memory_space<vmem>>, vector<64x8xf32>
    %1 = arith.truncf %0 : vector<64x8xf32> to vector<64x8xbf16>
    %c0_1 = arith.constant 0 : index
    %c0_2 = arith.constant 0 : index
    %2 = vector.load %arg3[%c0_1, %c0_2] : memref<8x84xbf16, #tpu.memory_space<vmem>>, vector<8x84xbf16>
    %cst = arith.constant dense<0.000000e+00> : vector<64x84xf32>
    %3 = tpu.matmul %1, %2, %cst {dimension_numbers = #tpu.dot_dimension_numbers<[1], [0], [0], [1], [0, 0, 1, 1], [], []>} : vector<64x8xbf16>, vector<8x84xbf16>, vector<64x84xf32> -> vector<64x84xf32>
    %c0_3 = arith.constant 0 : index
    %c0_4 = arith.constant 0 : index
    %4 = vector.load %arg4[%c0_3, %c0_4] : memref<1x84xf32, #tpu.memory_space<vmem>>, vector<1x84xf32>
    %5 = vector.broadcast %4 : vector<1x84xf32> to vector<64x84xf32>
    %6 = arith.addf %3, %5 : vector<64x84xf32>
    %cst_5 = arith.constant 0.000000e+00 : f32
    %7 = vector.broadcast %cst_5 : f32 to vector<64x84xf32>
    %8 = arith.maximumf %6, %7 : vector<64x84xf32>
    %c0_6 = arith.constant 0 : index
    %c0_7 = arith.constant 0 : index
    %9 = vector.load %arg2[%c0_6, %c0_7] : memref<2x128xf32, #tpu.memory_space<vmem>>, vector<2x128xf32>
    %10 = arith.truncf %9 : vector<2x128xf32> to vector<2x128xbf16>
    %c0_8 = arith.constant 0 : index
    %c0_9 = arith.constant 0 : index
    %c0_10 = arith.constant 0 : index
    %11 = vector.load %arg7[%c0_8, %c0_9, %c0_10] : memref<1x128x215xbf16, #tpu.memory_space<vmem>>, vector<1x128x215xbf16>
    %12 = vector.shape_cast %11 : vector<1x128x215xbf16> to vector<128x215xbf16>
    %cst_11 = arith.constant dense<0.000000e+00> : vector<2x215xf32>
    %13 = tpu.matmul %10, %12, %cst_11 {dimension_numbers = #tpu.dot_dimension_numbers<[1], [0], [0], [1], [0, 0, 1, 1], [], []>} : vector<2x128xbf16>, vector<128x215xbf16>, vector<2x215xf32> -> vector<2x215xf32>
    %14 = tpu.iota {dimensions = array<i32: 0>} : vector<64x2xi32>
    %15 = tpu.iota {dimensions = array<i32: 1>} : vector<64x2xi32>
    %c32_i32 = arith.constant 32 : i32
    %16 = vector.broadcast %c32_i32 : i32 to vector<64x2xi32>
    %17 = arith.muli %15, %16 : vector<64x2xi32>
    %18 = arith.cmpi sge, %14, %17 : vector<64x2xi32>
    %c32_i32_12 = arith.constant 32 : i32
    %19 = vector.broadcast %c32_i32_12 : i32 to vector<64x2xi32>
    %20 = arith.addi %17, %19 : vector<64x2xi32>
    %21 = arith.cmpi slt, %14, %20 : vector<64x2xi32>
    %22 = arith.andi %18, %21 : vector<64x2xi1>
    %23 = arith.extui %22 : vector<64x2xi1> to vector<64x2xi32>
    %24 = arith.sitofp %23 : vector<64x2xi32> to vector<64x2xf32>
    %cst_13 = arith.constant dense<0.000000e+00> : vector<64x215xf32>
    %25 = tpu.matmul %24, %13, %cst_13 {dimension_numbers = #tpu.dot_dimension_numbers<[1], [0], [0], [1], [0, 0, 1, 1], [], []>} : vector<64x2xf32>, vector<2x215xf32>, vector<64x215xf32> -> vector<64x215xf32>
    %c0_14 = arith.constant 0 : index
    %c0_15 = arith.constant 0 : index
    %c0_16 = arith.constant 0 : index
    %26 = vector.load %arg5[%c0_14, %c0_15, %c0_16] : memref<1x8x215xbf16, #tpu.memory_space<vmem>>, vector<1x8x215xbf16>
    %27 = vector.shape_cast %26 : vector<1x8x215xbf16> to vector<8x215xbf16>
    %cst_17 = arith.constant dense<0.000000e+00> : vector<64x215xf32>
    %28 = tpu.matmul %1, %27, %cst_17 {dimension_numbers = #tpu.dot_dimension_numbers<[1], [0], [0], [1], [0, 0, 1, 1], [], []>} : vector<64x8xbf16>, vector<8x215xbf16>, vector<64x215xf32> -> vector<64x215xf32>
    %29 = arith.truncf %8 : vector<64x84xf32> to vector<64x84xbf16>
    %c0_18 = arith.constant 0 : index
    %c0_19 = arith.constant 0 : index
    %c0_20 = arith.constant 0 : index
    %30 = vector.load %arg6[%c0_18, %c0_19, %c0_20] : memref<1x84x215xbf16, #tpu.memory_space<vmem>>, vector<1x84x215xbf16>
    %31 = vector.shape_cast %30 : vector<1x84x215xbf16> to vector<84x215xbf16>
    %cst_21 = arith.constant dense<0.000000e+00> : vector<64x215xf32>
    %32 = tpu.matmul %29, %31, %cst_21 {dimension_numbers = #tpu.dot_dimension_numbers<[1], [0], [0], [1], [0, 0, 1, 1], [], []>} : vector<64x84xbf16>, vector<84x215xbf16>, vector<64x215xf32> -> vector<64x215xf32>
    %33 = arith.addf %28, %32 : vector<64x215xf32>
    %34 = arith.addf %33, %25 : vector<64x215xf32>
    %c0_22 = arith.constant 0 : index
    %c0_23 = arith.constant 0 : index
    %c0_24 = arith.constant 0 : index
    %35 = vector.load %arg8[%c0_22, %c0_23, %c0_24] : memref<1x1x215xf32, #tpu.memory_space<vmem>>, vector<1x1x215xf32>
    %36 = vector.shape_cast %35 : vector<1x1x215xf32> to vector<1x215xf32>
    %37 = vector.broadcast %36 : vector<1x215xf32> to vector<64x215xf32>
    %38 = arith.addf %34, %37 : vector<64x215xf32>
    %cst_25 = arith.constant 0.000000e+00 : f32
    %39 = vector.broadcast %cst_25 : f32 to vector<64x215xf32>
    %40 = arith.maximumf %38, %39 : vector<64x215xf32>
    %41 = arith.truncf %40 : vector<64x215xf32> to vector<64x215xbf16>
    %c0_26 = arith.constant 0 : index
    %c0_27 = arith.constant 0 : index
    %c0_28 = arith.constant 0 : index
    %42 = vector.load %arg9[%c0_26, %c0_27, %c0_28] : memref<1x215x107xbf16, #tpu.memory_space<vmem>>, vector<1x215x107xbf16>
    %43 = vector.shape_cast %42 : vector<1x215x107xbf16> to vector<215x107xbf16>
    %cst_29 = arith.constant dense<0.000000e+00> : vector<64x107xf32>
    %44 = tpu.matmul %41, %43, %cst_29 {dimension_numbers = #tpu.dot_dimension_numbers<[1], [0], [0], [1], [0, 0, 1, 1], [], []>} : vector<64x215xbf16>, vector<215x107xbf16>, vector<64x107xf32> -> vector<64x107xf32>
    %c0_30 = arith.constant 0 : index
    %c0_31 = arith.constant 0 : index
    %c0_32 = arith.constant 0 : index
    %45 = vector.load %arg10[%c0_30, %c0_31, %c0_32] : memref<1x1x107xf32, #tpu.memory_space<vmem>>, vector<1x1x107xf32>
    %46 = vector.shape_cast %45 : vector<1x1x107xf32> to vector<1x107xf32>
    %47 = vector.broadcast %46 : vector<1x107xf32> to vector<64x107xf32>
    %48 = arith.addf %44, %47 : vector<64x107xf32>
    %cst_33 = arith.constant 0.000000e+00 : f32
    %49 = vector.broadcast %cst_33 : f32 to vector<64x107xf32>
    %50 = arith.maximumf %48, %49 : vector<64x107xf32>
    %51 = arith.truncf %50 : vector<64x107xf32> to vector<64x107xbf16>
    %c0_34 = arith.constant 0 : index
    %c0_35 = arith.constant 0 : index
    %c0_36 = arith.constant 0 : index
    %52 = vector.load %arg11[%c0_34, %c0_35, %c0_36] : memref<1x107x53xbf16, #tpu.memory_space<vmem>>, vector<1x107x53xbf16>
    %53 = vector.shape_cast %52 : vector<1x107x53xbf16> to vector<107x53xbf16>
    %cst_37 = arith.constant dense<0.000000e+00> : vector<64x53xf32>
    %54 = tpu.matmul %51, %53, %cst_37 {dimension_numbers = #tpu.dot_dimension_numbers<[1], [0], [0], [1], [0, 0, 1, 1], [], []>} : vector<64x107xbf16>, vector<107x53xbf16>, vector<64x53xf32> -> vector<64x53xf32>
    %c0_38 = arith.constant 0 : index
    %c0_39 = arith.constant 0 : index
    %c0_40 = arith.constant 0 : index
    %55 = vector.load %arg12[%c0_38, %c0_39, %c0_40] : memref<1x1x53xf32, #tpu.memory_space<vmem>>, vector<1x1x53xf32>
    %56 = vector.shape_cast %55 : vector<1x1x53xf32> to vector<1x53xf32>
    %57 = vector.broadcast %56 : vector<1x53xf32> to vector<64x53xf32>
    %58 = arith.addf %54, %57 : vector<64x53xf32>
    %cst_41 = arith.constant 0.000000e+00 : f32
    %59 = vector.broadcast %cst_41 : f32 to vector<64x53xf32>
    %60 = arith.maximumf %58, %59 : vector<64x53xf32>
    %61 = arith.truncf %60 : vector<64x53xf32> to vector<64x53xbf16>
    %c0_42 = arith.constant 0 : index
    %c0_43 = arith.constant 0 : index
    %c0_44 = arith.constant 0 : index
    %62 = vector.load %arg13[%c0_42, %c0_43, %c0_44] : memref<1x53x8xbf16, #tpu.memory_space<vmem>>, vector<1x53x8xbf16>
    %63 = vector.shape_cast %62 : vector<1x53x8xbf16> to vector<53x8xbf16>
    %cst_45 = arith.constant dense<0.000000e+00> : vector<64x8xf32>
    %64 = tpu.matmul %61, %63, %cst_45 {dimension_numbers = #tpu.dot_dimension_numbers<[1], [0], [0], [1], [0, 0, 1, 1], [], []>} : vector<64x53xbf16>, vector<53x8xbf16>, vector<64x8xf32> -> vector<64x8xf32>
    %c0_46 = arith.constant 0 : index
    %c0_47 = arith.constant 0 : index
    %c0_48 = arith.constant 0 : index
    %65 = vector.load %arg14[%c0_46, %c0_47, %c0_48] : memref<1x1x8xf32, #tpu.memory_space<vmem>>, vector<1x1x8xf32>
    %66 = vector.shape_cast %65 : vector<1x1x8xf32> to vector<1x8xf32>
    %67 = vector.broadcast %66 : vector<1x8xf32> to vector<64x8xf32>
    %68 = arith.addf %64, %67 : vector<64x8xf32>
    %69 = math.tanh %68 : vector<64x8xf32>
    %70 = arith.addf %69, %0 : vector<64x8xf32>
    %c0_49 = arith.constant 0 : index
    %c0_50 = arith.constant 0 : index
    %c0_51 = arith.constant 0 : index
    %71 = vector.load %arg15[%c0_49, %c0_50, %c0_51] : memref<1x64x8xf32, #tpu.memory_space<vmem>>, vector<1x64x8xf32>
    %72 = vector.shape_cast %71 : vector<1x64x8xf32> to vector<64x8xf32>
    %73 = vector.shape_cast %70 : vector<64x8xf32> to vector<1x64x8xf32>
    tpu.vector_store %arg15[%c0_49, %c0_50, %c0_51], %73 {strides = array<i32>} : memref<1x64x8xf32, #tpu.memory_space<vmem>>, vector<1x64x8xf32>,
    return
  }
  func.func @transform_0(%arg0: i32) -> (i32, i32) {
    %c0_i32 = arith.constant 0 : i32
    %c0_i32_0 = arith.constant 0 : i32
    %c0_i32_1 = arith.constant 0 : i32
    return %c0_i32, %c0_i32_0 : i32, i32
  }
  func.func @transform_1(%arg0: i32) -> (i32, i32) {
    %c0_i32 = arith.constant 0 : i32
    %c0_i32_0 = arith.constant 0 : i32
    %c0_i32_1 = arith.constant 0 : i32
    return %c0_i32, %c0_i32_0 : i32, i32
  }
  func.func @transform_2(%arg0: i32) -> (i32, i32) {
    %c0_i32 = arith.constant 0 : i32
    %c0_i32_0 = arith.constant 0 : i32
    %c0_i32_1 = arith.constant 0 : i32
    return %c0_i32, %c0_i32_0 : i32, i32
  }
  func.func @transform_3(%arg0: i32) -> (i32, i32) {
    %c0_i32 = arith.constant 0 : i32
    %c0_i32_0 = arith.constant 0 : i32
    %c0_i32_1 = arith.constant 0 : i32
    return %c0_i32, %c0_i32_0 : i32, i32
  }
  func.func @transform_4(%arg0: i32) -> (i32, i32, i32) {
    %c0_i32 = arith.constant 0 : i32
    %c0_i32_0 = arith.constant 0 : i32
    %c0_i32_1 = arith.constant 0 : i32
    return %arg0, %c0_i32, %c0_i32_0 : i32, i32, i32
  }
  func.func @transform_5(%arg0: i32) -> (i32, i32, i32) {
    %c0_i32 = arith.constant 0 : i32
    %c0_i32_0 = arith.constant 0 : i32
    %c0_i32_1 = arith.constant 0 : i32
    return %arg0, %c0_i32, %c0_i32_0 : i32, i32, i32
  }
  func.func @transform_6(%arg0: i32) -> (i32, i32, i32) {
    %c0_i32 = arith.constant 0 : i32
    %c0_i32_0 = arith.constant 0 : i32
    %c0_i32_1 = arith.constant 0 : i32
    return %arg0, %c0_i32, %c0_i32_0 : i32, i32, i32
  }
  func.func @transform_7(%arg0: i32) -> (i32, i32, i32) {
    %c0_i32 = arith.constant 0 : i32
    %c0_i32_0 = arith.constant 0 : i32
    %c0_i32_1 = arith.constant 0 : i32
    return %arg0, %c0_i32, %c0_i32_0 : i32, i32, i32
  }
  func.func @transform_8(%arg0: i32) -> (i32, i32, i32) {
    %c0_i32 = arith.constant 0 : i32
    %c0_i32_0 = arith.constant 0 : i32
    %c0_i32_1 = arith.constant 0 : i32
    return %arg0, %c0_i32, %c0_i32_0 : i32, i32, i32
  }
  func.func @transform_9(%arg0: i32) -> (i32, i32, i32) {
    %c0_i32 = arith.constant 0 : i32
    %c0_i32_0 = arith.constant 0 : i32
    %c0_i32_1 = arith.constant 0 : i32
    return %arg0, %c0_i32, %c0_i32_0 : i32, i32, i32
  }
  func.func @transform_10(%arg0: i32) -> (i32, i32, i32) {
    %c0_i32 = arith.constant 0 : i32
    %c0_i32_0 = arith.constant 0 : i32
    %c0_i32_1 = arith.constant 0 : i32
    return %arg0, %c0_i32, %c0_i32_0 : i32, i32, i32
  }
  func.func @transform_11(%arg0: i32) -> (i32, i32, i32) {
    %c0_i32 = arith.constant 0 : i32
    %c0_i32_0 = arith.constant 0 : i32
    %c0_i32_1 = arith.constant 0 : i32
    return %arg0, %c0_i32, %c0_i32_0 : i32, i32, i32
  }
  func.func @transform_12(%arg0: i32) -> (i32, i32, i32) {
    %c0_i32 = arith.constant 0 : i32
    %c0_i32_0 = arith.constant 0 : i32
    %c0_i32_1 = arith.constant 0 : i32
    return %arg0, %c0_i32, %c0_i32_0 : i32, i32, i32
  }
  func.func @transform_13(%arg0: i32) -> (i32, i32, i32) {
    %c0_i32 = arith.constant 0 : i32
    %c0_i32_0 = arith.constant 0 : i32
    %c0_i32_1 = arith.constant 0 : i32
    return %arg0, %c0_i32, %c0_i32_0 : i32, i32, i32
  }
  func.func @transform_14(%arg0: i32) -> (i32, i32, i32) {
    %c0_i32 = arith.constant 0 : i32
    %c0_i32_0 = arith.constant 0 : i32
    %c0_i32_1 = arith.constant 0 : i32
    return %arg0, %c0_i32, %c0_i32_0 : i32, i32, i32
  }
}

</mosaic_0001>

<llo_original>
// kernel: ae_pointnet_dcg_forward.4
$region0: #{ae_pointnet_dcg_forward.4}
  #allocation0 [shape = 'u32[]', space=smem, size = 0x4, offset = 0x4, fixed_abs, tag = 'smem constant byte address 0x4 - core index']
  #allocation1 [shape = 'u32[144,128]{1,0:T(1,128)}', space=vmem, size = 0x12000, scoped, tag = 'internal scratch']
  %s0 = inlined_call_operand.vmem [shape: f32[2,32,2], index: 0, kind: input, shape index: {}]
  %s1 = inlined_call_operand.vmem [shape: f32[2,128], index: 1, kind: input, shape index: {}]
  %s2 = inlined_call_operand.vmem [shape: bf16[2,2,130], index: 2, kind: input, shape index: {}]
  %s3 = inlined_call_operand.vmem [shape: bf16[2,128,130], index: 3, kind: input, shape index: {}]
  %s4 = inlined_call_operand.vmem [shape: f32[2,1,130], index: 4, kind: input, shape index: {}]
  %s5 = inlined_call_operand.vmem [shape: bf16[2,130,65], index: 5, kind: input, shape index: {}]
  %s6 = inlined_call_operand.vmem [shape: f32[2,1,65], index: 6, kind: input, shape index: {}]
  %s7 = inlined_call_operand.vmem [shape: bf16[2,65,32], index: 7, kind: input, shape index: {}]
  %s8 = inlined_call_operand.vmem [shape: f32[2,1,32], index: 8, kind: input, shape index: {}]
  %s9 = inlined_call_operand.vmem [shape: bf16[2,32,8], index: 9, kind: input, shape index: {}]
  %s10 = inlined_call_operand.vmem [shape: f32[2,1,8], index: 10, kind: input, shape index: {}]
  %s11 = inlined_call_operand.vmem [shape: f32[2,32,8], index: 11, kind: output, shape index: {}]
  %s12 = sld [smem:[#allocation0]]
  $region77: #{ae_pointnet_dcg_forward.4} parent=0
    _
  %s14 = ssub.s32 1, %s12
  %s15 = scalar_select 0, %s14, %s12
  loop: start=0, step=1, limit=4
  $region2: #{ae_pointnet_dcg_forward.4} parent=0 // loop_pre_header
    _
  $region3: #{ae_pointnet_dcg_forward.4} parent=0 // loop_header
    %s17 = sphi 0, %s21
    %p18 = scmp.ge.s32.totalorder %s17, 4
    %s27 = sphi 0, %s29
    %s30 = sphi 0, %s27
    %s31 = sphi 0, %s30
    %s47 = sphi 0, %s31
    %s51 = sphi 0, %s51
    %s53 = sphi 0, %s51
    %s54 = sphi 0, %s53
    %s68 = sphi 0, %s54
    %s74 = sphi 0, %s76
    %s77 = sphi 0, %s74
    %s78 = sphi 0, %s77
    %s94 = sphi 0, %s78
    %s100 = sphi 0, %s102
    %s103 = sphi 0, %s100
    %s104 = sphi 0, %s103
    %s120 = sphi 0, %s104
    %s126 = sphi 0, %s128
    %s129 = sphi 0, %s126
    %s130 = sphi 0, %s129
    %s146 = sphi 0, %s130
    %s152 = sphi 0, %s154
    %s155 = sphi 0, %s152
    %s156 = sphi 0, %s155
    %s172 = sphi 0, %s156
    %s178 = sphi 0, %s180
    %s181 = sphi 0, %s178
    %s182 = sphi 0, %s181
    %s198 = sphi 0, %s182
    %s204 = sphi 0, %s206
    %s207 = sphi 0, %s204
    %s208 = sphi 0, %s207
    %s224 = sphi 0, %s208
    %s230 = sphi 0, %s232
    %s233 = sphi 0, %s230
    %s234 = sphi 0, %s233
    %s250 = sphi 0, %s234
    %s256 = sphi 0, %s258
    %s259 = sphi 0, %s256
    %s260 = sphi 0, %s259
    %s276 = sphi 0, %s260
    %s282 = sphi 0, %s284
    %s285 = sphi 0, %s282
    %s286 = sphi 0, %s285
    %s302 = sphi 0, %s286
    %s308 = sphi 0, %s310
    %s311 = sphi 0, %s308
    %s312 = sphi 0, %s311
    %s328 = sphi 0, %s312
  $region4: #{ae_pointnet_dcg_forward.4} parent=0 // loop_header_branch
    %20 = sbr.rel (%p18) target = $region8
  $region5: #{ae_pointnet_dcg_forward.4} parent=0 // loop_body
    %s22 = ssub.s32 %s17, 1
    %s23 = ssub.s32 %s17, 2
    %s24 = sadd.s32 %s17, 1
    %s25 = ssub.s32 %s17, %s24
    %p26 = scmp.eq.s32.totalorder %s25, 0
    %s28 = sadd.s32 %s27, 1
    %s29 = scalar_select %p26, %s27, %s28
    %p32 = pneg %p26
    %p33 = scmp.eq.s32.totalorder %s17, 1
    %p34 = por %p32, %p33
    %p35 = scmp.ne.s32.totalorder %s27, %s30
    %p36 = scmp.eq.s32.totalorder %s17, 0
    %p37 = por %p35, %p36
    %p38 = scmp.ne.s32.totalorder %s27, %s30
    %p39 = scmp.eq.s32.totalorder %s22, 1
    %p40 = por %p38, %p39
    %p41 = scmp.ne.s32.totalorder %s30, %s31
    %p42 = scmp.eq.s32.totalorder %s22, 0
    %p43 = por %p41, %p42
    %p44 = scmp.ne.s32.totalorder %s30, %s31
    %p45 = scmp.eq.s32.totalorder %s23, 1
    %p46 = por %p44, %p45
    %p48 = scmp.ne.s32.totalorder %s31, %s47
    %p49 = scmp.eq.s32.totalorder %s23, 0
    %p50 = por %p48, %p49
    %s52 = sadd.s32 %s51, 1
    %p55 = scmp.eq.s32.totalorder %s17, 1
    %p56 = scmp.ne.s32.totalorder %s51, %s53
    %p57 = scmp.eq.s32.totalorder %s17, 0
    %p58 = por %p56, %p57
    %p59 = scmp.ne.s32.totalorder %s51, %s53
    %p60 = scmp.eq.s32.totalorder %s22, 1
    %p61 = por %p59, %p60
    %p62 = scmp.ne.s32.totalorder %s53, %s54
    %p63 = scmp.eq.s32.totalorder %s22, 0
    %p64 = por %p62, %p63
    %p65 = scmp.ne.s32.totalorder %s53, %s54
    %p66 = scmp.eq.s32.totalorder %s23, 1
    %p67 = por %p65, %p66
    %p69 = scmp.ne.s32.totalorder %s54, %s68
    %p70 = scmp.eq.s32.totalorder %s23, 0
    %p71 = por %p69, %p70
    %s72 = ssub.s32 %s17, %s24
    %p73 = scmp.eq.s32.totalorder %s72, 0
    %s75 = sadd.s32 %s74, 1
    %s76 = scalar_select %p73, %s74, %s75
    %p79 = pneg %p73
    %p80 = scmp.eq.s32.totalorder %s17, 1
    %p81 = por %p79, %p80
    %p82 = scmp.ne.s32.totalorder %s74, %s77
    %p83 = scmp.eq.s32.totalorder %s17, 0
    %p84 = por %p82, %p83
    %p85 = scmp.ne.s32.totalorder %s74, %s77
    %p86 = scmp.eq.s32.totalorder %s22, 1
    %p87 = por %p85, %p86
    %p88 = scmp.ne.s32.totalorder %s77, %s78
    %p89 = scmp.eq.s32.totalorder %s22, 0
    %p90 = por %p88, %p89
    %p91 = scmp.ne.s32.totalorder %s77, %s78
    %p92 = scmp.eq.s32.totalorder %s23, 1
    %p93 = por %p91, %p92
    %p95 = scmp.ne.s32.totalorder %s78, %s94
    %p96 = scmp.eq.s32.totalorder %s23, 0
    %p97 = por %p95, %p96
    %s98 = ssub.s32 %s17, %s24
    %p99 = scmp.eq.s32.totalorder %s98, 0
    %s101 = sadd.s32 %s100, 1
    %s102 = scalar_select %p99, %s100, %s101
    %p105 = pneg %p99
    %p106 = scmp.eq.s32.totalorder %s17, 1
    %p107 = por %p105, %p106
    %p108 = scmp.ne.s32.totalorder %s100, %s103
    %p109 = scmp.eq.s32.totalorder %s17, 0
    %p110 = por %p108, %p109
    %p111 = scmp.ne.s32.totalorder %s100, %s103
    %p112 = scmp.eq.s32.totalorder %s22, 1
    %p113 = por %p111, %p112
    %p114 = scmp.ne.s32.totalorder %s103, %s104
    %p115 = scmp.eq.s32.totalorder %s22, 0
    %p116 = por %p114, %p115
    %p117 = scmp.ne.s32.totalorder %s103, %s104
    %p118 = scmp.eq.s32.totalorder %s23, 1
    %p119 = por %p117, %p118
    %p121 = scmp.ne.s32.totalorder %s104, %s120
    %p122 = scmp.eq.s32.totalorder %s23, 0
    %p123 = por %p121, %p122
    %s124 = ssub.s32 %s17, %s24
    %p125 = scmp.eq.s32.totalorder %s124, 0
    %s127 = sadd.s32 %s126, 1
    %s128 = scalar_select %p125, %s126, %s127
    %p131 = pneg %p125
    %p132 = scmp.eq.s32.totalorder %s17, 1
    %p133 = por %p131, %p132
    %p134 = scmp.ne.s32.totalorder %s126, %s129
    %p135 = scmp.eq.s32.totalorder %s17, 0
    %p136 = por %p134, %p135
    %p137 = scmp.ne.s32.totalorder %s126, %s129
    %p138 = scmp.eq.s32.totalorder %s22, 1
    %p139 = por %p137, %p138
    %p140 = scmp.ne.s32.totalorder %s129, %s130
    %p141 = scmp.eq.s32.totalorder %s22, 0
    %p142 = por %p140, %p141
    %p143 = scmp.ne.s32.totalorder %s129, %s130
    %p144 = scmp.eq.s32.totalorder %s23, 1
    %p145 = por %p143, %p144
    %p147 = scmp.ne.s32.totalorder %s130, %s146
    %p148 = scmp.eq.s32.totalorder %s23, 0
    %p149 = por %p147, %p148
    %s150 = ssub.s32 %s17, %s24
    %p151 = scmp.eq.s32.totalorder %s150, 0
    %s153 = sadd.s32 %s152, 1
    %s154 = scalar_select %p151, %s152, %s153
    %p157 = pneg %p151
    %p158 = scmp.eq.s32.totalorder %s17, 1
    %p159 = por %p157, %p158
    %p160 = scmp.ne.s32.totalorder %s152, %s155
    %p161 = scmp.eq.s32.totalorder %s17, 0
    %p162 = por %p160, %p161
    %p163 = scmp.ne.s32.totalorder %s152, %s155
    %p164 = scmp.eq.s32.totalorder %s22, 1
    %p165 = por %p163, %p164
    %p166 = scmp.ne.s32.totalorder %s155, %s156
    %p167 = scmp.eq.s32.totalorder %s22, 0
    %p168 = por %p166, %p167
    %p169 = scmp.ne.s32.totalorder %s155, %s156
    %p170 = scmp.eq.s32.totalorder %s23, 1
    %p171 = por %p169, %p170
    %p173 = scmp.ne.s32.totalorder %s156, %s172
    %p174 = scmp.eq.s32.totalorder %s23, 0
    %p175 = por %p173, %p174
    %s176 = ssub.s32 %s17, %s24
    %p177 = scmp.eq.s32.totalorder %s176, 0
    %s179 = sadd.s32 %s178, 1
    %s180 = scalar_select %p177, %s178, %s179
    %p183 = pneg %p177
    %p184 = scmp.eq.s32.totalorder %s17, 1
    %p185 = por %p183, %p184
    %p186 = scmp.ne.s32.totalorder %s178, %s181
    %p187 = scmp.eq.s32.totalorder %s17, 0
    %p188 = por %p186, %p187
    %p189 = scmp.ne.s32.totalorder %s178, %s181
    %p190 = scmp.eq.s32.totalorder %s22, 1
    %p191 = por %p189, %p190
    %p192 = scmp.ne.s32.totalorder %s181, %s182
    %p193 = scmp.eq.s32.totalorder %s22, 0
    %p194 = por %p192, %p193
    %p195 = scmp.ne.s32.totalorder %s181, %s182
    %p196 = scmp.eq.s32.totalorder %s23, 1
    %p197 = por %p195, %p196
    %p199 = scmp.ne.s32.totalorder %s182, %s198
    %p200 = scmp.eq.s32.totalorder %s23, 0
    %p201 = por %p199, %p200
    %s202 = ssub.s32 %s17, %s24
    %p203 = scmp.eq.s32.totalorder %s202, 0
    %s205 = sadd.s32 %s204, 1
    %s206 = scalar_select %p203, %s204, %s205
    %p209 = pneg %p203
    %p210 = scmp.eq.s32.totalorder %s17, 1
    %p211 = por %p209, %p210
    %p212 = scmp.ne.s32.totalorder %s204, %s207
    %p213 = scmp.eq.s32.totalorder %s17, 0
    %p214 = por %p212, %p213
    %p215 = scmp.ne.s32.totalorder %s204, %s207
    %p216 = scmp.eq.s32.totalorder %s22, 1
    %p217 = por %p215, %p216
    %p218 = scmp.ne.s32.totalorder %s207, %s208
    %p219 = scmp.eq.s32.totalorder %s22, 0
    %p220 = por %p218, %p219
    %p221 = scmp.ne.s32.totalorder %s207, %s208
    %p222 = scmp.eq.s32.totalorder %s23, 1
    %p223 = por %p221, %p222
    %p225 = scmp.ne.s32.totalorder %s208, %s224
    %p226 = scmp.eq.s32.totalorder %s23, 0
    %p227 = por %p225, %p226
    %s228 = ssub.s32 %s17, %s24
    %p229 = scmp.eq.s32.totalorder %s228, 0
    %s231 = sadd.s32 %s230, 1
    %s232 = scalar_select %p229, %s230, %s231
    %p235 = pneg %p229
    %p236 = scmp.eq.s32.totalorder %s17, 1
    %p237 = por %p235, %p236
    %p238 = scmp.ne.s32.totalorder %s230, %s233
    %p239 = scmp.eq.s32.totalorder %s17, 0
    %p240 = por %p238, %p239
    %p241 = scmp.ne.s32.totalorder %s230, %s233
    %p242 = scmp.eq.s32.totalorder %s22, 1
    %p243 = por %p241, %p242
    %p244 = scmp.ne.s32.totalorder %s233, %s234
    %p245 = scmp.eq.s32.totalorder %s22, 0
    %p246 = por %p244, %p245
    %p247 = scmp.ne.s32.totalorder %s233, %s234
    %p248 = scmp.eq.s32.totalorder %s23, 1
    %p249 = por %p247, %p248
    %p251 = scmp.ne.s32.totalorder %s234, %s250
    %p252 = scmp.eq.s32.totalorder %s23, 0
    %p253 = por %p251, %p252
    %s254 = ssub.s32 %s17, %s24
    %p255 = scmp.eq.s32.totalorder %s254, 0
    %s257 = sadd.s32 %s256, 1
    %s258 = scalar_select %p255, %s256, %s257
    %p261 = pneg %p255
    %p262 = scmp.eq.s32.totalorder %s17, 1
    %p263 = por %p261, %p262
    %p264 = scmp.ne.s32.totalorder %s256, %s259
    %p265 = scmp.eq.s32.totalorder %s17, 0
    %p266 = por %p264, %p265
    %p267 = scmp.ne.s32.totalorder %s256, %s259
    %p268 = scmp.eq.s32.totalorder %s22, 1
    %p269 = por %p267, %p268
    %p270 = scmp.ne.s32.totalorder %s259, %s260
    %p271 = scmp.eq.s32.totalorder %s22, 0
    %p272 = por %p270, %p271
    %p273 = scmp.ne.s32.totalorder %s259, %s260
    %p274 = scmp.eq.s32.totalorder %s23, 1
    %p275 = por %p273, %p274
    %p277 = scmp.ne.s32.totalorder %s260, %s276
    %p278 = scmp.eq.s32.totalorder %s23, 0
    %p279 = por %p277, %p278
    %s280 = ssub.s32 %s17, %s24
    %p281 = scmp.eq.s32.totalorder %s280, 0
    %s283 = sadd.s32 %s282, 1
    %s284 = scalar_select %p281, %s282, %s283
    %p287 = pneg %p281
    %p288 = scmp.eq.s32.totalorder %s17, 1
    %p289 = por %p287, %p288
    %p290 = scmp.ne.s32.totalorder %s282, %s285
    %p291 = scmp.eq.s32.totalorder %s17, 0
    %p292 = por %p290, %p291
    %p293 = scmp.ne.s32.totalorder %s282, %s285
    %p294 = scmp.eq.s32.totalorder %s22, 1
    %p295 = por %p293, %p294
    %p296 = scmp.ne.s32.totalorder %s285, %s286
    %p297 = scmp.eq.s32.totalorder %s22, 0
    %p298 = por %p296, %p297
    %p299 = scmp.ne.s32.totalorder %s285, %s286
    %p300 = scmp.eq.s32.totalorder %s23, 1
    %p301 = por %p299, %p300
    %p303 = scmp.ne.s32.totalorder %s286, %s302
    %p304 = scmp.eq.s32.totalorder %s23, 0
    %p305 = por %p303, %p304
    %s306 = ssub.s32 %s17, %s24
    %p307 = scmp.eq.s32.totalorder %s306, 0
    %s309 = sadd.s32 %s308, 1
    %s310 = scalar_select %p307, %s308, %s309
    %p313 = pneg %p307
    %p314 = scmp.eq.s32.totalorder %s17, 1
    %p315 = por %p313, %p314
    %p316 = scmp.ne.s32.totalorder %s308, %s311
    %p317 = scmp.eq.s32.totalorder %s17, 0
    %p318 = por %p316, %p317
    %p319 = scmp.ne.s32.totalorder %s308, %s311
    %p320 = scmp.eq.s32.totalorder %s22, 1
    %p321 = por %p319, %p320
    %p322 = scmp.ne.s32.totalorder %s311, %s312
    %p323 = scmp.eq.s32.totalorder %s22, 0
    %p324 = por %p322, %p323
    %p325 = scmp.ne.s32.totalorder %s311, %s312
    %p326 = scmp.eq.s32.totalorder %s23, 1
    %p327 = por %p325, %p326
    %p329 = scmp.ne.s32.totalorder %s312, %s328
    %p330 = scmp.eq.s32.totalorder %s23, 0
    %p331 = por %p329, %p330
    %p332 = scmp.le.s32.totalorder 1, %s17
    %p333 = scmp.lt.s32.totalorder %s17, 3
    %p334 = pnand %p332, %p333
    %p335 = pneg %p334
    // Predicated region
    $region9: #{ae_pointnet_dcg_forward.4} parent=5 // pred_check
      _
    $region10: #{ae_pointnet_dcg_forward.4} parent=5 // pred_check_branch
      %337 = sbr.rel (%p334) target = $region12
    $region11: #{ae_pointnet_dcg_forward.4} parent=5 // pred_region
      %s338 = ssub.s32 %s17, 1
      // Predicated region
      $region13: #{ae_pointnet_dcg_forward.4} parent=11 // pred_check
        %p339 = pneg %p64
      $region14: #{ae_pointnet_dcg_forward.4} parent=11 // pred_check_branch
        %341 = sbr.rel (%p339) target = $region16
      $region15: #{ae_pointnet_dcg_forward.4} parent=11 // pred_region
        _
      $region16: #{ae_pointnet_dcg_forward.4} parent=11 // pred_fallthru
        _
    $region12: #{ae_pointnet_dcg_forward.4} parent=5 // pred_fallthru
      _
    %p342 = scmp.lt.s32.totalorder %s17, 2
    // Predicated region
    $region17: #{ae_pointnet_dcg_forward.4} parent=5 // pred_check
      %p343 = pneg %p342
    $region18: #{ae_pointnet_dcg_forward.4} parent=5 // pred_check_branch
      %345 = sbr.rel (%p343) target = $region20
    $region19: #{ae_pointnet_dcg_forward.4} parent=5 // pred_region
      // Predicated region
      $region21: #{ae_pointnet_dcg_forward.4} parent=19 // pred_check
        %p346 = pneg %p37
      $region22: #{ae_pointnet_dcg_forward.4} parent=19 // pred_check_branch
        %348 = sbr.rel (%p346) target = $region24
      $region23: #{ae_pointnet_dcg_forward.4} parent=19 // pred_region
        %p349 = scmp.lt.s32.totalorder %s17, 1
        %s350 = scalar_select %p349, %s17, 1
        %s351 = smul.addr %s350, 4
        %s352 = smul.addr %s351, 8
        %s353 = scalar_lea.vmem %s0, %s352
      $region24: #{ae_pointnet_dcg_forward.4} parent=19 // pred_fallthru
        _
      // Predicated region
      $region25: #{ae_pointnet_dcg_forward.4} parent=19 // pred_check
        %p354 = pneg %p84
      $region26: #{ae_pointnet_dcg_forward.4} parent=19 // pred_check_branch
        %356 = sbr.rel (%p354) target = $region28
      $region27: #{ae_pointnet_dcg_forward.4} parent=19 // pred_region
        %p357 = scmp.lt.s32.totalorder %s17, 1
        %s358 = scalar_select %p357, %s17, 1
        %s359 = smul.addr %s358, 2
        %s360 = scalar_lea.vmem %s2, %s359
      $region28: #{ae_pointnet_dcg_forward.4} parent=19 // pred_fallthru
        _
      // Predicated region
      $region29: #{ae_pointnet_dcg_forward.4} parent=19 // pred_check
        %p361 = pneg %p110
      $region30: #{ae_pointnet_dcg_forward.4} parent=19 // pred_check_branch
        %363 = sbr.rel (%p361) target = $region32
      $region31: #{ae_pointnet_dcg_forward.4} parent=19 // pred_region
        %p364 = scmp.lt.s32.totalorder %s17, 1
        %s365 = scalar_select %p364, %s17, 1
        %s366 = smul.addr %s365, 32
        %s367 = smul.addr %s366, 4
        %s368 = scalar_lea.vmem %s3, %s367
      $region32: #{ae_pointnet_dcg_forward.4} parent=19 // pred_fallthru
        _
      // Predicated region
      $region33: #{ae_pointnet_dcg_forward.4} parent=19 // pred_check
        %p369 = pneg %p136
      $region34: #{ae_pointnet_dcg_forward.4} parent=19 // pred_check_branch
        %371 = sbr.rel (%p369) target = $region36
      $region35: #{ae_pointnet_dcg_forward.4} parent=19 // pred_region
        %p372 = scmp.lt.s32.totalorder %s17, 1
        %s373 = scalar_select %p372, %s17, 1
        %s374 = smul.addr %s373, 2
        %s375 = scalar_lea.vmem %s4, %s374
      $region36: #{ae_pointnet_dcg_forward.4} parent=19 // pred_fallthru
        _
      // Predicated region
      $region37: #{ae_pointnet_dcg_forward.4} parent=19 // pred_check
        %p376 = pneg %p162
      $region38: #{ae_pointnet_dcg_forward.4} parent=19 // pred_check_branch
        %378 = sbr.rel (%p376) target = $region40
      $region39: #{ae_pointnet_dcg_forward.4} parent=19 // pred_region
        %p379 = scmp.lt.s32.totalorder %s17, 1
        %s380 = scalar_select %p379, %s17, 1
        %s381 = smul.addr %s380, 17
        %s382 = smul.addr %s381, 4
        %s383 = scalar_lea.vmem %s5, %s382
      $region40: #{ae_pointnet_dcg_forward.4} parent=19 // pred_fallthru
        _
      // Predicated region
      $region41: #{ae_pointnet_dcg_forward.4} parent=19 // pred_check
        %p384 = pneg %p188
      $region42: #{ae_pointnet_dcg_forward.4} parent=19 // pred_check_branch
        %386 = sbr.rel (%p384) target = $region44
      $region43: #{ae_pointnet_dcg_forward.4} parent=19 // pred_region
        %p387 = scmp.lt.s32.totalorder %s17, 1
        %s388 = scalar_select %p387, %s17, 1
        %s389 = scalar_lea.vmem %s6, %s388
      $region44: #{ae_pointnet_dcg_forward.4} parent=19 // pred_fallthru
        _
      // Predicated region
      $region45: #{ae_pointnet_dcg_forward.4} parent=19 // pred_check
        %p390 = pneg %p214
      $region46: #{ae_pointnet_dcg_forward.4} parent=19 // pred_check_branch
        %392 = sbr.rel (%p390) target = $region48
      $region47: #{ae_pointnet_dcg_forward.4} parent=19 // pred_region
        %p393 = scmp.lt.s32.totalorder %s17, 1
        %s394 = scalar_select %p393, %s17, 1
        %s395 = smul.addr %s394, 9
        %s396 = smul.addr %s395, 4
        %s397 = scalar_lea.vmem %s7, %s396
      $region48: #{ae_pointnet_dcg_forward.4} parent=19 // pred_fallthru
        _
      // Predicated region
      $region49: #{ae_pointnet_dcg_forward.4} parent=19 // pred_check
        %p398 = pneg %p240
      $region50: #{ae_pointnet_dcg_forward.4} parent=19 // pred_check_branch
        %400 = sbr.rel (%p398) target = $region52
      $region51: #{ae_pointnet_dcg_forward.4} parent=19 // pred_region
        %p401 = scmp.lt.s32.totalorder %s17, 1
        %s402 = scalar_select %p401, %s17, 1
        %s403 = scalar_lea.vmem %s8, %s402
      $region52: #{ae_pointnet_dcg_forward.4} parent=19 // pred_fallthru
        _
      // Predicated region
      $region53: #{ae_pointnet_dcg_forward.4} parent=19 // pred_check
        %p404 = pneg %p266
      $region54: #{ae_pointnet_dcg_forward.4} parent=19 // pred_check_branch
        %406 = sbr.rel (%p404) target = $region56
      $region55: #{ae_pointnet_dcg_forward.4} parent=19 // pred_region
        %p407 = scmp.lt.s32.totalorder %s17, 1
        %s408 = scalar_select %p407, %s17, 1
        %s409 = smul.addr %s408, 4
        %s410 = smul.addr %s409, 4
        %s411 = scalar_lea.vmem %s9, %s410
      $region56: #{ae_pointnet_dcg_forward.4} parent=19 // pred_fallthru
        _
      // Predicated region
      $region57: #{ae_pointnet_dcg_forward.4} parent=19 // pred_check
        %p412 = pneg %p292
      $region58: #{ae_pointnet_dcg_forward.4} parent=19 // pred_check_branch
        %414 = sbr.rel (%p412) target = $region60
      $region59: #{ae_pointnet_dcg_forward.4} parent=19 // pred_region
        %p415 = scmp.lt.s32.totalorder %s17, 1
        %s416 = scalar_select %p415, %s17, 1
        %s417 = scalar_lea.vmem %s10, %s416
      $region60: #{ae_pointnet_dcg_forward.4} parent=19 // pred_fallthru
        _
    $region20: #{ae_pointnet_dcg_forward.4} parent=5 // pred_fallthru
      _
    %p418 = scmp.le.s32.totalorder 1, %s17
    %p419 = scmp.lt.s32.totalorder %s17, 3
    %p420 = pnand %p418, %p419
    %p421 = pneg %p420
    // Predicated region
    $region61: #{ae_pointnet_dcg_forward.4} parent=5 // pred_check
      _
    $region62: #{ae_pointnet_dcg_forward.4} parent=5 // pred_check_branch
      %423 = sbr.rel (%p420) target = $region64
    $region63: #{ae_pointnet_dcg_forward.4} parent=5 // pred_region
      %s424 = ssub.s32 %s17, 1
      %p425 = scmp.lt.s32.totalorder %s22, 1
      %s426 = scalar_select %p425, %s22, 1
      %s427 = smul.addr %s426, 4
      %s428 = smul.addr %s427, 8
      %s429 = scalar_lea.vmem %s0, %s428
      %p430 = pneg %p43
      %p431 = pneg %p40
      %p432 = pneg %p64
      %p433 = pneg %p61
      %p434 = scmp.lt.s32.totalorder %s22, 1
      %s435 = scalar_select %p434, %s22, 1
      %s436 = smul.addr %s435, 2
      %s437 = scalar_lea.vmem %s2, %s436
      %p438 = pneg %p90
      %p439 = pneg %p87
      %p440 = scmp.lt.s32.totalorder %s22, 1
      %s441 = scalar_select %p440, %s22, 1
      %s442 = smul.addr %s441, 32
      %s443 = smul.addr %s442, 4
      %s444 = scalar_lea.vmem %s3, %s443
      %p445 = pneg %p116
      %p446 = pneg %p113
      %p447 = scmp.lt.s32.totalorder %s22, 1
      %s448 = scalar_select %p447, %s22, 1
      %s449 = smul.addr %s448, 2
      %s450 = scalar_lea.vmem %s4, %s449
      %p451 = pneg %p142
      %p452 = pneg %p139
      %p453 = scmp.lt.s32.totalorder %s22, 1
      %s454 = scalar_select %p453, %s22, 1
      %s455 = smul.addr %s454, 17
      %s456 = smul.addr %s455, 4
      %s457 = scalar_lea.vmem %s5, %s456
      %p458 = pneg %p168
      %p459 = pneg %p165
      %p460 = scmp.lt.s32.totalorder %s22, 1
      %s461 = scalar_select %p460, %s22, 1
      %s462 = scalar_lea.vmem %s6, %s461
      %p463 = pneg %p194
      %p464 = pneg %p191
      %p465 = scmp.lt.s32.totalorder %s22, 1
      %s466 = scalar_select %p465, %s22, 1
      %s467 = smul.addr %s466, 9
      %s468 = smul.addr %s467, 4
      %s469 = scalar_lea.vmem %s7, %s468
      %p470 = pneg %p220
      %p471 = pneg %p217
      %p472 = scmp.lt.s32.totalorder %s22, 1
      %s473 = scalar_select %p472, %s22, 1
      %s474 = scalar_lea.vmem %s8, %s473
      %p475 = pneg %p246
      %p476 = pneg %p243
      %p477 = scmp.lt.s32.totalorder %s22, 1
      %s478 = scalar_select %p477, %s22, 1
      %s479 = smul.addr %s478, 4
      %s480 = smul.addr %s479, 4
      %s481 = scalar_lea.vmem %s9, %s480
      %p482 = pneg %p272
      %p483 = pneg %p269
      %p484 = scmp.lt.s32.totalorder %s22, 1
      %s485 = scalar_select %p484, %s22, 1
      %s486 = scalar_lea.vmem %s10, %s485
      %p487 = pneg %p298
      %p488 = pneg %p295
      %p489 = pneg %p324
      %p490 = pneg %p321
      %p491 = scmp.lt.s32.totalorder %s22, 1
      %s492 = scalar_select %p491, %s22, 1
      %s493 = smul.addr %s492, 4
      %s494 = smul.addr %s493, 8
      %s495 = scalar_lea.vmem %s11, %s494
      %p496 = scmp.lt.s32.totalorder %s22, 1
      %s497 = scalar_select %p496, %s22, 1
      %s498 = smul.addr %s497, 4
      %s499 = smul.addr %s498, 8
      %s500 = scalar_lea.vmem %s0, %s499
      %p501 = scmp.lt.s32.totalorder %s22, 1
      %s502 = scalar_select %p501, %s22, 1
      %s503 = smul.addr %s502, 2
      %s504 = scalar_lea.vmem %s2, %s503
      %p505 = scmp.lt.s32.totalorder %s22, 1
      %s506 = scalar_select %p505, %s22, 1
      %s507 = smul.addr %s506, 32
      %s508 = smul.addr %s507, 4
      %s509 = scalar_lea.vmem %s3, %s508
      %p510 = scmp.lt.s32.totalorder %s22, 1
      %s511 = scalar_select %p510, %s22, 1
      %s512 = smul.addr %s511, 2
      %s513 = scalar_lea.vmem %s4, %s512
      %p514 = scmp.lt.s32.totalorder %s22, 1
      %s515 = scalar_select %p514, %s22, 1
      %s516 = smul.addr %s515, 17
      %s517 = smul.addr %s516, 4
      %s518 = scalar_lea.vmem %s5, %s517
      %p519 = scmp.lt.s32.totalorder %s22, 1
      %s520 = scalar_select %p519, %s22, 1
      %s521 = scalar_lea.vmem %s6, %s520
      %p522 = scmp.lt.s32.totalorder %s22, 1
      %s523 = scalar_select %p522, %s22, 1
      %s524 = smul.addr %s523, 9
      %s525 = smul.addr %s524, 4
      %s526 = scalar_lea.vmem %s7, %s525
      %p527 = scmp.lt.s32.totalorder %s22, 1
      %s528 = scalar_select %p527, %s22, 1
      %s529 = scalar_lea.vmem %s8, %s528
      %p530 = scmp.lt.s32.totalorder %s22, 1
      %s531 = scalar_select %p530, %s22, 1
      %s532 = smul.addr %s531, 4
      %s533 = smul.addr %s532, 4
      %s534 = scalar_lea.vmem %s9, %s533
      %p535 = scmp.lt.s32.totalorder %s22, 1
      %s536 = scalar_select %p535, %s22, 1
      %s537 = scalar_lea.vmem %s10, %s536
      %p538 = scmp.lt.s32.totalorder %s22, 1
      %s539 = scalar_select %p538, %s22, 1
      %s540 = smul.addr %s539, 4
      %s541 = smul.addr %s540, 8
      %s542 = scalar_lea.vmem %s11, %s541
      %v544 = vld [vmem:[%s500] sm:$0xff]
      %v545 = vld [vmem:[%s500 + $0x8] sm:$0xff]
      %v546 = vld [vmem:[%s500 + $0x10] sm:$0xff]
      %v547 = vld [vmem:[%s500 + $0x18] sm:$0xff]
      %v548 = vld [vmem:[%s1] sm:$0x3]
      %v549 = vpack.c.bf16 %v548, %v548
      %v550 = vld [vmem:[%s509] sm:$0xff]
      %v551 = vld [vmem:[%s509 + $0x8] sm:$0xff]
      %v552 = vld [vmem:[%s509 + $0x10] sm:$0xff]
      %v553 = vld [vmem:[%s509 + $0x18] sm:$0xff]
      %v554 = vld [vmem:[%s509 + $0x20] sm:$0xff]
      %v555 = vld [vmem:[%s509 + $0x28] sm:$0xff]
      %v556 = vld [vmem:[%s509 + $0x30] sm:$0xff]
      %v557 = vld [vmem:[%s509 + $0x38] sm:$0xff]
      %v558 = vld [vmem:[%s509 + $0x40] sm:$0xff]
      %v559 = vld [vmem:[%s509 + $0x48] sm:$0xff]
      %v560 = vld [vmem:[%s509 + $0x50] sm:$0xff]
      %v561 = vld [vmem:[%s509 + $0x58] sm:$0xff]
      %v562 = vld [vmem:[%s509 + $0x60] sm:$0xff]
      %v563 = vld [vmem:[%s509 + $0x68] sm:$0xff]
      %v564 = vld [vmem:[%s509 + $0x70] sm:$0xff]
      %v565 = vld [vmem:[%s509 + $0x78] sm:$0xff]
      %v582 = vunpack.c.l.b16 %v550
      %v583 = vunpack.c.h.b16 %v550
      %v584 = vunpack.c.l.b16 %v551
      %v585 = vunpack.c.h.b16 %v551
      %v586 = vunpack.c.l.b16 %v552
      %v587 = vunpack.c.h.b16 %v552
      %v588 = vunpack.c.l.b16 %v553
      %v589 = vunpack.c.h.b16 %v553
      %v590 = vunpack.c.l.b16 %v554
      %v591 = vunpack.c.h.b16 %v554
      %v592 = vunpack.c.l.b16 %v555
      %v593 = vunpack.c.h.b16 %v555
      %v594 = vunpack.c.l.b16 %v556
      %v595 = vunpack.c.h.b16 %v556
      %v596 = vunpack.c.l.b16 %v557
      %v597 = vunpack.c.h.b16 %v557
      %v598 = vunpack.c.l.b16 %v558
      %v599 = vunpack.c.h.b16 %v558
      %v600 = vunpack.c.l.b16 %v559
      %v601 = vunpack.c.h.b16 %v559
      %v602 = vunpack.c.l.b16 %v560
      %v603 = vunpack.c.h.b16 %v560
      %v604 = vunpack.c.l.b16 %v561
      %v605 = vunpack.c.h.b16 %v561
      %v606 = vunpack.c.l.b16 %v562
      %v607 = vunpack.c.h.b16 %v562
      %v608 = vunpack.c.l.b16 %v563
      %v609 = vunpack.c.h.b16 %v563
      %v610 = vunpack.c.l.b16 %v564
      %v611 = vunpack.c.h.b16 %v564
      %v612 = vunpack.c.l.b16 %v565
      %v613 = vunpack.c.h.b16 %v565
      %v614 = vpack.c.b16 %v584, %v582
      %v615 = vpack.c.b16 %v585, %v583
      %v616 = vpack.c.b16 %v588, %v586
      %v617 = vpack.c.b16 %v589, %v587
      %v618 = vpack.c.b16 %v592, %v590
      %v619 = vpack.c.b16 %v593, %v591
      %v620 = vpack.c.b16 %v596, %v594
      %v621 = vpack.c.b16 %v597, %v595
      %v622 = vpack.c.b16 %v600, %v598
      %v623 = vpack.c.b16 %v601, %v599
      %v624 = vpack.c.b16 %v604, %v602
      %v625 = vpack.c.b16 %v605, %v603
      %v626 = vpack.c.b16 %v608, %v606
      %v627 = vpack.c.b16 %v609, %v607
      %v628 = vpack.c.b16 %v612, %v610
      %v629 = vpack.c.b16 %v613, %v611
      %646 = vmatprep.subr.bf16.mxu0 %v615
      %647 = vmatpush1.bf16.msra.mxu0 %v614
      %648 = vmatprep.subr.bf16.mxu0 %v617
      %649 = vmatpush1.bf16.msra.mxu0 %v616
      %650 = vmatprep.subr.bf16.mxu0 %v619
      %651 = vmatpush1.bf16.msra.mxu0 %v618
      %652 = vmatprep.subr.bf16.mxu0 %v621
      %653 = vmatpush1.bf16.msra.mxu0 %v620
      %654 = vmatprep.subr.bf16.mxu0 %v623
      %655 = vmatpush1.bf16.msra.mxu0 %v622
      %656 = vmatprep.subr.bf16.mxu0 %v625
      %657 = vmatpush1.bf16.msra.mxu0 %v624
      %658 = vmatprep.subr.bf16.mxu0 %v627
      %659 = vmatpush1.bf16.msra.mxu0 %v626
      %660 = vmatprep.subr.bf16.mxu0 %v629
      %661 = vmatpush1.bf16.msra.mxu0 %v628
      %662 = vmatprep.subr.bf16.mxu0 0
      %663 = vmatpush1.bf16.msra.mxu0 0
      %664 = vmatprep.subr.bf16.mxu0 0
      %665 = vmatpush1.bf16.msra.mxu0 0
      %666 = vmatprep.subr.bf16.mxu0 0
      %667 = vmatpush1.bf16.msra.mxu0 0
      %668 = vmatprep.subr.bf16.mxu0 0
      %669 = vmatpush1.bf16.msra.mxu0 0
      %670 = vmatprep.subr.bf16.mxu0 0
      %671 = vmatpush1.bf16.msra.mxu0 0
      %672 = vmatprep.subr.bf16.mxu0 0
      %673 = vmatpush1.bf16.msra.mxu0 0
      %674 = vmatprep.subr.bf16.mxu0 0
      %675 = vmatpush1.bf16.msra.mxu0 0
      %676 = vmatprep.subr.bf16.mxu0 0
      %677 = vmatpush1.bf16.msra.mxu0 0
      %678 = vmatprep.mubr.bf16.mxu0 0
      %679 = vmatmul.mubr.bf16.gmra.mrb[0].mxu0 %v549
      %v680 = vpop.f32.mrb[0].mxu0
      %v681 = vadd.f32 0.0, %v680
      %v682 = vpop.f32.mrb[0].mxu0
      %v683 = vadd.f32 0.0, %v682
      %v684 = vpop.f32.mrb[0].mxu0
      %v685 = vpop.f32.mrb[0].mxu0
      %686 = vdwg.mxu0
      %v687 = vlaneseq
      %v688 = vshrl.u32 %v687, 7
      %v689 = vadd.s32 %v688, 8
      %v690 = vadd.s32 %v688, 16
      %v691 = vadd.s32 %v688, 24
      %v692 = vlaneseq
      %v693 = vand.u32 %v692, 127
      %v694 = vmul.u32 %v693, 16
      %vm695 = vcmp.ge.s32.totalorder %v688, %v694
      %vm696 = vcmp.ge.s32.totalorder %v689, %v694
      %vm697 = vcmp.ge.s32.totalorder %v690, %v694
      %vm698 = vcmp.ge.s32.totalorder %v691, %v694
      %v699 = vadd.s32 %v694, 16
      %vm700 = vcmp.lt.s32.totalorder %v688, %v699
      %vm701 = vcmp.lt.s32.totalorder %v689, %v699
      %vm702 = vcmp.lt.s32.totalorder %v690, %v699
      %vm703 = vcmp.lt.s32.totalorder %v691, %v699
      %vm704 = vmand %vm695, %vm700
      %vm705 = vmand %vm696, %vm701
      %vm706 = vmand %vm697, %vm702
      %vm707 = vmand %vm698, %vm703
      %v708 = vsel %vm704, 1, 0
      %v709 = vsel %vm705, 1, 0
      %v710 = vsel %vm706, 1, 0
      %v711 = vsel %vm707, 1, 0
      %v712 = vcvt.s32.f32 %v708
      %v713 = vcvt.s32.f32 %v709
      %v714 = vcvt.s32.f32 %v710
      %v715 = vcvt.s32.f32 %v711
      %vm716 = vcmask 15360
      %v718 = vsel %vm716, %v712, 0
      %v721 = vsel %vm716, %v713, 0
      %v724 = vsel %vm716, %v714, 0
      %v727 = vsel %vm716, %v715, 0
      %vm729 = vcmask 1041408
      %v731 = vsel %vm729, %v681, 0
      %v734 = vsel %vm729, %v683, 0
      %736 = vmatprep.subr.mxu0 %v734
      %737 = vmatpush1.msra.mxu0 %v731
      %738 = vmatprep.subr.mxu0 0.0
      %739 = vmatpush1.msra.mxu0 0.0
      %740 = vmatprep.subr.mxu0 0.0
      %741 = vmatpush1.msra.mxu0 0.0
      %742 = vmatprep.subr.mxu0 0.0
      %743 = vmatpush1.msra.mxu0 0.0
      %744 = vmatprep.subr.mxu0 0.0
      %745 = vmatpush1.msra.mxu0 0.0
      %746 = vmatprep.subr.mxu0 0.0
      %747 = vmatpush1.msra.mxu0 0.0
      %748 = vmatprep.subr.mxu0 0.0
      %749 = vmatpush1.msra.mxu0 0.0
      %750 = vmatprep.subr.mxu0 0.0
      %751 = vmatpush1.msra.mxu0 0.0
      %752 = vmatprep.subr.mxu0 0.0
      %753 = vmatpush1.msra.mxu0 0.0
      %754 = vmatprep.subr.mxu0 0.0
      %755 = vmatpush1.msra.mxu0 0.0
      %756 = vmatprep.subr.mxu0 0.0
      %757 = vmatpush1.msra.mxu0 0.0
      %758 = vmatprep.subr.mxu0 0.0
      %759 = vmatpush1.msra.mxu0 0.0
      %760 = vmatprep.subr.mxu0 0.0
      %761 = vmatpush1.msra.mxu0 0.0
      %762 = vmatprep.subr.mxu0 0.0
      %763 = vmatpush1.msra.mxu0 0.0
      %764 = vmatprep.subr.mxu0 0.0
      %765 = vmatpush1.msra.mxu0 0.0
      %766 = vmatprep.subr.mxu0 0.0
      %767 = vmatpush1.msra.mxu0 0.0
      %768 = vmatprep.subr.mxu0 0.0
      %769 = vmatpush1.msra.mxu0 0.0
      %770 = vmatprep.subr.mxu0 0.0
      %771 = vmatpush1.msra.mxu0 0.0
      %772 = vmatprep.subr.mxu0 0.0
      %773 = vmatpush1.msra.mxu0 0.0
      %774 = vmatprep.subr.mxu0 0.0
      %775 = vmatpush1.msra.mxu0 0.0
      %776 = vmatprep.subr.mxu0 0.0
      %777 = vmatpush1.msra.mxu0 0.0
      %778 = vmatprep.subr.mxu0 0.0
      %779 = vmatpush1.msra.mxu0 0.0
      %780 = vmatprep.subr.mxu0 0.0
      %781 = vmatpush1.msra.mxu0 0.0
      %782 = vmatprep.subr.mxu0 0.0
      %783 = vmatpush1.msra.mxu0 0.0
      %784 = vmatprep.subr.mxu0 0.0
      %785 = vmatpush1.msra.mxu0 0.0
      %786 = vmatprep.subr.mxu0 0.0
      %787 = vmatpush1.msra.mxu0 0.0
      %788 = vmatprep.subr.mxu0 0.0
      %789 = vmatpush1.msra.mxu0 0.0
      %790 = vmatprep.subr.mxu0 0.0
      %791 = vmatpush1.msra.mxu0 0.0
      %792 = vmatprep.subr.mxu0 0.0
      %793 = vmatpush1.msra.mxu0 0.0
      %794 = vmatprep.subr.mxu0 0.0
      %795 = vmatpush1.msra.mxu0 0.0
      %796 = vmatprep.subr.mxu0 0.0
      %797 = vmatpush1.msra.mxu0 0.0
      %798 = vmatprep.subr.mxu0 0.0
      %799 = vmatpush1.msra.mxu0 0.0
      %800 = vmatprep.mubr.f32.mxu0 0.0
      %801 = vmatmul.mubr.f32.gmra.mrb[0].mxu0 %v718
      %v802 = vpop.f32.mrb[0].mxu0
      %v803 = vadd.f32 0.0, %v802
      %v804 = vpop.f32.mrb[0].mxu0
      %v805 = vadd.f32 0.0, %v804
      %806 = vmatprep.mubr.f32.mxu0 0.0
      %807 = vmatmul.mubr.f32.gmra.mrb[0].mxu0 %v721
      %v808 = vpop.f32.mrb[0].mxu0
      %v809 = vadd.f32 0.0, %v808
      %v810 = vpop.f32.mrb[0].mxu0
      %v811 = vadd.f32 0.0, %v810
      %812 = vmatprep.mubr.f32.mxu0 0.0
      %813 = vmatmul.mubr.f32.gmra.mrb[0].mxu0 %v724
      %v814 = vpop.f32.mrb[0].mxu0
      %v815 = vadd.f32 0.0, %v814
      %v816 = vpop.f32.mrb[0].mxu0
      %v817 = vadd.f32 0.0, %v816
      %818 = vmatprep.mubr.f32.mxu0 0.0
      %819 = vmatmul.mubr.f32.gmra.mrb[0].mxu0 %v727
      %v820 = vpop.f32.mrb[0].mxu0
      %v821 = vadd.f32 0.0, %v820
      %v822 = vpop.f32.mrb[0].mxu0
      %v823 = vadd.f32 0.0, %v822
      %824 = vdwg.mxu0
      %v825 = vpack.c.bf16 %v545, %v544
      %v826 = vpack.c.bf16 %v547, %v546
      %v827 = vld [vmem:[%s504] sm:$0x3]
      %v830 = vunpack.c.l.s4 1966171168
      %v831 = vunpack.c.0.s8 %v830
      %v832 = vlaneseq
      %v833 = vshrl.u32 %v832, 7
      %v834 = vsub.s32 %v831, %v833
      %v835 = vrot.slane %v827, %v834
      %v836 = vcombine.high %v835, %v835
      %v838 = vunpack.c.l.s4 1966171168
      %v839 = vunpack.c.0.s8 %v838
      %v840 = vlaneseq
      %v841 = vshrl.u32 %v840, 7
      %v842 = vsub.s32 %v839, %v841
      %v843 = vrot.slane %v835, %v842
      %v845 = vunpack.c.l.s4 1966171168
      %v846 = vunpack.c.0.s8 %v845
      %v847 = vlaneseq
      %v848 = vshrl.u32 %v847, 7
      %v849 = vsub.s32 %v846, %v848
      %v850 = vrot.slane %v836, %v849
      %v852 = vsel %vm716, %v825, 0
      %v855 = vsel %vm716, %v826, 0
      %vm857 = vcmask 1040384
      %v859 = vsel %vm857, %v843, 0
      %v862 = vsel %vm857, %v850, 0
      %864 = vmatprep.subr.bf16.mxu0 %v862
      %865 = vmatpush1.bf16.msra.mxu0 %v859
      %866 = vmatprep.subr.bf16.mxu0 0
      %867 = vmatpush1.bf16.msra.mxu0 0
      %868 = vmatprep.subr.bf16.mxu0 0
      %869 = vmatpush1.bf16.msra.mxu0 0
      %870 = vmatprep.subr.bf16.mxu0 0
      %871 = vmatpush1.bf16.msra.mxu0 0
      %872 = vmatprep.subr.bf16.mxu0 0
      %873 = vmatpush1.bf16.msra.mxu0 0
      %874 = vmatprep.subr.bf16.mxu0 0
      %875 = vmatpush1.bf16.msra.mxu0 0
      %876 = vmatprep.subr.bf16.mxu0 0
      %877 = vmatpush1.bf16.msra.mxu0 0
      %878 = vmatprep.subr.bf16.mxu0 0
      %879 = vmatpush1.bf16.msra.mxu0 0
      %880 = vmatprep.subr.bf16.mxu0 0
      %881 = vmatpush1.bf16.msra.mxu0 0
      %882 = vmatprep.subr.bf16.mxu0 0
      %883 = vmatpush1.bf16.msra.mxu0 0
      %884 = vmatprep.subr.bf16.mxu0 0
      %885 = vmatpush1.bf16.msra.mxu0 0
      %886 = vmatprep.subr.bf16.mxu0 0
      %887 = vmatpush1.bf16.msra.mxu0 0
      %888 = vmatprep.subr.bf16.mxu0 0
      %889 = vmatpush1.bf16.msra.mxu0 0
      %890 = vmatprep.subr.bf16.mxu0 0
      %891 = vmatpush1.bf16.msra.mxu0 0
      %892 = vmatprep.subr.bf16.mxu0 0
      %893 = vmatpush1.bf16.msra.mxu0 0
      %894 = vmatprep.subr.bf16.mxu0 0
      %895 = vmatpush1.bf16.msra.mxu0 0
      %896 = vmatprep.mubr.bf16.mxu0 0
      %897 = vmatmul.mubr.bf16.gmra.mrb[0].mxu0 %v852
      %v898 = vpop.f32.mrb[0].mxu0
      %v899 = vadd.f32 %v803, %v898
      %v900 = vpop.f32.mrb[0].mxu0
      %v901 = vadd.f32 %v805, %v900
      %v902 = vpop.f32.mrb[0].mxu0
      %v903 = vadd.f32 %v809, %v902
      %v904 = vpop.f32.mrb[0].mxu0
      %v905 = vadd.f32 %v811, %v904
      %906 = vmatprep.mubr.bf16.mxu0 0
      %907 = vmatmul.mubr.bf16.gmra.mrb[0].mxu0 %v855
      %v908 = vpop.f32.mrb[0].mxu0
      %v909 = vadd.f32 %v815, %v908
      %v910 = vpop.f32.mrb[0].mxu0
      %v911 = vadd.f32 %v817, %v910
      %v912 = vpop.f32.mrb[0].mxu0
      %v913 = vadd.f32 %v821, %v912
      %v914 = vpop.f32.mrb[0].mxu0
      %v915 = vadd.f32 %v823, %v914
      %916 = vdwg.mxu0
      %v917 = vld [vmem:[%s513] sm:$0x3]
      %v919 = vlaneseq
      %v920 = vshrl.u32 %v919, 7
      %v921 = vsub.s32 0, %v920
      %v922 = vrot.slane %v917, %v921
      %v923 = vlaneseq
      %v924 = vshrl.u32 %v923, 7
      %v925 = vsub.s32 1, %v924
      %v926 = vrot.slane %v917, %v925
      %v929 = vadd.f32 %v899, %v922
      %v930 = vadd.f32 %v901, %v926
      %v931 = vadd.f32 %v903, %v922
      %v932 = vadd.f32 %v905, %v926
      %v933 = vadd.f32 %v909, %v922
      %v934 = vadd.f32 %v911, %v926
      %v935 = vadd.f32 %v913, %v922
      %v936 = vadd.f32 %v915, %v926
      %v937 = vmax.f32 %v929, 0.0
      %v938 = vmax.f32 %v930, 0.0
      %v939 = vmax.f32 %v931, 0.0
      %v940 = vmax.f32 %v932, 0.0
      %v941 = vmax.f32 %v933, 0.0
      %v942 = vmax.f32 %v934, 0.0
      %v943 = vmax.f32 %v935, 0.0
      %v944 = vmax.f32 %v936, 0.0
      %v945 = vpack.c.bf16 %v939, %v937
      %v946 = vpack.c.bf16 %v940, %v938
      %v947 = vpack.c.bf16 %v943, %v941
      %v948 = vpack.c.bf16 %v944, %v942
      %v949 = vld [vmem:[%s518] sm:$0xf]
      %v950 = vld [vmem:[%s518 + $0x4] sm:$0xf]
      %v951 = vld [vmem:[%s518 + $0x8] sm:$0xf]
      %v952 = vld [vmem:[%s518 + $0xc] sm:$0xf]
      %v953 = vld [vmem:[%s518 + $0x10] sm:$0xf]
      %v954 = vld [vmem:[%s518 + $0x14] sm:$0xf]
      %v955 = vld [vmem:[%s518 + $0x18] sm:$0xf]
      %v956 = vld [vmem:[%s518 + $0x1c] sm:$0xf]
      %v957 = vld [vmem:[%s518 + $0x20] sm:$0xf]
      %v958 = vld [vmem:[%s518 + $0x24] sm:$0xf]
      %v959 = vld [vmem:[%s518 + $0x28] sm:$0xf]
      %v960 = vld [vmem:[%s518 + $0x2c] sm:$0xf]
      %v961 = vld [vmem:[%s518 + $0x30] sm:$0xf]
      %v962 = vld [vmem:[%s518 + $0x34] sm:$0xf]
      %v963 = vld [vmem:[%s518 + $0x38] sm:$0xf]
      %v964 = vld [vmem:[%s518 + $0x3c] sm:$0xf]
      %v965 = vld [vmem:[%s518 + $0x40] sm:$0x1]
      %v966 = vld [vmem:[%s521] sm:$0x1]
      %v968 = vlaneseq
      %v969 = vshrl.u32 %v968, 7
      %v970 = vsub.s32 0, %v969
      %v971 = vrot.slane %v966, %v970
      %v990 = vunpack.c.l.b16 %v949
      %v991 = vunpack.c.l.b16 %v950
      %v992 = vunpack.c.l.b16 %v951
      %v993 = vunpack.c.l.b16 %v952
      %v994 = vunpack.c.l.b16 %v953
      %v995 = vunpack.c.l.b16 %v954
      %v996 = vunpack.c.l.b16 %v955
      %v997 = vunpack.c.l.b16 %v956
      %v998 = vunpack.c.l.b16 %v957
      %v999 = vunpack.c.l.b16 %v958
      %v1000 = vunpack.c.l.b16 %v959
      %v1001 = vunpack.c.l.b16 %v960
      %v1002 = vunpack.c.l.b16 %v961
      %v1003 = vunpack.c.l.b16 %v962
      %v1004 = vunpack.c.l.b16 %v963
      %v1005 = vunpack.c.l.b16 %v964
      %v1006 = vunpack.c.l.b16 %v965
      %v1007 = vpack.c.b16 %v991, %v990
      %v1008 = vpack.c.b16 %v993, %v992
      %v1009 = vpack.c.b16 %v995, %v994
      %v1010 = vpack.c.b16 %v997, %v996
      %v1011 = vpack.c.b16 %v999, %v998
      %v1012 = vpack.c.b16 %v1001, %v1000
      %v1013 = vpack.c.b16 %v1003, %v1002
      %v1014 = vpack.c.b16 %v1005, %v1004
      %v1015 = vpack.c.b16 %v1006, %v1006
      %v1025 = vsel %vm716, %v946, 0
      %v1028 = vsel %vm716, %v948, 0
      %v1031 = vsel %vm857, %v1015, 0
      %1033 = vmatprep.subr.bf16.mxu0 0
      %1034 = vmatpush1.bf16.msra.mxu0 %v1007
      %1035 = vmatprep.subr.bf16.mxu0 0
      %1036 = vmatpush1.bf16.msra.mxu0 %v1008
      %1037 = vmatprep.subr.bf16.mxu0 0
      %1038 = vmatpush1.bf16.msra.mxu0 %v1009
      %1039 = vmatprep.subr.bf16.mxu0 0
      %1040 = vmatpush1.bf16.msra.mxu0 %v1010
      %1041 = vmatprep.subr.bf16.mxu0 0
      %1042 = vmatpush1.bf16.msra.mxu0 %v1011
      %1043 = vmatprep.subr.bf16.mxu0 0
      %1044 = vmatpush1.bf16.msra.mxu0 %v1012
      %1045 = vmatprep.subr.bf16.mxu0 0
      %1046 = vmatpush1.bf16.msra.mxu0 %v1013
      %1047 = vmatprep.subr.bf16.mxu0 0
      %1048 = vmatpush1.bf16.msra.mxu0 %v1014
      %1049 = vmatprep.subr.bf16.mxu0 0
      %1050 = vmatpush1.bf16.msra.mxu0 %v1031
      %1051 = vmatprep.subr.bf16.mxu0 0
      %1052 = vmatpush1.bf16.msra.mxu0 0
      %1053 = vmatprep.subr.bf16.mxu0 0
      %1054 = vmatpush1.bf16.msra.mxu0 0
      %1055 = vmatprep.subr.bf16.mxu0 0
      %1056 = vmatpush1.bf16.msra.mxu0 0
      %1057 = vmatprep.subr.bf16.mxu0 0
      %1058 = vmatpush1.bf16.msra.mxu0 0
      %1059 = vmatprep.subr.bf16.mxu0 0
      %1060 = vmatpush1.bf16.msra.mxu0 0
      %1061 = vmatprep.subr.bf16.mxu0 0
      %1062 = vmatpush1.bf16.msra.mxu0 0
      %1063 = vmatprep.subr.bf16.mxu0 0
      %1064 = vmatpush1.bf16.msra.mxu0 0
      %1065 = vmatprep.mubr.bf16.mxu0 %v1025
      %1066 = vmatmul.mubr.bf16.gmra.mrb[0].mxu0 %v945
      %v1067 = vpop.f32.mrb[0].mxu0
      %v1068 = vadd.f32 %v971, %v1067
      %v1069 = vpop.f32.mrb[0].mxu0
      %v1070 = vpop.f32.mrb[0].mxu0
      %v1071 = vadd.f32 %v971, %v1070
      %v1072 = vpop.f32.mrb[0].mxu0
      %1073 = vmatprep.mubr.bf16.mxu0 %v1028
      %1074 = vmatmul.mubr.bf16.gmra.mrb[0].mxu0 %v947
      %v1075 = vpop.f32.mrb[0].mxu0
      %v1076 = vadd.f32 %v971, %v1075
      %v1077 = vpop.f32.mrb[0].mxu0
      %v1078 = vpop.f32.mrb[0].mxu0
      %v1079 = vadd.f32 %v971, %v1078
      %v1080 = vpop.f32.mrb[0].mxu0
      %1081 = vdwg.mxu0
      %v1082 = vmax.f32 %v1068, 0.0
      %v1083 = vmax.f32 %v1071, 0.0
      %v1084 = vmax.f32 %v1076, 0.0
      %v1085 = vmax.f32 %v1079, 0.0
      %v1086 = vpack.c.bf16 %v1083, %v1082
      %v1087 = vpack.c.bf16 %v1085, %v1084
      %v1088 = vld [vmem:[%s526] sm:$0xf]
      %v1089 = vld [vmem:[%s526 + $0x4] sm:$0xf]
      %v1090 = vld [vmem:[%s526 + $0x8] sm:$0xf]
      %v1091 = vld [vmem:[%s526 + $0xc] sm:$0xf]
      %v1092 = vld [vmem:[%s526 + $0x10] sm:$0xf]
      %v1093 = vld [vmem:[%s526 + $0x14] sm:$0xf]
      %v1094 = vld [vmem:[%s526 + $0x18] sm:$0xf]
      %v1095 = vld [vmem:[%s526 + $0x1c] sm:$0xf]
      %v1096 = vld [vmem:[%s526 + $0x20] sm:$0x1]
      %v1097 = vld [vmem:[%s529] sm:$0x1]
      %v1099 = vlaneseq
      %v1100 = vshrl.u32 %v1099, 7
      %v1101 = vsub.s32 0, %v1100
      %v1102 = vrot.slane %v1097, %v1101
      %v1113 = vunpack.c.l.b16 %v1088
      %v1114 = vunpack.c.l.b16 %v1089
      %v1115 = vunpack.c.l.b16 %v1090
      %v1116 = vunpack.c.l.b16 %v1091
      %v1117 = vunpack.c.l.b16 %v1092
      %v1118 = vunpack.c.l.b16 %v1093
      %v1119 = vunpack.c.l.b16 %v1094
      %v1120 = vunpack.c.l.b16 %v1095
      %v1121 = vunpack.c.l.b16 %v1096
      %v1122 = vpack.c.b16 %v1114, %v1113
      %v1123 = vpack.c.b16 %v1116, %v1115
      %v1124 = vpack.c.b16 %v1118, %v1117
      %v1125 = vpack.c.b16 %v1120, %v1119
      %v1126 = vpack.c.b16 %v1121, %v1121
      %vm1131 = vcmask 531456
      %v1133 = vsel %vm1131, %v1086, 0
      %v1136 = vsel %vm1131, %v1087, 0
      %v1138 = vsel 0, 4294967295, 65535
      %v1139 = vsel %vm857, %v1138, 0
      %v1141 = vand.u32 %v1126, %v1139
      %1143 = vmatprep.subr.bf16.mxu0 0
      %1144 = vmatpush1.bf16.msra.mxu0 %v1122
      %1145 = vmatprep.subr.bf16.mxu0 0
      %1146 = vmatpush1.bf16.msra.mxu0 %v1123
      %1147 = vmatprep.subr.bf16.mxu0 0
      %1148 = vmatpush1.bf16.msra.mxu0 %v1124
      %1149 = vmatprep.subr.bf16.mxu0 0
      %1150 = vmatpush1.bf16.msra.mxu0 %v1125
      %1151 = vmatprep.subr.bf16.mxu0 0
      %1152 = vmatpush1.bf16.msra.mxu0 %v1141
      %1153 = vmatprep.subr.bf16.mxu0 0
      %1154 = vmatpush1.bf16.msra.mxu0 0
      %1155 = vmatprep.subr.bf16.mxu0 0
      %1156 = vmatpush1.bf16.msra.mxu0 0
      %1157 = vmatprep.subr.bf16.mxu0 0
      %1158 = vmatpush1.bf16.msra.mxu0 0
      %1159 = vmatprep.subr.bf16.mxu0 0
      %1160 = vmatpush1.bf16.msra.mxu0 0
      %1161 = vmatprep.subr.bf16.mxu0 0
      %1162 = vmatpush1.bf16.msra.mxu0 0
      %1163 = vmatprep.subr.bf16.mxu0 0
      %1164 = vmatpush1.bf16.msra.mxu0 0
      %1165 = vmatprep.subr.bf16.mxu0 0
      %1166 = vmatpush1.bf16.msra.mxu0 0
      %1167 = vmatprep.subr.bf16.mxu0 0
      %1168 = vmatpush1.bf16.msra.mxu0 0
      %1169 = vmatprep.subr.bf16.mxu0 0
      %1170 = vmatpush1.bf16.msra.mxu0 0
      %1171 = vmatprep.subr.bf16.mxu0 0
      %1172 = vmatpush1.bf16.msra.mxu0 0
      %1173 = vmatprep.subr.bf16.mxu0 0
      %1174 = vmatpush1.bf16.msra.mxu0 0
      %1175 = vmatprep.mubr.bf16.mxu0 0
      %1176 = vmatmul.mubr.bf16.gmra.mrb[0].mxu0 %v1133
      %v1177 = vpop.f32.mrb[0].mxu0
      %v1178 = vadd.f32 %v1102, %v1177
      %v1179 = vpop.f32.mrb[0].mxu0
      %v1180 = vpop.f32.mrb[0].mxu0
      %v1181 = vadd.f32 %v1102, %v1180
      %v1182 = vpop.f32.mrb[0].mxu0
      %1183 = vmatprep.mubr.bf16.mxu0 0
      %1184 = vmatmul.mubr.bf16.gmra.mrb[0].mxu0 %v1136
      %v1185 = vpop.f32.mrb[0].mxu0
      %v1186 = vadd.f32 %v1102, %v1185
      %v1187 = vpop.f32.mrb[0].mxu0
      %v1188 = vpop.f32.mrb[0].mxu0
      %v1189 = vadd.f32 %v1102, %v1188
      %v1190 = vpop.f32.mrb[0].mxu0
      %1191 = vdwg.mxu0
      %v1192 = vmax.f32 %v1178, 0.0
      %v1193 = vmax.f32 %v1181, 0.0
      %v1194 = vmax.f32 %v1186, 0.0
      %v1195 = vmax.f32 %v1189, 0.0
      %v1196 = vpack.c.bf16 %v1193, %v1192
      %v1197 = vpack.c.bf16 %v1195, %v1194
      %v1198 = vld [vmem:[%s534] sm:$0xf]
      %v1199 = vld [vmem:[%s534 + $0x4] sm:$0xf]
      %v1200 = vld [vmem:[%s534 + $0x8] sm:$0xf]
      %v1201 = vld [vmem:[%s534 + $0xc] sm:$0xf]
      %v1202 = vld [vmem:[%s537] sm:$0x1]
      %v1204 = vlaneseq
      %v1205 = vshrl.u32 %v1204, 7
      %v1206 = vsub.s32 0, %v1205
      %v1207 = vrot.slane %v1202, %v1206
      %v1213 = vunpack.c.l.b16 %v1198
      %v1214 = vunpack.c.l.b16 %v1199
      %v1215 = vunpack.c.l.b16 %v1200
      %v1216 = vunpack.c.l.b16 %v1201
      %v1217 = vpack.c.b16 %v1214, %v1213
      %v1218 = vpack.c.b16 %v1216, %v1215
      %vm1221 = vcmask 261120
      %v1223 = vsel %vm1221, %v1196, 0
      %v1226 = vsel %vm1221, %v1197, 0
      %1228 = vmatprep.subr.bf16.mxu0 0
      %1229 = vmatpush1.bf16.msra.mxu0 %v1217
      %1230 = vmatprep.subr.bf16.mxu0 0
      %1231 = vmatpush1.bf16.msra.mxu0 %v1218
      %1232 = vmatprep.subr.bf16.mxu0 0
      %1233 = vmatpush1.bf16.msra.mxu0 0
      %1234 = vmatprep.subr.bf16.mxu0 0
      %1235 = vmatpush1.bf16.msra.mxu0 0
      %1236 = vmatprep.subr.bf16.mxu0 0
      %1237 = vmatpush1.bf16.msra.mxu0 0
      %1238 = vmatprep.subr.bf16.mxu0 0
      %1239 = vmatpush1.bf16.msra.mxu0 0
      %1240 = vmatprep.subr.bf16.mxu0 0
      %1241 = vmatpush1.bf16.msra.mxu0 0
      %1242 = vmatprep.subr.bf16.mxu0 0
      %1243 = vmatpush1.bf16.msra.mxu0 0
      %1244 = vmatprep.subr.bf16.mxu0 0
      %1245 = vmatpush1.bf16.msra.mxu0 0
      %1246 = vmatprep.subr.bf16.mxu0 0
      %1247 = vmatpush1.bf16.msra.mxu0 0
      %1248 = vmatprep.subr.bf16.mxu0 0
      %1249 = vmatpush1.bf16.msra.mxu0 0
      %1250 = vmatprep.subr.bf16.mxu0 0
      %1251 = vmatpush1.bf16.msra.mxu0 0
      %1252 = vmatprep.subr.bf16.mxu0 0
      %1253 = vmatpush1.bf16.msra.mxu0 0
      %1254 = vmatprep.subr.bf16.mxu0 0
      %1255 = vmatpush1.bf16.msra.mxu0 0
      %1256 = vmatprep.subr.bf16.mxu0 0
      %1257 = vmatpush1.bf16.msra.mxu0 0
      %1258 = vmatprep.subr.bf16.mxu0 0
      %1259 = vmatpush1.bf16.msra.mxu0 0
      %1260 = vmatprep.mubr.bf16.mxu0 0
      %1261 = vmatmul.mubr.bf16.gmra.mrb[0].mxu0 %v1223
      %v1262 = vpop.f32.mrb[0].mxu0
      %v1263 = vadd.f32 %v1207, %v1262
      %v1264 = vpop.f32.mrb[0].mxu0
      %v1265 = vpop.f32.mrb[0].mxu0
      %v1266 = vadd.f32 %v1207, %v1265
      %v1267 = vpop.f32.mrb[0].mxu0
      %1268 = vmatprep.mubr.bf16.mxu0 0
      %1269 = vmatmul.mubr.bf16.gmra.mrb[0].mxu0 %v1226
      %v1270 = vpop.f32.mrb[0].mxu0
      %v1271 = vadd.f32 %v1207, %v1270
      %v1272 = vpop.f32.mrb[0].mxu0
      %v1273 = vpop.f32.mrb[0].mxu0
      %v1274 = vadd.f32 %v1207, %v1273
      %v1275 = vpop.f32.mrb[0].mxu0
      %1276 = vdwg.mxu0
      %v1277 = vtanh.pop %v1263
      %v1278 = vtanh.pop %v1266
      %v1279 = vtanh.pop %v1271
      %v1280 = vtanh.pop %v1274
      %vm1281 = vcmask 64512
      %1282 = vst.msk [vmem:[%s542] sm:$0xff] %vm1281, %v1277
      %1283 = vst.msk [vmem:[%s542 + $0x8] sm:$0xff] %vm1281, %v1278
      %1284 = vst.msk [vmem:[%s542 + $0x10] sm:$0xff] %vm1281, %v1279
      %1285 = vst.msk [vmem:[%s542 + $0x18] sm:$0xff] %vm1281, %v1280
      %p1286 = scmp.lt.s32.totalorder %s22, 1
      %s1287 = scalar_select %p1286, %s22, 1
      %s1288 = smul.addr %s1287, 4
      %s1289 = smul.addr %s1288, 8
      %s1290 = scalar_lea.vmem %s11, %s1289
      // Predicated region
      $region65: #{ae_pointnet_dcg_forward.4} parent=63 // pred_check
        %p1291 = pneg %p321
      $region66: #{ae_pointnet_dcg_forward.4} parent=63 // pred_check_branch
        %1293 = sbr.rel (%p1291) target = $region68
      $region67: #{ae_pointnet_dcg_forward.4} parent=63 // pred_region
        _
      $region68: #{ae_pointnet_dcg_forward.4} parent=63 // pred_fallthru
        _
    $region64: #{ae_pointnet_dcg_forward.4} parent=5 // pred_fallthru
      _
    %p1294 = scmp.le.s32.totalorder 2, %s17
    // Predicated region
    $region69: #{ae_pointnet_dcg_forward.4} parent=5 // pred_check
      %p1295 = pneg %p1294
    $region70: #{ae_pointnet_dcg_forward.4} parent=5 // pred_check_branch
      %1297 = sbr.rel (%p1295) target = $region72
    $region71: #{ae_pointnet_dcg_forward.4} parent=5 // pred_region
      %s1298 = ssub.s32 %s17, 2
      // Predicated region
      $region73: #{ae_pointnet_dcg_forward.4} parent=71 // pred_check
        %p1299 = pneg %p327
      $region74: #{ae_pointnet_dcg_forward.4} parent=71 // pred_check_branch
        %1301 = sbr.rel (%p1299) target = $region76
      $region75: #{ae_pointnet_dcg_forward.4} parent=71 // pred_region
        %p1302 = scmp.lt.s32.totalorder %s23, 1
        %s1303 = scalar_select %p1302, %s23, 1
        %s1304 = smul.addr %s1303, 4
        %s1305 = smul.addr %s1304, 8
        %s1306 = scalar_lea.vmem %s11, %s1305
      $region76: #{ae_pointnet_dcg_forward.4} parent=71 // pred_fallthru
        _
    $region72: #{ae_pointnet_dcg_forward.4} parent=5 // pred_fallthru
      _
  $region6: #{ae_pointnet_dcg_forward.4} parent=0 // loop_footer
    %s21 = sadd.s32 1, %s17
  $region7: #{ae_pointnet_dcg_forward.4} parent=0 // loop_footer_branch
    %16 = sbr.rel target = $region3
  $region8: #{ae_pointnet_dcg_forward.4} parent=0 // loop_exit
    _

// kernel: ae_pointnet_dcg_forward.3
$region0: #{ae_pointnet_dcg_forward.3}
  #allocation0 [shape = 'u32[]', space=smem, size = 0x4, offset = 0x4, fixed_abs, tag = 'smem constant byte address 0x4 - core index']
  #allocation1 [shape = 'u32[144,128]{1,0:T(1,128)}', space=vmem, size = 0x12000, scoped, tag = 'internal scratch']
  %s0 = inlined_call_operand.vmem [shape: f32[2,64,3], index: 0, kind: input, shape index: {}]
  %s1 = inlined_call_operand.vmem [shape: bf16[3,64], index: 1, kind: input, shape index: {}]
  %s2 = inlined_call_operand.vmem [shape: f32[1,64], index: 2, kind: input, shape index: {}]
  %s3 = inlined_call_operand.vmem [shape: bf16[64,128], index: 3, kind: input, shape index: {}]
  %s4 = inlined_call_operand.vmem [shape: f32[1,128], index: 4, kind: input, shape index: {}]
  %s5 = inlined_call_operand.hbm [shape: bf16[128,1024], index: 5, kind: input, shape index: {}]
  %s6 = inlined_call_operand.vmem [shape: f32[1,1024], index: 6, kind: input, shape index: {}]
  %s7 = inlined_call_operand.hbm [shape: bf16[1024,128], index: 7, kind: input, shape index: {}]
  %s8 = inlined_call_operand.vmem [shape: f32[1,128], index: 8, kind: input, shape index: {}]
  %s9 = inlined_call_operand.vmem [shape: f32[2,1,128], index: 9, kind: output, shape index: {}]
  %s10 = sld [smem:[#allocation0]]
  $region77: #{ae_pointnet_dcg_forward.3} parent=0
    _
  %s12 = ssub.s32 1, %s10
  %s13 = scalar_select 0, %s12, %s10
  $region1: #{ae_pointnet_dcg_forward.3} parent=0
    #allocation2 [shape = 'u8[262144]{0}', space=vmem, size = 0x40000, scoped, tag = 'input window, operand 5, single buffered']
    #allocation3 [shape = 's32[2]{0}', space=sflag, size = 0x8, scoped, tag = 'scoped memory for ae_pointnet_dcg_forward.3']
    #allocation4 [shape = 'u8[262144]{0}', space=vmem, size = 0x40000, scoped, tag = 'input window, operand 7, single buffered']
    #allocation5 [shape = 's32[1]{0}', space=sflag, size = 0x4, scoped, tag = 'scoped memory for ae_pointnet_dcg_forward.3']
    %14 = vsyncpa [#allocation3], 0
    %15 = vsyncpa [#allocation5], 0
    loop: start=0, step=1, limit=4
    $region2: #{ae_pointnet_dcg_forward.3} parent=1 // loop_pre_header
      _
    $region3: #{ae_pointnet_dcg_forward.3} parent=1 // loop_header
      %s17 = sphi 0, %s21
      %p18 = scmp.ge.s32.totalorder %s17, 4
      %s27 = sphi 0, %s29
      %s30 = sphi 0, %s27
      %s31 = sphi 0, %s30
      %s47 = sphi 0, %s31
      %s51 = sphi 0, %s51
      %s53 = sphi 0, %s51
      %s54 = sphi 0, %s53
      %s68 = sphi 0, %s54
      %s72 = sphi 0, %s72
      %s74 = sphi 0, %s72
      %s75 = sphi 0, %s74
      %s89 = sphi 0, %s75
      %s93 = sphi 0, %s93
      %s95 = sphi 0, %s93
      %s96 = sphi 0, %s95
      %s110 = sphi 0, %s96
      %s114 = sphi 0, %s114
      %s116 = sphi 0, %s114
      %s117 = sphi 0, %s116
      %s131 = sphi 0, %s117
      %s135 = sphi 0, %s135
      %s137 = sphi 0, %s135
      %s138 = sphi 0, %s137
      %s152 = sphi 0, %s138
      %s156 = sphi 0, %s156
      %s158 = sphi 0, %s156
      %s159 = sphi 0, %s158
      %s173 = sphi 0, %s159
      %s177 = sphi 0, %s177
      %s179 = sphi 0, %s177
      %s180 = sphi 0, %s179
      %s194 = sphi 0, %s180
      %s198 = sphi 0, %s198
      %s200 = sphi 0, %s198
      %s201 = sphi 0, %s200
      %s215 = sphi 0, %s201
      %s221 = sphi 0, %s223
      %s224 = sphi 0, %s221
      %s225 = sphi 0, %s224
      %s241 = sphi 0, %s225
    $region4: #{ae_pointnet_dcg_forward.3} parent=1 // loop_header_branch
      %20 = sbr.rel (%p18) target = $region8
    $region5: #{ae_pointnet_dcg_forward.3} parent=1 // loop_body
      %s22 = ssub.s32 %s17, 1
      %s23 = ssub.s32 %s17, 2
      %s24 = sadd.s32 %s17, 1
      %s25 = ssub.s32 %s17, %s24
      %p26 = scmp.eq.s32.totalorder %s25, 0
      %s28 = sadd.s32 %s27, 1
      %s29 = scalar_select %p26, %s27, %s28
      %p32 = pneg %p26
      %p33 = scmp.eq.s32.totalorder %s17, 1
      %p34 = por %p32, %p33
      %p35 = scmp.ne.s32.totalorder %s27, %s30
      %p36 = scmp.eq.s32.totalorder %s17, 0
      %p37 = por %p35, %p36
      %p38 = scmp.ne.s32.totalorder %s27, %s30
      %p39 = scmp.eq.s32.totalorder %s22, 1
      %p40 = por %p38, %p39
      %p41 = scmp.ne.s32.totalorder %s30, %s31
      %p42 = scmp.eq.s32.totalorder %s22, 0
      %p43 = por %p41, %p42
      %p44 = scmp.ne.s32.totalorder %s30, %s31
      %p45 = scmp.eq.s32.totalorder %s23, 1
      %p46 = por %p44, %p45
      %p48 = scmp.ne.s32.totalorder %s31, %s47
      %p49 = scmp.eq.s32.totalorder %s23, 0
      %p50 = por %p48, %p49
      %s52 = sadd.s32 %s51, 1
      %p55 = scmp.eq.s32.totalorder %s17, 1
      %p56 = scmp.ne.s32.totalorder %s51, %s53
      %p57 = scmp.eq.s32.totalorder %s17, 0
      %p58 = por %p56, %p57
      %p59 = scmp.ne.s32.totalorder %s51, %s53
      %p60 = scmp.eq.s32.totalorder %s22, 1
      %p61 = por %p59, %p60
      %p62 = scmp.ne.s32.totalorder %s53, %s54
      %p63 = scmp.eq.s32.totalorder %s22, 0
      %p64 = por %p62, %p63
      %p65 = scmp.ne.s32.totalorder %s53, %s54
      %p66 = scmp.eq.s32.totalorder %s23, 1
      %p67 = por %p65, %p66
      %p69 = scmp.ne.s32.totalorder %s54, %s68
      %p70 = scmp.eq.s32.totalorder %s23, 0
      %p71 = por %p69, %p70
      %s73 = sadd.s32 %s72, 1
      %p76 = scmp.eq.s32.totalorder %s17, 1
      %p77 = scmp.ne.s32.totalorder %s72, %s74
      %p78 = scmp.eq.s32.totalorder %s17, 0
      %p79 = por %p77, %p78
      %p80 = scmp.ne.s32.totalorder %s72, %s74
      %p81 = scmp.eq.s32.totalorder %s22, 1
      %p82 = por %p80, %p81
      %p83 = scmp.ne.s32.totalorder %s74, %s75
      %p84 = scmp.eq.s32.totalorder %s22, 0
      %p85 = por %p83, %p84
      %p86 = scmp.ne.s32.totalorder %s74, %s75
      %p87 = scmp.eq.s32.totalorder %s23, 1
      %p88 = por %p86, %p87
      %p90 = scmp.ne.s32.totalorder %s75, %s89
      %p91 = scmp.eq.s32.totalorder %s23, 0
      %p92 = por %p90, %p91
      %s94 = sadd.s32 %s93, 1
      %p97 = scmp.eq.s32.totalorder %s17, 1
      %p98 = scmp.ne.s32.totalorder %s93, %s95
      %p99 = scmp.eq.s32.totalorder %s17, 0
      %p100 = por %p98, %p99
      %p101 = scmp.ne.s32.totalorder %s93, %s95
      %p102 = scmp.eq.s32.totalorder %s22, 1
      %p103 = por %p101, %p102
      %p104 = scmp.ne.s32.totalorder %s95, %s96
      %p105 = scmp.eq.s32.totalorder %s22, 0
      %p106 = por %p104, %p105
      %p107 = scmp.ne.s32.totalorder %s95, %s96
      %p108 = scmp.eq.s32.totalorder %s23, 1
      %p109 = por %p107, %p108
      %p111 = scmp.ne.s32.totalorder %s96, %s110
      %p112 = scmp.eq.s32.totalorder %s23, 0
      %p113 = por %p111, %p112
      %s115 = sadd.s32 %s114, 1
      %p118 = scmp.eq.s32.totalorder %s17, 1
      %p119 = scmp.ne.s32.totalorder %s114, %s116
      %p120 = scmp.eq.s32.totalorder %s17, 0
      %p121 = por %p119, %p120
      %p122 = scmp.ne.s32.totalorder %s114, %s116
      %p123 = scmp.eq.s32.totalorder %s22, 1
      %p124 = por %p122, %p123
      %p125 = scmp.ne.s32.totalorder %s116, %s117
      %p126 = scmp.eq.s32.totalorder %s22, 0
      %p127 = por %p125, %p126
      %p128 = scmp.ne.s32.totalorder %s116, %s117
      %p129 = scmp.eq.s32.totalorder %s23, 1
      %p130 = por %p128, %p129
      %p132 = scmp.ne.s32.totalorder %s117, %s131
      %p133 = scmp.eq.s32.totalorder %s23, 0
      %p134 = por %p132, %p133
      %s136 = sadd.s32 %s135, 1
      %p139 = scmp.eq.s32.totalorder %s17, 1
      %p140 = scmp.ne.s32.totalorder %s135, %s137
      %p141 = scmp.eq.s32.totalorder %s17, 0
      %p142 = por %p140, %p141
      %p143 = scmp.ne.s32.totalorder %s135, %s137
      %p144 = scmp.eq.s32.totalorder %s22, 1
      %p145 = por %p143, %p144
      %p146 = scmp.ne.s32.totalorder %s137, %s138
      %p147 = scmp.eq.s32.totalorder %s22, 0
      %p148 = por %p146, %p147
      %p149 = scmp.ne.s32.totalorder %s137, %s138
      %p150 = scmp.eq.s32.totalorder %s23, 1
      %p151 = por %p149, %p150
      %p153 = scmp.ne.s32.totalorder %s138, %s152
      %p154 = scmp.eq.s32.totalorder %s23, 0
      %p155 = por %p153, %p154
      %s157 = sadd.s32 %s156, 1
      %p160 = scmp.eq.s32.totalorder %s17, 1
      %p161 = scmp.ne.s32.totalorder %s156, %s158
      %p162 = scmp.eq.s32.totalorder %s17, 0
      %p163 = por %p161, %p162
      %p164 = scmp.ne.s32.totalorder %s156, %s158
      %p165 = scmp.eq.s32.totalorder %s22, 1
      %p166 = por %p164, %p165
      %p167 = scmp.ne.s32.totalorder %s158, %s159
      %p168 = scmp.eq.s32.totalorder %s22, 0
      %p169 = por %p167, %p168
      %p170 = scmp.ne.s32.totalorder %s158, %s159
      %p171 = scmp.eq.s32.totalorder %s23, 1
      %p172 = por %p170, %p171
      %p174 = scmp.ne.s32.totalorder %s159, %s173
      %p175 = scmp.eq.s32.totalorder %s23, 0
      %p176 = por %p174, %p175
      %s178 = sadd.s32 %s177, 1
      %p181 = scmp.eq.s32.totalorder %s17, 1
      %p182 = scmp.ne.s32.totalorder %s177, %s179
      %p183 = scmp.eq.s32.totalorder %s17, 0
      %p184 = por %p182, %p183
      %p185 = scmp.ne.s32.totalorder %s177, %s179
      %p186 = scmp.eq.s32.totalorder %s22, 1
      %p187 = por %p185, %p186
      %p188 = scmp.ne.s32.totalorder %s179, %s180
      %p189 = scmp.eq.s32.totalorder %s22, 0
      %p190 = por %p188, %p189
      %p191 = scmp.ne.s32.totalorder %s179, %s180
      %p192 = scmp.eq.s32.totalorder %s23, 1
      %p193 = por %p191, %p192
      %p195 = scmp.ne.s32.totalorder %s180, %s194
      %p196 = scmp.eq.s32.totalorder %s23, 0
      %p197 = por %p195, %p196
      %s199 = sadd.s32 %s198, 1
      %p202 = scmp.eq.s32.totalorder %s17, 1
      %p203 = scmp.ne.s32.totalorder %s198, %s200
      %p204 = scmp.eq.s32.totalorder %s17, 0
      %p205 = por %p203, %p204
      %p206 = scmp.ne.s32.totalorder %s198, %s200
      %p207 = scmp.eq.s32.totalorder %s22, 1
      %p208 = por %p206, %p207
      %p209 = scmp.ne.s32.totalorder %s200, %s201
      %p210 = scmp.eq.s32.totalorder %s22, 0
      %p211 = por %p209, %p210
      %p212 = scmp.ne.s32.totalorder %s200, %s201
      %p213 = scmp.eq.s32.totalorder %s23, 1
      %p214 = por %p212, %p213
      %p216 = scmp.ne.s32.totalorder %s201, %s215
      %p217 = scmp.eq.s32.totalorder %s23, 0
      %p218 = por %p216, %p217
      %s219 = ssub.s32 %s17, %s24
      %p220 = scmp.eq.s32.totalorder %s219, 0
      %s222 = sadd.s32 %s221, 1
      %s223 = scalar_select %p220, %s221, %s222
      %p226 = pneg %p220
      %p227 = scmp.eq.s32.totalorder %s17, 1
      %p228 = por %p226, %p227
      %p229 = scmp.ne.s32.totalorder %s221, %s224
      %p230 = scmp.eq.s32.totalorder %s17, 0
      %p231 = por %p229, %p230
      %p232 = scmp.ne.s32.totalorder %s221, %s224
      %p233 = scmp.eq.s32.totalorder %s22, 1
      %p234 = por %p232, %p233
      %p235 = scmp.ne.s32.totalorder %s224, %s225
      %p236 = scmp.eq.s32.totalorder %s22, 0
      %p237 = por %p235, %p236
      %p238 = scmp.ne.s32.totalorder %s224, %s225
      %p239 = scmp.eq.s32.totalorder %s23, 1
      %p240 = por %p238, %p239
      %p242 = scmp.ne.s32.totalorder %s225, %s241
      %p243 = scmp.eq.s32.totalorder %s23, 0
      %p244 = por %p242, %p243
      %p245 = scmp.le.s32.totalorder 1, %s17
      %p246 = scmp.lt.s32.totalorder %s17, 3
      %p247 = pnand %p245, %p246
      %p248 = pneg %p247
      // Predicated region
      $region9: #{ae_pointnet_dcg_forward.3} parent=5 // pred_check
        _
      $region10: #{ae_pointnet_dcg_forward.3} parent=5 // pred_check_branch
        %250 = sbr.rel (%p247) target = $region12
      $region11: #{ae_pointnet_dcg_forward.3} parent=5 // pred_region
        %s251 = ssub.s32 %s17, 1
        // Predicated region
        $region13: #{ae_pointnet_dcg_forward.3} parent=11 // pred_check
          %p252 = pneg %p64
        $region14: #{ae_pointnet_dcg_forward.3} parent=11 // pred_check_branch
          %254 = sbr.rel (%p252) target = $region16
        $region15: #{ae_pointnet_dcg_forward.3} parent=11 // pred_region
          _
        $region16: #{ae_pointnet_dcg_forward.3} parent=11 // pred_fallthru
          _
        // Predicated region
        $region17: #{ae_pointnet_dcg_forward.3} parent=11 // pred_check
          %p255 = pneg %p85
        $region18: #{ae_pointnet_dcg_forward.3} parent=11 // pred_check_branch
          %257 = sbr.rel (%p255) target = $region20
        $region19: #{ae_pointnet_dcg_forward.3} parent=11 // pred_region
          _
        $region20: #{ae_pointnet_dcg_forward.3} parent=11 // pred_fallthru
          _
        // Predicated region
        $region21: #{ae_pointnet_dcg_forward.3} parent=11 // pred_check
          %p258 = pneg %p106
        $region22: #{ae_pointnet_dcg_forward.3} parent=11 // pred_check_branch
          %260 = sbr.rel (%p258) target = $region24
        $region23: #{ae_pointnet_dcg_forward.3} parent=11 // pred_region
          _
        $region24: #{ae_pointnet_dcg_forward.3} parent=11 // pred_fallthru
          _
        // Predicated region
        $region25: #{ae_pointnet_dcg_forward.3} parent=11 // pred_check
          %p261 = pneg %p127
        $region26: #{ae_pointnet_dcg_forward.3} parent=11 // pred_check_branch
          %263 = sbr.rel (%p261) target = $region28
        $region27: #{ae_pointnet_dcg_forward.3} parent=11 // pred_region
          _
        $region28: #{ae_pointnet_dcg_forward.3} parent=11 // pred_fallthru
          _
        // Predicated region
        $region29: #{ae_pointnet_dcg_forward.3} parent=11 // pred_check
          %p264 = pneg %p148
        $region30: #{ae_pointnet_dcg_forward.3} parent=11 // pred_check_branch
          %266 = sbr.rel (%p264) target = $region32
        $region31: #{ae_pointnet_dcg_forward.3} parent=11 // pred_region
          %s268 = ssub.s32 8192, 8192
          %269 = vsyncadd [#allocation3], %s268
          %s270 = sshll.u32 [#allocation2], 4
          %s271 = int_to_ptr.vmem [resolvable:$true] %s270
          %276 = dma.hbm_to_vmem [thread:$0]  %s5, 8192, %s271, [#allocation3], 512, 512, 32
        $region32: #{ae_pointnet_dcg_forward.3} parent=11 // pred_fallthru
          _
        // Predicated region
        $region33: #{ae_pointnet_dcg_forward.3} parent=11 // pred_check
          %p277 = pneg %p169
        $region34: #{ae_pointnet_dcg_forward.3} parent=11 // pred_check_branch
          %279 = sbr.rel (%p277) target = $region36
        $region35: #{ae_pointnet_dcg_forward.3} parent=11 // pred_region
          _
        $region36: #{ae_pointnet_dcg_forward.3} parent=11 // pred_fallthru
          _
        // Predicated region
        $region37: #{ae_pointnet_dcg_forward.3} parent=11 // pred_check
          %p280 = pneg %p190
        $region38: #{ae_pointnet_dcg_forward.3} parent=11 // pred_check_branch
          %282 = sbr.rel (%p280) target = $region40
        $region39: #{ae_pointnet_dcg_forward.3} parent=11 // pred_region
          %s284 = ssub.s32 8192, 8192
          %285 = vsyncadd [#allocation5], %s284
          %s286 = sshll.u32 [#allocation4], 4
          %s287 = int_to_ptr.vmem [resolvable:$true] %s286
          %292 = dma.hbm_to_vmem [thread:$0]  %s7, 8192, %s287, [#allocation5], 64, 64, 4
        $region40: #{ae_pointnet_dcg_forward.3} parent=11 // pred_fallthru
          _
        // Predicated region
        $region41: #{ae_pointnet_dcg_forward.3} parent=11 // pred_check
          %p293 = pneg %p211
        $region42: #{ae_pointnet_dcg_forward.3} parent=11 // pred_check_branch
          %295 = sbr.rel (%p293) target = $region44
        $region43: #{ae_pointnet_dcg_forward.3} parent=11 // pred_region
          _
        $region44: #{ae_pointnet_dcg_forward.3} parent=11 // pred_fallthru
          _
      $region12: #{ae_pointnet_dcg_forward.3} parent=5 // pred_fallthru
        _
      %p296 = scmp.lt.s32.totalorder %s17, 2
      // Predicated region
      $region45: #{ae_pointnet_dcg_forward.3} parent=5 // pred_check
        %p297 = pneg %p296
      $region46: #{ae_pointnet_dcg_forward.3} parent=5 // pred_check_branch
        %299 = sbr.rel (%p297) target = $region48
      $region47: #{ae_pointnet_dcg_forward.3} parent=5 // pred_region
        // Predicated region
        $region49: #{ae_pointnet_dcg_forward.3} parent=47 // pred_check
          %p300 = pneg %p37
        $region50: #{ae_pointnet_dcg_forward.3} parent=47 // pred_check_branch
          %302 = sbr.rel (%p300) target = $region52
        $region51: #{ae_pointnet_dcg_forward.3} parent=47 // pred_region
          %p303 = scmp.lt.s32.totalorder %s17, 1
          %s304 = scalar_select %p303, %s17, 1
          %s305 = smul.addr %s304, 8
          %s306 = smul.addr %s305, 8
          %s307 = scalar_lea.vmem %s0, %s306
        $region52: #{ae_pointnet_dcg_forward.3} parent=47 // pred_fallthru
          _
      $region48: #{ae_pointnet_dcg_forward.3} parent=5 // pred_fallthru
        _
      %p308 = scmp.le.s32.totalorder 1, %s17
      %p309 = scmp.lt.s32.totalorder %s17, 3
      %p310 = pnand %p308, %p309
      %p311 = pneg %p310
      // Predicated region
      $region53: #{ae_pointnet_dcg_forward.3} parent=5 // pred_check
        _
      $region54: #{ae_pointnet_dcg_forward.3} parent=5 // pred_check_branch
        %313 = sbr.rel (%p310) target = $region56
      $region55: #{ae_pointnet_dcg_forward.3} parent=5 // pred_region
        %s314 = ssub.s32 %s17, 1
        // Predicated region
        $region57: #{ae_pointnet_dcg_forward.3} parent=55 // pred_check
          %p315 = pneg %p148
        $region58: #{ae_pointnet_dcg_forward.3} parent=55 // pred_check_branch
          %317 = sbr.rel (%p315) target = $region60
        $region59: #{ae_pointnet_dcg_forward.3} parent=55 // pred_region
          %318 = dma.done [#allocation3], 8192
        $region60: #{ae_pointnet_dcg_forward.3} parent=55 // pred_fallthru
          _
        // Predicated region
        $region61: #{ae_pointnet_dcg_forward.3} parent=55 // pred_check
          %p319 = pneg %p190
        $region62: #{ae_pointnet_dcg_forward.3} parent=55 // pred_check_branch
          %321 = sbr.rel (%p319) target = $region64
        $region63: #{ae_pointnet_dcg_forward.3} parent=55 // pred_region
          %322 = dma.done [#allocation5], 8192
        $region64: #{ae_pointnet_dcg_forward.3} parent=55 // pred_fallthru
          _
        %p323 = scmp.lt.s32.totalorder %s22, 1
        %s324 = scalar_select %p323, %s22, 1
        %s325 = smul.addr %s324, 8
        %s326 = smul.addr %s325, 8
        %s327 = scalar_lea.vmem %s0, %s326
        %p328 = pneg %p43
        %p329 = pneg %p40
        %p330 = pneg %p64
        %p331 = pneg %p61
        %p332 = pneg %p85
        %p333 = pneg %p82
        %p334 = pneg %p106
        %p335 = pneg %p103
        %p336 = pneg %p127
        %p337 = pneg %p124
        %p338 = pneg %p148
        %p339 = pneg %p145
        %p340 = pneg %p169
        %p341 = pneg %p166
        %p342 = pneg %p190
        %p343 = pneg %p187
        %p344 = pneg %p211
        %p345 = pneg %p208
        %p346 = pneg %p237
        %p347 = pneg %p234
        %p348 = scmp.lt.s32.totalorder %s22, 1
        %s349 = scalar_select %p348, %s22, 1
        %s350 = scalar_lea.vmem %s9, %s349
        %p351 = scmp.lt.s32.totalorder %s22, 1
        %s352 = scalar_select %p351, %s22, 1
        %s353 = smul.addr %s352, 8
        %s354 = smul.addr %s353, 8
        %s355 = scalar_lea.vmem %s0, %s354
        %p356 = scmp.lt.s32.totalorder %s22, 1
        %s357 = scalar_select %p356, %s22, 1
        %s358 = scalar_lea.vmem %s9, %s357
        %v360 = vld [vmem:[%s355] sm:$0xff]
        %v361 = vld [vmem:[%s355 + $0x8] sm:$0xff]
        %v362 = vld [vmem:[%s355 + $0x10] sm:$0xff]
        %v363 = vld [vmem:[%s355 + $0x18] sm:$0xff]
        %v364 = vld [vmem:[%s355 + $0x20] sm:$0xff]
        %v365 = vld [vmem:[%s355 + $0x28] sm:$0xff]
        %v366 = vld [vmem:[%s355 + $0x30] sm:$0xff]
        %v367 = vld [vmem:[%s355 + $0x38] sm:$0xff]
        %v368 = vpack.c.bf16 %v361, %v360
        %v369 = vpack.c.bf16 %v363, %v362
        %v370 = vpack.c.bf16 %v365, %v364
        %v371 = vpack.c.bf16 %v367, %v366
        %v372 = vld [vmem:[%s1] sm:$0x3]
        %v373 = vld [vmem:[%s2] sm:$0x1]
        %v375 = vlaneseq
        %v376 = vshrl.u32 %v375, 7
        %v377 = vsub.s32 0, %v376
        %v378 = vrot.slane %v373, %v377
        %vm380 = vcmask 23552
        %v382 = vsel %vm380, %v368, 0
        %v385 = vsel %vm380, %v369, 0
        %v388 = vsel %vm380, %v370, 0
        %v391 = vsel %vm380, %v371, 0
        %vm393 = vcmask 1040384
        %vm394 = vcmask 1041408
        %v395 = vsel %vm393, 4294967295, 65535
        %v396 = vsel %vm394, %v395, 0
        %v398 = vand.u32 %v372, %v396
        %400 = vmatprep.subr.bf16.mxu0 0
        %401 = vmatpush1.bf16.msra.mxu0 %v398
        %402 = vmatprep.subr.bf16.mxu0 0
        %403 = vmatpush1.bf16.msra.mxu0 0
        %404 = vmatprep.subr.bf16.mxu0 0
        %405 = vmatpush1.bf16.msra.mxu0 0
        %406 = vmatprep.subr.bf16.mxu0 0
        %407 = vmatpush1.bf16.msra.mxu0 0
        %408 = vmatprep.subr.bf16.mxu0 0
        %409 = vmatpush1.bf16.msra.mxu0 0
        %410 = vmatprep.subr.bf16.mxu0 0
        %411 = vmatpush1.bf16.msra.mxu0 0
        %412 = vmatprep.subr.bf16.mxu0 0
        %413 = vmatpush1.bf16.msra.mxu0 0
        %414 = vmatprep.subr.bf16.mxu0 0
        %415 = vmatpush1.bf16.msra.mxu0 0
        %416 = vmatprep.subr.bf16.mxu0 0
        %417 = vmatpush1.bf16.msra.mxu0 0
        %418 = vmatprep.subr.bf16.mxu0 0
        %419 = vmatpush1.bf16.msra.mxu0 0
        %420 = vmatprep.subr.bf16.mxu0 0
        %421 = vmatpush1.bf16.msra.mxu0 0
        %422 = vmatprep.subr.bf16.mxu0 0
        %423 = vmatpush1.bf16.msra.mxu0 0
        %424 = vmatprep.subr.bf16.mxu0 0
        %425 = vmatpush1.bf16.msra.mxu0 0
        %426 = vmatprep.subr.bf16.mxu0 0
        %427 = vmatpush1.bf16.msra.mxu0 0
        %428 = vmatprep.subr.bf16.mxu0 0
        %429 = vmatpush1.bf16.msra.mxu0 0
        %430 = vmatprep.subr.bf16.mxu0 0
        %431 = vmatpush1.bf16.msra.mxu0 0
        %432 = vmatprep.mubr.bf16.mxu0 0
        %433 = vmatmul.mubr.bf16.gmra.mrb[0].mxu0 %v382
        %v434 = vpop.f32.mrb[0].mxu0
        %v435 = vadd.f32 %v378, %v434
        %v436 = vpop.f32.mrb[0].mxu0
        %v437 = vpop.f32.mrb[0].mxu0
        %v438 = vadd.f32 %v378, %v437
        %v439 = vpop.f32.mrb[0].mxu0
        %440 = vmatprep.mubr.bf16.mxu0 0
        %441 = vmatmul.mubr.bf16.gmra.mrb[0].mxu0 %v385
        %v442 = vpop.f32.mrb[0].mxu0
        %v443 = vadd.f32 %v378, %v442
        %v444 = vpop.f32.mrb[0].mxu0
        %v445 = vpop.f32.mrb[0].mxu0
        %v446 = vadd.f32 %v378, %v445
        %v447 = vpop.f32.mrb[0].mxu0
        %448 = vmatprep.mubr.bf16.mxu0 0
        %449 = vmatmul.mubr.bf16.gmra.mrb[0].mxu0 %v388
        %v450 = vpop.f32.mrb[0].mxu0
        %v451 = vadd.f32 %v378, %v450
        %v452 = vpop.f32.mrb[0].mxu0
        %v453 = vpop.f32.mrb[0].mxu0
        %v454 = vadd.f32 %v378, %v453
        %v455 = vpop.f32.mrb[0].mxu0
        %456 = vmatprep.mubr.bf16.mxu0 0
        %457 = vmatmul.mubr.bf16.gmra.mrb[0].mxu0 %v391
        %v458 = vpop.f32.mrb[0].mxu0
        %v459 = vadd.f32 %v378, %v458
        %v460 = vpop.f32.mrb[0].mxu0
        %v461 = vpop.f32.mrb[0].mxu0
        %v462 = vadd.f32 %v378, %v461
        %v463 = vpop.f32.mrb[0].mxu0
        %464 = vdwg.mxu0
        %v465 = vmax.f32 %v435, 0.0
        %v466 = vmax.f32 %v438, 0.0
        %v467 = vmax.f32 %v443, 0.0
        %v468 = vmax.f32 %v446, 0.0
        %v469 = vmax.f32 %v451, 0.0
        %v470 = vmax.f32 %v454, 0.0
        %v471 = vmax.f32 %v459, 0.0
        %v472 = vmax.f32 %v462, 0.0
        %v473 = vpack.c.bf16 %v466, %v465
        %v474 = vpack.c.bf16 %v468, %v467
        %v475 = vpack.c.bf16 %v470, %v469
        %v476 = vpack.c.bf16 %v472, %v471
        %v477 = vld [vmem:[%s3] sm:$0xf]
        %v478 = vld [vmem:[%s3 + $0x4] sm:$0xf]
        %v479 = vld [vmem:[%s3 + $0x8] sm:$0xf]
        %v480 = vld [vmem:[%s3 + $0xc] sm:$0xf]
        %v481 = vld [vmem:[%s3 + $0x10] sm:$0xf]
        %v482 = vld [vmem:[%s3 + $0x14] sm:$0xf]
        %v483 = vld [vmem:[%s3 + $0x18] sm:$0xf]
        %v484 = vld [vmem:[%s3 + $0x1c] sm:$0xf]
        %v485 = vld [vmem:[%s4] sm:$0x1]
        %v487 = vlaneseq
        %v488 = vshrl.u32 %v487, 7
        %v489 = vsub.s32 0, %v488
        %v490 = vrot.slane %v485, %v489
        %v500 = vunpack.c.l.b16 %v477
        %v501 = vunpack.c.l.b16 %v478
        %v502 = vunpack.c.l.b16 %v479
        %v503 = vunpack.c.l.b16 %v480
        %v504 = vunpack.c.l.b16 %v481
        %v505 = vunpack.c.l.b16 %v482
        %v506 = vunpack.c.l.b16 %v483
        %v507 = vunpack.c.l.b16 %v484
        %v508 = vpack.c.b16 %v501, %v500
        %v509 = vpack.c.b16 %v503, %v502
        %v510 = vpack.c.b16 %v505, %v504
        %v511 = vpack.c.b16 %v507, %v506
        %vm516 = vcmask 523264
        %v518 = vsel %vm516, %v473, 0
        %v521 = vsel %vm516, %v474, 0
        %v524 = vsel %vm516, %v475, 0
        %v527 = vsel %vm516, %v476, 0
        %529 = vmatprep.subr.bf16.mxu0 0
        %530 = vmatpush1.bf16.msra.mxu0 %v508
        %531 = vmatprep.subr.bf16.mxu0 0
        %532 = vmatpush1.bf16.msra.mxu0 %v509
        %533 = vmatprep.subr.bf16.mxu0 0
        %534 = vmatpush1.bf16.msra.mxu0 %v510
        %535 = vmatprep.subr.bf16.mxu0 0
        %536 = vmatpush1.bf16.msra.mxu0 %v511
        %537 = vmatprep.subr.bf16.mxu0 0
        %538 = vmatpush1.bf16.msra.mxu0 0
        %539 = vmatprep.subr.bf16.mxu0 0
        %540 = vmatpush1.bf16.msra.mxu0 0
        %541 = vmatprep.subr.bf16.mxu0 0
        %542 = vmatpush1.bf16.msra.mxu0 0
        %543 = vmatprep.subr.bf16.mxu0 0
        %544 = vmatpush1.bf16.msra.mxu0 0
        %545 = vmatprep.subr.bf16.mxu0 0
        %546 = vmatpush1.bf16.msra.mxu0 0
        %547 = vmatprep.subr.bf16.mxu0 0
        %548 = vmatpush1.bf16.msra.mxu0 0
        %549 = vmatprep.subr.bf16.mxu0 0
        %550 = vmatpush1.bf16.msra.mxu0 0
        %551 = vmatprep.subr.bf16.mxu0 0
        %552 = vmatpush1.bf16.msra.mxu0 0
        %553 = vmatprep.subr.bf16.mxu0 0
        %554 = vmatpush1.bf16.msra.mxu0 0
        %555 = vmatprep.subr.bf16.mxu0 0
        %556 = vmatpush1.bf16.msra.mxu0 0
        %557 = vmatprep.subr.bf16.mxu0 0
        %558 = vmatpush1.bf16.msra.mxu0 0
        %559 = vmatprep.subr.bf16.mxu0 0
        %560 = vmatpush1.bf16.msra.mxu0 0
        %561 = vmatprep.mubr.bf16.mxu0 0
        %562 = vmatmul.mubr.bf16.gmra.mrb[0].mxu0 %v518
        %v563 = vpop.f32.mrb[0].mxu0
        %v564 = vadd.f32 %v490, %v563
        %v565 = vpop.f32.mrb[0].mxu0
        %v566 = vpop.f32.mrb[0].mxu0
        %v567 = vadd.f32 %v490, %v566
        %v568 = vpop.f32.mrb[0].mxu0
        %569 = vmatprep.mubr.bf16.mxu0 0
        %570 = vmatmul.mubr.bf16.gmra.mrb[0].mxu0 %v521
        %v571 = vpop.f32.mrb[0].mxu0
        %v572 = vadd.f32 %v490, %v571
        %v573 = vpop.f32.mrb[0].mxu0
        %v574 = vpop.f32.mrb[0].mxu0
        %v575 = vadd.f32 %v490, %v574
        %v576 = vpop.f32.mrb[0].mxu0
        %577 = vmatprep.mubr.bf16.mxu0 0
        %578 = vmatmul.mubr.bf16.gmra.mrb[0].mxu0 %v524
        %v579 = vpop.f32.mrb[0].mxu0
        %v580 = vadd.f32 %v490, %v579
        %v581 = vpop.f32.mrb[0].mxu0
        %v582 = vpop.f32.mrb[0].mxu0
        %v583 = vadd.f32 %v490, %v582
        %v584 = vpop.f32.mrb[0].mxu0
        %585 = vmatprep.mubr.bf16.mxu0 0
        %586 = vmatmul.mubr.bf16.gmra.mrb[0].mxu0 %v527
        %v587 = vpop.f32.mrb[0].mxu0
        %v588 = vadd.f32 %v490, %v587
        %v589 = vpop.f32.mrb[0].mxu0
        %v590 = vpop.f32.mrb[0].mxu0
        %v591 = vadd.f32 %v490, %v590
        %v592 = vpop.f32.mrb[0].mxu0
        %593 = vdwg.mxu0
        %v594 = vmax.f32 %v564, 0.0
        %v595 = vmax.f32 %v567, 0.0
        %v596 = vmax.f32 %v572, 0.0
        %v597 = vmax.f32 %v575, 0.0
        %v598 = vmax.f32 %v580, 0.0
        %v599 = vmax.f32 %v583, 0.0
        %v600 = vmax.f32 %v588, 0.0
        %v601 = vmax.f32 %v591, 0.0
        %v602 = vpack.c.bf16 %v595, %v594
        %v603 = vpack.c.bf16 %v597, %v596
        %v604 = vpack.c.bf16 %v599, %v598
        %v605 = vpack.c.bf16 %v601, %v600
        %v606 = vld [vmem:[#allocation2] sm:$0xff]
        %v607 = vld [vmem:[#allocation2 + $0x8] sm:$0xff]
        %v608 = vld [vmem:[#allocation2 + $0x10] sm:$0xff]
        %v609 = vld [vmem:[#allocation2 + $0x18] sm:$0xff]
        %v610 = vld [vmem:[#allocation2 + $0x20] sm:$0xff]
        %v611 = vld [vmem:[#allocation2 + $0x28] sm:$0xff]
        %v612 = vld [vmem:[#allocation2 + $0x30] sm:$0xff]
        %v613 = vld [vmem:[#allocation2 + $0x38] sm:$0xff]
        %v614 = vld [vmem:[#allocation2 + $0x40] sm:$0xff]
        %v615 = vld [vmem:[#allocation2 + $0x48] sm:$0xff]
        %v616 = vld [vmem:[#allocation2 + $0x50] sm:$0xff]
        %v617 = vld [vmem:[#allocation2 + $0x58] sm:$0xff]
        %v618 = vld [vmem:[#allocation2 + $0x60] sm:$0xff]
        %v619 = vld [vmem:[#allocation2 + $0x68] sm:$0xff]
        %v620 = vld [vmem:[#allocation2 + $0x70] sm:$0xff]
        %v621 = vld [vmem:[#allocation2 + $0x78] sm:$0xff]
        %v622 = vld [vmem:[#allocation2 + $0x80] sm:$0xff]
        %v623 = vld [vmem:[#allocation2 + $0x88] sm:$0xff]
        %v624 = vld [vmem:[#allocation2 + $0x90] sm:$0xff]
        %v625 = vld [vmem:[#allocation2 + $0x98] sm:$0xff]
        %v626 = vld [vmem:[#allocation2 + $0xa0] sm:$0xff]
        %v627 = vld [vmem:[#allocation2 + $0xa8] sm:$0xff]
        %v628 = vld [vmem:[#allocation2 + $0xb0] sm:$0xff]
        %v629 = vld [vmem:[#allocation2 + $0xb8] sm:$0xff]
        %v630 = vld [vmem:[#allocation2 + $0xc0] sm:$0xff]
        %v631 = vld [vmem:[#allocation2 + $0xc8] sm:$0xff]
        %v632 = vld [vmem:[#allocation2 + $0xd0] sm:$0xff]
        %v633 = vld [vmem:[#allocation2 + $0xd8] sm:$0xff]
        %v634 = vld [vmem:[#allocation2 + $0xe0] sm:$0xff]
        %v635 = vld [vmem:[#allocation2 + $0xe8] sm:$0xff]
        %v636 = vld [vmem:[#allocation2 + $0xf0] sm:$0xff]
        %v637 = vld [vmem:[#allocation2 + $0xf8] sm:$0xff]
        %v638 = vld [vmem:[#allocation2 + $0x100] sm:$0xff]
        %v639 = vld [vmem:[#allocation2 + $0x108] sm:$0xff]
        %v640 = vld [vmem:[#allocation2 + $0x110] sm:$0xff]
        %v641 = vld [vmem:[#allocation2 + $0x118] sm:$0xff]
        %v642 = vld [vmem:[#allocation2 + $0x120] sm:$0xff]
        %v643 = vld [vmem:[#allocation2 + $0x128] sm:$0xff]
        %v644 = vld [vmem:[#allocation2 + $0x130] sm:$0xff]
        %v645 = vld [vmem:[#allocation2 + $0x138] sm:$0xff]
        %v646 = vld [vmem:[#allocation2 + $0x140] sm:$0xff]
        %v647 = vld [vmem:[#allocation2 + $0x148] sm:$0xff]
        %v648 = vld [vmem:[#allocation2 + $0x150] sm:$0xff]
        %v649 = vld [vmem:[#allocation2 + $0x158] sm:$0xff]
        %v650 = vld [vmem:[#allocation2 + $0x160] sm:$0xff]
        %v651 = vld [vmem:[#allocation2 + $0x168] sm:$0xff]
        %v652 = vld [vmem:[#allocation2 + $0x170] sm:$0xff]
        %v653 = vld [vmem:[#allocation2 + $0x178] sm:$0xff]
        %v654 = vld [vmem:[#allocation2 + $0x180] sm:$0xff]
        %v655 = vld [vmem:[#allocation2 + $0x188] sm:$0xff]
        %v656 = vld [vmem:[#allocation2 + $0x190] sm:$0xff]
        %v657 = vld [vmem:[#allocation2 + $0x198] sm:$0xff]
        %v658 = vld [vmem:[#allocation2 + $0x1a0] sm:$0xff]
        %v659 = vld [vmem:[#allocation2 + $0x1a8] sm:$0xff]
        %v660 = vld [vmem:[#allocation2 + $0x1b0] sm:$0xff]
        %v661 = vld [vmem:[#allocation2 + $0x1b8] sm:$0xff]
        %v662 = vld [vmem:[#allocation2 + $0x1c0] sm:$0xff]
        %v663 = vld [vmem:[#allocation2 + $0x1c8] sm:$0xff]
        %v664 = vld [vmem:[#allocation2 + $0x1d0] sm:$0xff]
        %v665 = vld [vmem:[#allocation2 + $0x1d8] sm:$0xff]
        %v666 = vld [vmem:[#allocation2 + $0x1e0] sm:$0xff]
        %v667 = vld [vmem:[#allocation2 + $0x1e8] sm:$0xff]
        %v668 = vld [vmem:[#allocation2 + $0x1f0] sm:$0xff]
        %v669 = vld [vmem:[#allocation2 + $0x1f8] sm:$0xff]
        %v670 = vld [vmem:[%s6] sm:$0xff]
        %v672 = vlaneseq
        %v673 = vshrl.u32 %v672, 7
        %v674 = vsub.s32 0, %v673
        %v675 = vrot.slane %v670, %v674
        %v676 = vlaneseq
        %v677 = vshrl.u32 %v676, 7
        %v678 = vsub.s32 1, %v677
        %v679 = vrot.slane %v670, %v678
        %v680 = vlaneseq
        %v681 = vshrl.u32 %v680, 7
        %v682 = vsub.s32 2, %v681
        %v683 = vrot.slane %v670, %v682
        %v684 = vlaneseq
        %v685 = vshrl.u32 %v684, 7
        %v686 = vsub.s32 3, %v685
        %v687 = vrot.slane %v670, %v686
        %v688 = vlaneseq
        %v689 = vshrl.u32 %v688, 7
        %v690 = vsub.s32 4, %v689
        %v691 = vrot.slane %v670, %v690
        %v692 = vlaneseq
        %v693 = vshrl.u32 %v692, 7
        %v694 = vsub.s32 5, %v693
        %v695 = vrot.slane %v670, %v694
        %v696 = vlaneseq
        %v697 = vshrl.u32 %v696, 7
        %v698 = vsub.s32 6, %v697
        %v699 = vrot.slane %v670, %v698
        %v700 = vlaneseq
        %v701 = vshrl.u32 %v700, 7
        %v702 = vsub.s32 7, %v701
        %v703 = vrot.slane %v670, %v702
        %v776 = vunpack.c.l.b16 %v606
        %v777 = vunpack.c.h.b16 %v606
        %v778 = vunpack.c.l.b16 %v607
        %v779 = vunpack.c.h.b16 %v607
        %v780 = vunpack.c.l.b16 %v608
        %v781 = vunpack.c.h.b16 %v608
        %v782 = vunpack.c.l.b16 %v609
        %v783 = vunpack.c.h.b16 %v609
        %v784 = vunpack.c.l.b16 %v610
        %v785 = vunpack.c.h.b16 %v610
        %v786 = vunpack.c.l.b16 %v611
        %v787 = vunpack.c.h.b16 %v611
        %v788 = vunpack.c.l.b16 %v612
        %v789 = vunpack.c.h.b16 %v612
        %v790 = vunpack.c.l.b16 %v613
        %v791 = vunpack.c.h.b16 %v613
        %v792 = vunpack.c.l.b16 %v614
        %v793 = vunpack.c.h.b16 %v614
        %v794 = vunpack.c.l.b16 %v615
        %v795 = vunpack.c.h.b16 %v615
        %v796 = vunpack.c.l.b16 %v616
        %v797 = vunpack.c.h.b16 %v616
        %v798 = vunpack.c.l.b16 %v617
        %v799 = vunpack.c.h.b16 %v617
        %v800 = vunpack.c.l.b16 %v618
        %v801 = vunpack.c.h.b16 %v618
        %v802 = vunpack.c.l.b16 %v619
        %v803 = vunpack.c.h.b16 %v619
        %v804 = vunpack.c.l.b16 %v620
        %v805 = vunpack.c.h.b16 %v620
        %v806 = vunpack.c.l.b16 %v621
        %v807 = vunpack.c.h.b16 %v621
        %v808 = vunpack.c.l.b16 %v622
        %v809 = vunpack.c.h.b16 %v622
        %v810 = vunpack.c.l.b16 %v623
        %v811 = vunpack.c.h.b16 %v623
        %v812 = vunpack.c.l.b16 %v624
        %v813 = vunpack.c.h.b16 %v624
        %v814 = vunpack.c.l.b16 %v625
        %v815 = vunpack.c.h.b16 %v625
        %v816 = vunpack.c.l.b16 %v626
        %v817 = vunpack.c.h.b16 %v626
        %v818 = vunpack.c.l.b16 %v627
        %v819 = vunpack.c.h.b16 %v627
        %v820 = vunpack.c.l.b16 %v628
        %v821 = vunpack.c.h.b16 %v628
        %v822 = vunpack.c.l.b16 %v629
        %v823 = vunpack.c.h.b16 %v629
        %v824 = vunpack.c.l.b16 %v630
        %v825 = vunpack.c.h.b16 %v630
        %v826 = vunpack.c.l.b16 %v631
        %v827 = vunpack.c.h.b16 %v631
        %v828 = vunpack.c.l.b16 %v632
        %v829 = vunpack.c.h.b16 %v632
        %v830 = vunpack.c.l.b16 %v633
        %v831 = vunpack.c.h.b16 %v633
        %v832 = vunpack.c.l.b16 %v634
        %v833 = vunpack.c.h.b16 %v634
        %v834 = vunpack.c.l.b16 %v635
        %v835 = vunpack.c.h.b16 %v635
        %v836 = vunpack.c.l.b16 %v636
        %v837 = vunpack.c.h.b16 %v636
        %v838 = vunpack.c.l.b16 %v637
        %v839 = vunpack.c.h.b16 %v637
        %v840 = vunpack.c.l.b16 %v638
        %v841 = vunpack.c.h.b16 %v638
        %v842 = vunpack.c.l.b16 %v639
        %v843 = vunpack.c.h.b16 %v639
        %v844 = vunpack.c.l.b16 %v640
        %v845 = vunpack.c.h.b16 %v640
        %v846 = vunpack.c.l.b16 %v641
        %v847 = vunpack.c.h.b16 %v641
        %v848 = vunpack.c.l.b16 %v642
        %v849 = vunpack.c.h.b16 %v642
        %v850 = vunpack.c.l.b16 %v643
        %v851 = vunpack.c.h.b16 %v643
        %v852 = vunpack.c.l.b16 %v644
        %v853 = vunpack.c.h.b16 %v644
        %v854 = vunpack.c.l.b16 %v645
        %v855 = vunpack.c.h.b16 %v645
        %v856 = vunpack.c.l.b16 %v646
        %v857 = vunpack.c.h.b16 %v646
        %v858 = vunpack.c.l.b16 %v647
        %v859 = vunpack.c.h.b16 %v647
        %v860 = vunpack.c.l.b16 %v648
        %v861 = vunpack.c.h.b16 %v648
        %v862 = vunpack.c.l.b16 %v649
        %v863 = vunpack.c.h.b16 %v649
        %v864 = vunpack.c.l.b16 %v650
        %v865 = vunpack.c.h.b16 %v650
        %v866 = vunpack.c.l.b16 %v651
        %v867 = vunpack.c.h.b16 %v651
        %v868 = vunpack.c.l.b16 %v652
        %v869 = vunpack.c.h.b16 %v652
        %v870 = vunpack.c.l.b16 %v653
        %v871 = vunpack.c.h.b16 %v653
        %v872 = vunpack.c.l.b16 %v654
        %v873 = vunpack.c.h.b16 %v654
        %v874 = vunpack.c.l.b16 %v655
        %v875 = vunpack.c.h.b16 %v655
        %v876 = vunpack.c.l.b16 %v656
        %v877 = vunpack.c.h.b16 %v656
        %v878 = vunpack.c.l.b16 %v657
        %v879 = vunpack.c.h.b16 %v657
        %v880 = vunpack.c.l.b16 %v658
        %v881 = vunpack.c.h.b16 %v658
        %v882 = vunpack.c.l.b16 %v659
        %v883 = vunpack.c.h.b16 %v659
        %v884 = vunpack.c.l.b16 %v660
        %v885 = vunpack.c.h.b16 %v660
        %v886 = vunpack.c.l.b16 %v661
        %v887 = vunpack.c.h.b16 %v661
        %v888 = vunpack.c.l.b16 %v662
        %v889 = vunpack.c.h.b16 %v662
        %v890 = vunpack.c.l.b16 %v663
        %v891 = vunpack.c.h.b16 %v663
        %v892 = vunpack.c.l.b16 %v664
        %v893 = vunpack.c.h.b16 %v664
        %v894 = vunpack.c.l.b16 %v665
        %v895 = vunpack.c.h.b16 %v665
        %v896 = vunpack.c.l.b16 %v666
        %v897 = vunpack.c.h.b16 %v666
        %v898 = vunpack.c.l.b16 %v667
        %v899 = vunpack.c.h.b16 %v667
        %v900 = vunpack.c.l.b16 %v668
        %v901 = vunpack.c.h.b16 %v668
        %v902 = vunpack.c.l.b16 %v669
        %v903 = vunpack.c.h.b16 %v669
        %v904 = vpack.c.b16 %v784, %v776
        %v905 = vpack.c.b16 %v785, %v777
        %v906 = vpack.c.b16 %v786, %v778
        %v907 = vpack.c.b16 %v787, %v779
        %v908 = vpack.c.b16 %v788, %v780
        %v909 = vpack.c.b16 %v789, %v781
        %v910 = vpack.c.b16 %v790, %v782
        %v911 = vpack.c.b16 %v791, %v783
        %v912 = vpack.c.b16 %v800, %v792
        %v913 = vpack.c.b16 %v801, %v793
        %v914 = vpack.c.b16 %v802, %v794
        %v915 = vpack.c.b16 %v803, %v795
        %v916 = vpack.c.b16 %v804, %v796
        %v917 = vpack.c.b16 %v805, %v797
        %v918 = vpack.c.b16 %v806, %v798
        %v919 = vpack.c.b16 %v807, %v799
        %v920 = vpack.c.b16 %v816, %v808
        %v921 = vpack.c.b16 %v817, %v809
        %v922 = vpack.c.b16 %v818, %v810
        %v923 = vpack.c.b16 %v819, %v811
        %v924 = vpack.c.b16 %v820, %v812
        %v925 = vpack.c.b16 %v821, %v813
        %v926 = vpack.c.b16 %v822, %v814
        %v927 = vpack.c.b16 %v823, %v815
        %v928 = vpack.c.b16 %v832, %v824
        %v929 = vpack.c.b16 %v833, %v825
        %v930 = vpack.c.b16 %v834, %v826
        %v931 = vpack.c.b16 %v835, %v827
        %v932 = vpack.c.b16 %v836, %v828
        %v933 = vpack.c.b16 %v837, %v829
        %v934 = vpack.c.b16 %v838, %v830
        %v935 = vpack.c.b16 %v839, %v831
        %v936 = vpack.c.b16 %v848, %v840
        %v937 = vpack.c.b16 %v849, %v841
        %v938 = vpack.c.b16 %v850, %v842
        %v939 = vpack.c.b16 %v851, %v843
        %v940 = vpack.c.b16 %v852, %v844
        %v941 = vpack.c.b16 %v853, %v845
        %v942 = vpack.c.b16 %v854, %v846
        %v943 = vpack.c.b16 %v855, %v847
        %v944 = vpack.c.b16 %v864, %v856
        %v945 = vpack.c.b16 %v865, %v857
        %v946 = vpack.c.b16 %v866, %v858
        %v947 = vpack.c.b16 %v867, %v859
        %v948 = vpack.c.b16 %v868, %v860
        %v949 = vpack.c.b16 %v869, %v861
        %v950 = vpack.c.b16 %v870, %v862
        %v951 = vpack.c.b16 %v871, %v863
        %v952 = vpack.c.b16 %v880, %v872
        %v953 = vpack.c.b16 %v881, %v873
        %v954 = vpack.c.b16 %v882, %v874
        %v955 = vpack.c.b16 %v883, %v875
        %v956 = vpack.c.b16 %v884, %v876
        %v957 = vpack.c.b16 %v885, %v877
        %v958 = vpack.c.b16 %v886, %v878
        %v959 = vpack.c.b16 %v887, %v879
        %v960 = vpack.c.b16 %v896, %v888
        %v961 = vpack.c.b16 %v897, %v889
        %v962 = vpack.c.b16 %v898, %v890
        %v963 = vpack.c.b16 %v899, %v891
        %v964 = vpack.c.b16 %v900, %v892
        %v965 = vpack.c.b16 %v901, %v893
        %v966 = vpack.c.b16 %v902, %v894
        %v967 = vpack.c.b16 %v903, %v895
        %1032 = vmatprep.subr.bf16.mxu0 %v905
        %1033 = vmatpush1.bf16.msra.mxu0 %v904
        %1034 = vmatprep.subr.bf16.mxu0 %v913
        %1035 = vmatpush1.bf16.msra.mxu0 %v912
        %1036 = vmatprep.subr.bf16.mxu0 %v921
        %1037 = vmatpush1.bf16.msra.mxu0 %v920
        %1038 = vmatprep.subr.bf16.mxu0 %v929
        %1039 = vmatpush1.bf16.msra.mxu0 %v928
        %1040 = vmatprep.subr.bf16.mxu0 %v937
        %1041 = vmatpush1.bf16.msra.mxu0 %v936
        %1042 = vmatprep.subr.bf16.mxu0 %v945
        %1043 = vmatpush1.bf16.msra.mxu0 %v944
        %1044 = vmatprep.subr.bf16.mxu0 %v953
        %1045 = vmatpush1.bf16.msra.mxu0 %v952
        %1046 = vmatprep.subr.bf16.mxu0 %v961
        %1047 = vmatpush1.bf16.msra.mxu0 %v960
        %1048 = vmatprep.subr.bf16.mxu0 0
        %1049 = vmatpush1.bf16.msra.mxu0 0
        %1050 = vmatprep.subr.bf16.mxu0 0
        %1051 = vmatpush1.bf16.msra.mxu0 0
        %1052 = vmatprep.subr.bf16.mxu0 0
        %1053 = vmatpush1.bf16.msra.mxu0 0
        %1054 = vmatprep.subr.bf16.mxu0 0
        %1055 = vmatpush1.bf16.msra.mxu0 0
        %1056 = vmatprep.subr.bf16.mxu0 0
        %1057 = vmatpush1.bf16.msra.mxu0 0
        %1058 = vmatprep.subr.bf16.mxu0 0
        %1059 = vmatpush1.bf16.msra.mxu0 0
        %1060 = vmatprep.subr.bf16.mxu0 0
        %1061 = vmatpush1.bf16.msra.mxu0 0
        %1062 = vmatprep.subr.bf16.mxu0 0
        %1063 = vmatpush1.bf16.msra.mxu0 0
        %1064 = vmatprep.mubr.bf16.mxu0 0
        %1065 = vmatmul.mubr.bf16.gmra.mrb[0].mxu0 %v602
        %v1066 = vpop.f32.mrb[0].mxu0
        %v1067 = vadd.f32 %v675, %v1066
        %v1068 = vpop.f32.mrb[0].mxu0
        %v1069 = vadd.f32 %v679, %v1068
        %v1070 = vpop.f32.mrb[0].mxu0
        %v1071 = vadd.f32 %v675, %v1070
        %v1072 = vpop.f32.mrb[0].mxu0
        %v1073 = vadd.f32 %v679, %v1072
        %1074 = vmatprep.mubr.bf16.mxu0 0
        %1075 = vmatmul.mubr.bf16.gmra.mrb[0].mxu0 %v603
        %v1076 = vpop.f32.mrb[0].mxu0
        %v1077 = vadd.f32 %v675, %v1076
        %v1078 = vpop.f32.mrb[0].mxu0
        %v1079 = vadd.f32 %v679, %v1078
        %v1080 = vpop.f32.mrb[0].mxu0
        %v1081 = vadd.f32 %v675, %v1080
        %v1082 = vpop.f32.mrb[0].mxu0
        %v1083 = vadd.f32 %v679, %v1082
        %1084 = vmatprep.mubr.bf16.mxu0 0
        %1085 = vmatmul.mubr.bf16.gmra.mrb[0].mxu0 %v604
        %v1086 = vpop.f32.mrb[0].mxu0
        %v1087 = vadd.f32 %v675, %v1086
        %v1088 = vpop.f32.mrb[0].mxu0
        %v1089 = vadd.f32 %v679, %v1088
        %v1090 = vpop.f32.mrb[0].mxu0
        %v1091 = vadd.f32 %v675, %v1090
        %v1092 = vpop.f32.mrb[0].mxu0
        %v1093 = vadd.f32 %v679, %v1092
        %1094 = vmatprep.mubr.bf16.mxu0 0
        %1095 = vmatmul.mubr.bf16.gmra.mrb[0].mxu0 %v605
        %v1096 = vpop.f32.mrb[0].mxu0
        %v1097 = vadd.f32 %v675, %v1096
        %v1098 = vpop.f32.mrb[0].mxu0
        %v1099 = vadd.f32 %v679, %v1098
        %v1100 = vpop.f32.mrb[0].mxu0
        %v1101 = vadd.f32 %v675, %v1100
        %v1102 = vpop.f32.mrb[0].mxu0
        %v1103 = vadd.f32 %v679, %v1102
        %1104 = vdwg.mxu0
        %1105 = vmatprep.subr.bf16.mxu0 %v907
        %1106 = vmatpush1.bf16.msra.mxu0 %v906
        %1107 = vmatprep.subr.bf16.mxu0 %v915
        %1108 = vmatpush1.bf16.msra.mxu0 %v914
        %1109 = vmatprep.subr.bf16.mxu0 %v923
        %1110 = vmatpush1.bf16.msra.mxu0 %v922
        %1111 = vmatprep.subr.bf16.mxu0 %v931
        %1112 = vmatpush1.bf16.msra.mxu0 %v930
        %1113 = vmatprep.subr.bf16.mxu0 %v939
        %1114 = vmatpush1.bf16.msra.mxu0 %v938
        %1115 = vmatprep.subr.bf16.mxu0 %v947
        %1116 = vmatpush1.bf16.msra.mxu0 %v946
        %1117 = vmatprep.subr.bf16.mxu0 %v955
        %1118 = vmatpush1.bf16.msra.mxu0 %v954
        %1119 = vmatprep.subr.bf16.mxu0 %v963
        %1120 = vmatpush1.bf16.msra.mxu0 %v962
        %1121 = vmatprep.subr.bf16.mxu0 0
        %1122 = vmatpush1.bf16.msra.mxu0 0
        %1123 = vmatprep.subr.bf16.mxu0 0
        %1124 = vmatpush1.bf16.msra.mxu0 0
        %1125 = vmatprep.subr.bf16.mxu0 0
        %1126 = vmatpush1.bf16.msra.mxu0 0
        %1127 = vmatprep.subr.bf16.mxu0 0
        %1128 = vmatpush1.bf16.msra.mxu0 0
        %1129 = vmatprep.subr.bf16.mxu0 0
        %1130 = vmatpush1.bf16.msra.mxu0 0
        %1131 = vmatprep.subr.bf16.mxu0 0
        %1132 = vmatpush1.bf16.msra.mxu0 0
        %1133 = vmatprep.subr.bf16.mxu0 0
        %1134 = vmatpush1.bf16.msra.mxu0 0
        %1135 = vmatprep.subr.bf16.mxu0 0
        %1136 = vmatpush1.bf16.msra.mxu0 0
        %1137 = vmatprep.mubr.bf16.mxu0 0
        %1138 = vmatmul.mubr.bf16.gmra.mrb[0].mxu0 %v602
        %v1139 = vpop.f32.mrb[0].mxu0
        %v1140 = vadd.f32 %v683, %v1139
        %v1141 = vpop.f32.mrb[0].mxu0
        %v1142 = vadd.f32 %v687, %v1141
        %v1143 = vpop.f32.mrb[0].mxu0
        %v1144 = vadd.f32 %v683, %v1143
        %v1145 = vpop.f32.mrb[0].mxu0
        %v1146 = vadd.f32 %v687, %v1145
        %1147 = vmatprep.mubr.bf16.mxu0 0
        %1148 = vmatmul.mubr.bf16.gmra.mrb[0].mxu0 %v603
        %v1149 = vpop.f32.mrb[0].mxu0
        %v1150 = vadd.f32 %v683, %v1149
        %v1151 = vpop.f32.mrb[0].mxu0
        %v1152 = vadd.f32 %v687, %v1151
        %v1153 = vpop.f32.mrb[0].mxu0
        %v1154 = vadd.f32 %v683, %v1153
        %v1155 = vpop.f32.mrb[0].mxu0
        %v1156 = vadd.f32 %v687, %v1155
        %1157 = vmatprep.mubr.bf16.mxu0 0
        %1158 = vmatmul.mubr.bf16.gmra.mrb[0].mxu0 %v604
        %v1159 = vpop.f32.mrb[0].mxu0
        %v1160 = vadd.f32 %v683, %v1159
        %v1161 = vpop.f32.mrb[0].mxu0
        %v1162 = vadd.f32 %v687, %v1161
        %v1163 = vpop.f32.mrb[0].mxu0
        %v1164 = vadd.f32 %v683, %v1163
        %v1165 = vpop.f32.mrb[0].mxu0
        %v1166 = vadd.f32 %v687, %v1165
        %1167 = vmatprep.mubr.bf16.mxu0 0
        %1168 = vmatmul.mubr.bf16.gmra.mrb[0].mxu0 %v605
        %v1169 = vpop.f32.mrb[0].mxu0
        %v1170 = vadd.f32 %v683, %v1169
        %v1171 = vpop.f32.mrb[0].mxu0
        %v1172 = vadd.f32 %v687, %v1171
        %v1173 = vpop.f32.mrb[0].mxu0
        %v1174 = vadd.f32 %v683, %v1173
        %v1175 = vpop.f32.mrb[0].mxu0
        %v1176 = vadd.f32 %v687, %v1175
        %1177 = vdwg.mxu0
        %1178 = vmatprep.subr.bf16.mxu0 %v909
        %1179 = vmatpush1.bf16.msra.mxu0 %v908
        %1180 = vmatprep.subr.bf16.mxu0 %v917
        %1181 = vmatpush1.bf16.msra.mxu0 %v916
        %1182 = vmatprep.subr.bf16.mxu0 %v925
        %1183 = vmatpush1.bf16.msra.mxu0 %v924
        %1184 = vmatprep.subr.bf16.mxu0 %v933
        %1185 = vmatpush1.bf16.msra.mxu0 %v932
        %1186 = vmatprep.subr.bf16.mxu0 %v941
        %1187 = vmatpush1.bf16.msra.mxu0 %v940
        %1188 = vmatprep.subr.bf16.mxu0 %v949
        %1189 = vmatpush1.bf16.msra.mxu0 %v948
        %1190 = vmatprep.subr.bf16.mxu0 %v957
        %1191 = vmatpush1.bf16.msra.mxu0 %v956
        %1192 = vmatprep.subr.bf16.mxu0 %v965
        %1193 = vmatpush1.bf16.msra.mxu0 %v964
        %1194 = vmatprep.subr.bf16.mxu0 0
        %1195 = vmatpush1.bf16.msra.mxu0 0
        %1196 = vmatprep.subr.bf16.mxu0 0
        %1197 = vmatpush1.bf16.msra.mxu0 0
        %1198 = vmatprep.subr.bf16.mxu0 0
        %1199 = vmatpush1.bf16.msra.mxu0 0
        %1200 = vmatprep.subr.bf16.mxu0 0
        %1201 = vmatpush1.bf16.msra.mxu0 0
        %1202 = vmatprep.subr.bf16.mxu0 0
        %1203 = vmatpush1.bf16.msra.mxu0 0
        %1204 = vmatprep.subr.bf16.mxu0 0
        %1205 = vmatpush1.bf16.msra.mxu0 0
        %1206 = vmatprep.subr.bf16.mxu0 0
        %1207 = vmatpush1.bf16.msra.mxu0 0
        %1208 = vmatprep.subr.bf16.mxu0 0
        %1209 = vmatpush1.bf16.msra.mxu0 0
        %1210 = vmatprep.mubr.bf16.mxu0 0
        %1211 = vmatmul.mubr.bf16.gmra.mrb[0].mxu0 %v602
        %v1212 = vpop.f32.mrb[0].mxu0
        %v1213 = vadd.f32 %v691, %v1212
        %v1214 = vpop.f32.mrb[0].mxu0
        %v1215 = vadd.f32 %v695, %v1214
        %v1216 = vpop.f32.mrb[0].mxu0
        %v1217 = vadd.f32 %v691, %v1216
        %v1218 = vpop.f32.mrb[0].mxu0
        %v1219 = vadd.f32 %v695, %v1218
        %1220 = vmatprep.mubr.bf16.mxu0 0
        %1221 = vmatmul.mubr.bf16.gmra.mrb[0].mxu0 %v603
        %v1222 = vpop.f32.mrb[0].mxu0
        %v1223 = vadd.f32 %v691, %v1222
        %v1224 = vpop.f32.mrb[0].mxu0
        %v1225 = vadd.f32 %v695, %v1224
        %v1226 = vpop.f32.mrb[0].mxu0
        %v1227 = vadd.f32 %v691, %v1226
        %v1228 = vpop.f32.mrb[0].mxu0
        %v1229 = vadd.f32 %v695, %v1228
        %1230 = vmatprep.mubr.bf16.mxu0 0
        %1231 = vmatmul.mubr.bf16.gmra.mrb[0].mxu0 %v604
        %v1232 = vpop.f32.mrb[0].mxu0
        %v1233 = vadd.f32 %v691, %v1232
        %v1234 = vpop.f32.mrb[0].mxu0
        %v1235 = vadd.f32 %v695, %v1234
        %v1236 = vpop.f32.mrb[0].mxu0
        %v1237 = vadd.f32 %v691, %v1236
        %v1238 = vpop.f32.mrb[0].mxu0
        %v1239 = vadd.f32 %v695, %v1238
        %1240 = vmatprep.mubr.bf16.mxu0 0
        %1241 = vmatmul.mubr.bf16.gmra.mrb[0].mxu0 %v605
        %v1242 = vpop.f32.mrb[0].mxu0
        %v1243 = vadd.f32 %v691, %v1242
        %v1244 = vpop.f32.mrb[0].mxu0
        %v1245 = vadd.f32 %v695, %v1244
        %v1246 = vpop.f32.mrb[0].mxu0
        %v1247 = vadd.f32 %v691, %v1246
        %v1248 = vpop.f32.mrb[0].mxu0
        %v1249 = vadd.f32 %v695, %v1248
        %1250 = vdwg.mxu0
        %1251 = vmatprep.subr.bf16.mxu0 %v911
        %1252 = vmatpush1.bf16.msra.mxu0 %v910
        %1253 = vmatprep.subr.bf16.mxu0 %v919
        %1254 = vmatpush1.bf16.msra.mxu0 %v918
        %1255 = vmatprep.subr.bf16.mxu0 %v927
        %1256 = vmatpush1.bf16.msra.mxu0 %v926
        %1257 = vmatprep.subr.bf16.mxu0 %v935
        %1258 = vmatpush1.bf16.msra.mxu0 %v934
        %1259 = vmatprep.subr.bf16.mxu0 %v943
        %1260 = vmatpush1.bf16.msra.mxu0 %v942
        %1261 = vmatprep.subr.bf16.mxu0 %v951
        %1262 = vmatpush1.bf16.msra.mxu0 %v950
        %1263 = vmatprep.subr.bf16.mxu0 %v959
        %1264 = vmatpush1.bf16.msra.mxu0 %v958
        %1265 = vmatprep.subr.bf16.mxu0 %v967
        %1266 = vmatpush1.bf16.msra.mxu0 %v966
        %1267 = vmatprep.subr.bf16.mxu0 0
        %1268 = vmatpush1.bf16.msra.mxu0 0
        %1269 = vmatprep.subr.bf16.mxu0 0
        %1270 = vmatpush1.bf16.msra.mxu0 0
        %1271 = vmatprep.subr.bf16.mxu0 0
        %1272 = vmatpush1.bf16.msra.mxu0 0
        %1273 = vmatprep.subr.bf16.mxu0 0
        %1274 = vmatpush1.bf16.msra.mxu0 0
        %1275 = vmatprep.subr.bf16.mxu0 0
        %1276 = vmatpush1.bf16.msra.mxu0 0
        %1277 = vmatprep.subr.bf16.mxu0 0
        %1278 = vmatpush1.bf16.msra.mxu0 0
        %1279 = vmatprep.subr.bf16.mxu0 0
        %1280 = vmatpush1.bf16.msra.mxu0 0
        %1281 = vmatprep.subr.bf16.mxu0 0
        %1282 = vmatpush1.bf16.msra.mxu0 0
        %1283 = vmatprep.mubr.bf16.mxu0 0
        %1284 = vmatmul.mubr.bf16.gmra.mrb[0].mxu0 %v602
        %v1285 = vpop.f32.mrb[0].mxu0
        %v1286 = vadd.f32 %v699, %v1285
        %v1287 = vpop.f32.mrb[0].mxu0
        %v1288 = vadd.f32 %v703, %v1287
        %v1289 = vpop.f32.mrb[0].mxu0
        %v1290 = vadd.f32 %v699, %v1289
        %v1291 = vpop.f32.mrb[0].mxu0
        %v1292 = vadd.f32 %v703, %v1291
        %1293 = vmatprep.mubr.bf16.mxu0 0
        %1294 = vmatmul.mubr.bf16.gmra.mrb[0].mxu0 %v603
        %v1295 = vpop.f32.mrb[0].mxu0
        %v1296 = vadd.f32 %v699, %v1295
        %v1297 = vpop.f32.mrb[0].mxu0
        %v1298 = vadd.f32 %v703, %v1297
        %v1299 = vpop.f32.mrb[0].mxu0
        %v1300 = vadd.f32 %v699, %v1299
        %v1301 = vpop.f32.mrb[0].mxu0
        %v1302 = vadd.f32 %v703, %v1301
        %1303 = vmatprep.mubr.bf16.mxu0 0
        %1304 = vmatmul.mubr.bf16.gmra.mrb[0].mxu0 %v604
        %v1305 = vpop.f32.mrb[0].mxu0
        %v1306 = vadd.f32 %v699, %v1305
        %v1307 = vpop.f32.mrb[0].mxu0
        %v1308 = vadd.f32 %v703, %v1307
        %v1309 = vpop.f32.mrb[0].mxu0
        %v1310 = vadd.f32 %v699, %v1309
        %v1311 = vpop.f32.mrb[0].mxu0
        %v1312 = vadd.f32 %v703, %v1311
        %1313 = vmatprep.mubr.bf16.mxu0 0
        %1314 = vmatmul.mubr.bf16.gmra.mrb[0].mxu0 %v605
        %v1315 = vpop.f32.mrb[0].mxu0
        %v1316 = vadd.f32 %v699, %v1315
        %v1317 = vpop.f32.mrb[0].mxu0
        %v1318 = vadd.f32 %v703, %v1317
        %v1319 = vpop.f32.mrb[0].mxu0
        %v1320 = vadd.f32 %v699, %v1319
        %v1321 = vpop.f32.mrb[0].mxu0
        %v1322 = vadd.f32 %v703, %v1321
        %1323 = vdwg.mxu0
        %v1324 = vmax.f32 %v1067, %v1071
        %v1325 = vmax.f32 %v1324, %v1077
        %v1326 = vmax.f32 %v1325, %v1081
        %v1327 = vmax.f32 %v1326, %v1087
        %v1328 = vmax.f32 %v1327, %v1091
        %v1329 = vmax.f32 %v1328, %v1097
        %v1330 = vmax.f32 %v1329, %v1101
        %v1331 = vrot.slane %v1330, 4
        %v1332 = vmax.f32 %v1330, %v1331
        %v1333 = vrot.slane %v1332, 2
        %v1334 = vmax.f32 %v1332, %v1333
        %v1335 = vrot.slane %v1334, 1
        %v1336 = vmax.f32 %v1334, %v1335
        %v1337 = vmax.f32 %v1069, %v1073
        %v1338 = vmax.f32 %v1337, %v1079
        %v1339 = vmax.f32 %v1338, %v1083
        %v1340 = vmax.f32 %v1339, %v1089
        %v1341 = vmax.f32 %v1340, %v1093
        %v1342 = vmax.f32 %v1341, %v1099
        %v1343 = vmax.f32 %v1342, %v1103
        %v1344 = vrot.slane %v1343, 4
        %v1345 = vmax.f32 %v1343, %v1344
        %v1346 = vrot.slane %v1345, 2
        %v1347 = vmax.f32 %v1345, %v1346
        %v1348 = vrot.slane %v1347, 1
        %v1349 = vmax.f32 %v1347, %v1348
        %v1350 = vmax.f32 %v1140, %v1144
        %v1351 = vmax.f32 %v1350, %v1150
        %v1352 = vmax.f32 %v1351, %v1154
        %v1353 = vmax.f32 %v1352, %v1160
        %v1354 = vmax.f32 %v1353, %v1164
        %v1355 = vmax.f32 %v1354, %v1170
        %v1356 = vmax.f32 %v1355, %v1174
        %v1357 = vrot.slane %v1356, 4
        %v1358 = vmax.f32 %v1356, %v1357
        %v1359 = vrot.slane %v1358, 2
        %v1360 = vmax.f32 %v1358, %v1359
        %v1361 = vrot.slane %v1360, 1
        %v1362 = vmax.f32 %v1360, %v1361
        %v1363 = vmax.f32 %v1142, %v1146
        %v1364 = vmax.f32 %v1363, %v1152
        %v1365 = vmax.f32 %v1364, %v1156
        %v1366 = vmax.f32 %v1365, %v1162
        %v1367 = vmax.f32 %v1366, %v1166
        %v1368 = vmax.f32 %v1367, %v1172
        %v1369 = vmax.f32 %v1368, %v1176
        %v1370 = vrot.slane %v1369, 4
        %v1371 = vmax.f32 %v1369, %v1370
        %v1372 = vrot.slane %v1371, 2
        %v1373 = vmax.f32 %v1371, %v1372
        %v1374 = vrot.slane %v1373, 1
        %v1375 = vmax.f32 %v1373, %v1374
        %v1376 = vmax.f32 %v1213, %v1217
        %v1377 = vmax.f32 %v1376, %v1223
        %v1378 = vmax.f32 %v1377, %v1227
        %v1379 = vmax.f32 %v1378, %v1233
        %v1380 = vmax.f32 %v1379, %v1237
        %v1381 = vmax.f32 %v1380, %v1243
        %v1382 = vmax.f32 %v1381, %v1247
        %v1383 = vrot.slane %v1382, 4
        %v1384 = vmax.f32 %v1382, %v1383
        %v1385 = vrot.slane %v1384, 2
        %v1386 = vmax.f32 %v1384, %v1385
        %v1387 = vrot.slane %v1386, 1
        %v1388 = vmax.f32 %v1386, %v1387
        %v1389 = vmax.f32 %v1215, %v1219
        %v1390 = vmax.f32 %v1389, %v1225
        %v1391 = vmax.f32 %v1390, %v1229
        %v1392 = vmax.f32 %v1391, %v1235
        %v1393 = vmax.f32 %v1392, %v1239
        %v1394 = vmax.f32 %v1393, %v1245
        %v1395 = vmax.f32 %v1394, %v1249
        %v1396 = vrot.slane %v1395, 4
        %v1397 = vmax.f32 %v1395, %v1396
        %v1398 = vrot.slane %v1397, 2
        %v1399 = vmax.f32 %v1397, %v1398
        %v1400 = vrot.slane %v1399, 1
        %v1401 = vmax.f32 %v1399, %v1400
        %v1402 = vmax.f32 %v1286, %v1290
        %v1403 = vmax.f32 %v1402, %v1296
        %v1404 = vmax.f32 %v1403, %v1300
        %v1405 = vmax.f32 %v1404, %v1306
        %v1406 = vmax.f32 %v1405, %v1310
        %v1407 = vmax.f32 %v1406, %v1316
        %v1408 = vmax.f32 %v1407, %v1320
        %v1409 = vrot.slane %v1408, 4
        %v1410 = vmax.f32 %v1408, %v1409
        %v1411 = vrot.slane %v1410, 2
        %v1412 = vmax.f32 %v1410, %v1411
        %v1413 = vrot.slane %v1412, 1
        %v1414 = vmax.f32 %v1412, %v1413
        %v1415 = vmax.f32 %v1288, %v1292
        %v1416 = vmax.f32 %v1415, %v1298
        %v1417 = vmax.f32 %v1416, %v1302
        %v1418 = vmax.f32 %v1417, %v1308
        %v1419 = vmax.f32 %v1418, %v1312
        %v1420 = vmax.f32 %v1419, %v1318
        %v1421 = vmax.f32 %v1420, %v1322
        %v1422 = vrot.slane %v1421, 4
        %v1423 = vmax.f32 %v1421, %v1422
        %v1424 = vrot.slane %v1423, 2
        %v1425 = vmax.f32 %v1423, %v1424
        %v1426 = vrot.slane %v1425, 1
        %v1427 = vmax.f32 %v1425, %v1426
        %v1428 = vpack.c.bf16 %v1336, %v1336
        %v1429 = vpack.c.bf16 %v1349, %v1349
        %v1430 = vpack.c.bf16 %v1362, %v1362
        %v1431 = vpack.c.bf16 %v1375, %v1375
        %v1432 = vpack.c.bf16 %v1388, %v1388
        %v1433 = vpack.c.bf16 %v1401, %v1401
        %v1434 = vpack.c.bf16 %v1414, %v1414
        %v1435 = vpack.c.bf16 %v1427, %v1427
        %v1436 = vld [vmem:[#allocation4] sm:$0xf]
        %v1437 = vld [vmem:[#allocation4 + $0x4] sm:$0xf]
        %v1438 = vld [vmem:[#allocation4 + $0x8] sm:$0xf]
        %v1439 = vld [vmem:[#allocation4 + $0xc] sm:$0xf]
        %v1440 = vld [vmem:[#allocation4 + $0x10] sm:$0xf]
        %v1441 = vld [vmem:[#allocation4 + $0x14] sm:$0xf]
        %v1442 = vld [vmem:[#allocation4 + $0x18] sm:$0xf]
        %v1443 = vld [vmem:[#allocation4 + $0x1c] sm:$0xf]
        %v1444 = vld [vmem:[#allocation4 + $0x20] sm:$0xf]
        %v1445 = vld [vmem:[#allocation4 + $0x24] sm:$0xf]
        %v1446 = vld [vmem:[#allocation4 + $0x28] sm:$0xf]
        %v1447 = vld [vmem:[#allocation4 + $0x2c] sm:$0xf]
        %v1448 = vld [vmem:[#allocation4 + $0x30] sm:$0xf]
        %v1449 = vld [vmem:[#allocation4 + $0x34] sm:$0xf]
        %v1450 = vld [vmem:[#allocation4 + $0x38] sm:$0xf]
        %v1451 = vld [vmem:[#allocation4 + $0x3c] sm:$0xf]
        %v1452 = vld [vmem:[#allocation4 + $0x40] sm:$0xf]
        %v1453 = vld [vmem:[#allocation4 + $0x44] sm:$0xf]
        %v1454 = vld [vmem:[#allocation4 + $0x48] sm:$0xf]
        %v1455 = vld [vmem:[#allocation4 + $0x4c] sm:$0xf]
        %v1456 = vld [vmem:[#allocation4 + $0x50] sm:$0xf]
        %v1457 = vld [vmem:[#allocation4 + $0x54] sm:$0xf]
        %v1458 = vld [vmem:[#allocation4 + $0x58] sm:$0xf]
        %v1459 = vld [vmem:[#allocation4 + $0x5c] sm:$0xf]
        %v1460 = vld [vmem:[#allocation4 + $0x60] sm:$0xf]
        %v1461 = vld [vmem:[#allocation4 + $0x64] sm:$0xf]
        %v1462 = vld [vmem:[#allocation4 + $0x68] sm:$0xf]
        %v1463 = vld [vmem:[#allocation4 + $0x6c] sm:$0xf]
        %v1464 = vld [vmem:[#allocation4 + $0x70] sm:$0xf]
        %v1465 = vld [vmem:[#allocation4 + $0x74] sm:$0xf]
        %v1466 = vld [vmem:[#allocation4 + $0x78] sm:$0xf]
        %v1467 = vld [vmem:[#allocation4 + $0x7c] sm:$0xf]
        %v1468 = vld [vmem:[#allocation4 + $0x80] sm:$0xf]
        %v1469 = vld [vmem:[#allocation4 + $0x84] sm:$0xf]
        %v1470 = vld [vmem:[#allocation4 + $0x88] sm:$0xf]
        %v1471 = vld [vmem:[#allocation4 + $0x8c] sm:$0xf]
        %v1472 = vld [vmem:[#allocation4 + $0x90] sm:$0xf]
        %v1473 = vld [vmem:[#allocation4 + $0x94] sm:$0xf]
        %v1474 = vld [vmem:[#allocation4 + $0x98] sm:$0xf]
        %v1475 = vld [vmem:[#allocation4 + $0x9c] sm:$0xf]
        %v1476 = vld [vmem:[#allocation4 + $0xa0] sm:$0xf]
        %v1477 = vld [vmem:[#allocation4 + $0xa4] sm:$0xf]
        %v1478 = vld [vmem:[#allocation4 + $0xa8] sm:$0xf]
        %v1479 = vld [vmem:[#allocation4 + $0xac] sm:$0xf]
        %v1480 = vld [vmem:[#allocation4 + $0xb0] sm:$0xf]
        %v1481 = vld [vmem:[#allocation4 + $0xb4] sm:$0xf]
        %v1482 = vld [vmem:[#allocation4 + $0xb8] sm:$0xf]
        %v1483 = vld [vmem:[#allocation4 + $0xbc] sm:$0xf]
        %v1484 = vld [vmem:[#allocation4 + $0xc0] sm:$0xf]
        %v1485 = vld [vmem:[#allocation4 + $0xc4] sm:$0xf]
        %v1486 = vld [vmem:[#allocation4 + $0xc8] sm:$0xf]
        %v1487 = vld [vmem:[#allocation4 + $0xcc] sm:$0xf]
        %v1488 = vld [vmem:[#allocation4 + $0xd0] sm:$0xf]
        %v1489 = vld [vmem:[#allocation4 + $0xd4] sm:$0xf]
        %v1490 = vld [vmem:[#allocation4 + $0xd8] sm:$0xf]
        %v1491 = vld [vmem:[#allocation4 + $0xdc] sm:$0xf]
        %v1492 = vld [vmem:[#allocation4 + $0xe0] sm:$0xf]
        %v1493 = vld [vmem:[#allocation4 + $0xe4] sm:$0xf]
        %v1494 = vld [vmem:[#allocation4 + $0xe8] sm:$0xf]
        %v1495 = vld [vmem:[#allocation4 + $0xec] sm:$0xf]
        %v1496 = vld [vmem:[#allocation4 + $0xf0] sm:$0xf]
        %v1497 = vld [vmem:[#allocation4 + $0xf4] sm:$0xf]
        %v1498 = vld [vmem:[#allocation4 + $0xf8] sm:$0xf]
        %v1499 = vld [vmem:[#allocation4 + $0xfc] sm:$0xf]
        %v1500 = vld [vmem:[#allocation4 + $0x100] sm:$0xf]
        %v1501 = vld [vmem:[#allocation4 + $0x104] sm:$0xf]
        %v1502 = vld [vmem:[#allocation4 + $0x108] sm:$0xf]
        %v1503 = vld [vmem:[#allocation4 + $0x10c] sm:$0xf]
        %v1504 = vld [vmem:[#allocation4 + $0x110] sm:$0xf]
        %v1505 = vld [vmem:[#allocation4 + $0x114] sm:$0xf]
        %v1506 = vld [vmem:[#allocation4 + $0x118] sm:$0xf]
        %v1507 = vld [vmem:[#allocation4 + $0x11c] sm:$0xf]
        %v1508 = vld [vmem:[#allocation4 + $0x120] sm:$0xf]
        %v1509 = vld [vmem:[#allocation4 + $0x124] sm:$0xf]
        %v1510 = vld [vmem:[#allocation4 + $0x128] sm:$0xf]
        %v1511 = vld [vmem:[#allocation4 + $0x12c] sm:$0xf]
        %v1512 = vld [vmem:[#allocation4 + $0x130] sm:$0xf]
        %v1513 = vld [vmem:[#allocation4 + $0x134] sm:$0xf]
        %v1514 = vld [vmem:[#allocation4 + $0x138] sm:$0xf]
        %v1515 = vld [vmem:[#allocation4 + $0x13c] sm:$0xf]
        %v1516 = vld [vmem:[#allocation4 + $0x140] sm:$0xf]
        %v1517 = vld [vmem:[#allocation4 + $0x144] sm:$0xf]
        %v1518 = vld [vmem:[#allocation4 + $0x148] sm:$0xf]
        %v1519 = vld [vmem:[#allocation4 + $0x14c] sm:$0xf]
        %v1520 = vld [vmem:[#allocation4 + $0x150] sm:$0xf]
        %v1521 = vld [vmem:[#allocation4 + $0x154] sm:$0xf]
        %v1522 = vld [vmem:[#allocation4 + $0x158] sm:$0xf]
        %v1523 = vld [vmem:[#allocation4 + $0x15c] sm:$0xf]
        %v1524 = vld [vmem:[#allocation4 + $0x160] sm:$0xf]
        %v1525 = vld [vmem:[#allocation4 + $0x164] sm:$0xf]
        %v1526 = vld [vmem:[#allocation4 + $0x168] sm:$0xf]
        %v1527 = vld [vmem:[#allocation4 + $0x16c] sm:$0xf]
        %v1528 = vld [vmem:[#allocation4 + $0x170] sm:$0xf]
        %v1529 = vld [vmem:[#allocation4 + $0x174] sm:$0xf]
        %v1530 = vld [vmem:[#allocation4 + $0x178] sm:$0xf]
        %v1531 = vld [vmem:[#allocation4 + $0x17c] sm:$0xf]
        %v1532 = vld [vmem:[#allocation4 + $0x180] sm:$0xf]
        %v1533 = vld [vmem:[#allocation4 + $0x184] sm:$0xf]
        %v1534 = vld [vmem:[#allocation4 + $0x188] sm:$0xf]
        %v1535 = vld [vmem:[#allocation4 + $0x18c] sm:$0xf]
        %v1536 = vld [vmem:[#allocation4 + $0x190] sm:$0xf]
        %v1537 = vld [vmem:[#allocation4 + $0x194] sm:$0xf]
        %v1538 = vld [vmem:[#allocation4 + $0x198] sm:$0xf]
        %v1539 = vld [vmem:[#allocation4 + $0x19c] sm:$0xf]
        %v1540 = vld [vmem:[#allocation4 + $0x1a0] sm:$0xf]
        %v1541 = vld [vmem:[#allocation4 + $0x1a4] sm:$0xf]
        %v1542 = vld [vmem:[#allocation4 + $0x1a8] sm:$0xf]
        %v1543 = vld [vmem:[#allocation4 + $0x1ac] sm:$0xf]
        %v1544 = vld [vmem:[#allocation4 + $0x1b0] sm:$0xf]
        %v1545 = vld [vmem:[#allocation4 + $0x1b4] sm:$0xf]
        %v1546 = vld [vmem:[#allocation4 + $0x1b8] sm:$0xf]
        %v1547 = vld [vmem:[#allocation4 + $0x1bc] sm:$0xf]
        %v1548 = vld [vmem:[#allocation4 + $0x1c0] sm:$0xf]
        %v1549 = vld [vmem:[#allocation4 + $0x1c4] sm:$0xf]
        %v1550 = vld [vmem:[#allocation4 + $0x1c8] sm:$0xf]
        %v1551 = vld [vmem:[#allocation4 + $0x1cc] sm:$0xf]
        %v1552 = vld [vmem:[#allocation4 + $0x1d0] sm:$0xf]
        %v1553 = vld [vmem:[#allocation4 + $0x1d4] sm:$0xf]
        %v1554 = vld [vmem:[#allocation4 + $0x1d8] sm:$0xf]
        %v1555 = vld [vmem:[#allocation4 + $0x1dc] sm:$0xf]
        %v1556 = vld [vmem:[#allocation4 + $0x1e0] sm:$0xf]
        %v1557 = vld [vmem:[#allocation4 + $0x1e4] sm:$0xf]
        %v1558 = vld [vmem:[#allocation4 + $0x1e8] sm:$0xf]
        %v1559 = vld [vmem:[#allocation4 + $0x1ec] sm:$0xf]
        %v1560 = vld [vmem:[#allocation4 + $0x1f0] sm:$0xf]
        %v1561 = vld [vmem:[#allocation4 + $0x1f4] sm:$0xf]
        %v1562 = vld [vmem:[#allocation4 + $0x1f8] sm:$0xf]
        %v1563 = vld [vmem:[#allocation4 + $0x1fc] sm:$0xf]
        %v1564 = vld [vmem:[%s8] sm:$0x1]
        %v1693 = vunpack.c.l.b16 %v1436
        %v1694 = vunpack.c.l.b16 %v1437
        %v1695 = vunpack.c.l.b16 %v1438
        %v1696 = vunpack.c.l.b16 %v1439
        %v1697 = vunpack.c.l.b16 %v1440
        %v1698 = vunpack.c.l.b16 %v1441
        %v1699 = vunpack.c.l.b16 %v1442
        %v1700 = vunpack.c.l.b16 %v1443
        %v1701 = vunpack.c.l.b16 %v1444
        %v1702 = vunpack.c.l.b16 %v1445
        %v1703 = vunpack.c.l.b16 %v1446
        %v1704 = vunpack.c.l.b16 %v1447
        %v1705 = vunpack.c.l.b16 %v1448
        %v1706 = vunpack.c.l.b16 %v1449
        %v1707 = vunpack.c.l.b16 %v1450
        %v1708 = vunpack.c.l.b16 %v1451
        %v1709 = vunpack.c.l.b16 %v1452
        %v1710 = vunpack.c.l.b16 %v1453
        %v1711 = vunpack.c.l.b16 %v1454
        %v1712 = vunpack.c.l.b16 %v1455
        %v1713 = vunpack.c.l.b16 %v1456
        %v1714 = vunpack.c.l.b16 %v1457
        %v1715 = vunpack.c.l.b16 %v1458
        %v1716 = vunpack.c.l.b16 %v1459
        %v1717 = vunpack.c.l.b16 %v1460
        %v1718 = vunpack.c.l.b16 %v1461
        %v1719 = vunpack.c.l.b16 %v1462
        %v1720 = vunpack.c.l.b16 %v1463
        %v1721 = vunpack.c.l.b16 %v1464
        %v1722 = vunpack.c.l.b16 %v1465
        %v1723 = vunpack.c.l.b16 %v1466
        %v1724 = vunpack.c.l.b16 %v1467
        %v1725 = vunpack.c.l.b16 %v1468
        %v1726 = vunpack.c.l.b16 %v1469
        %v1727 = vunpack.c.l.b16 %v1470
        %v1728 = vunpack.c.l.b16 %v1471
        %v1729 = vunpack.c.l.b16 %v1472
        %v1730 = vunpack.c.l.b16 %v1473
        %v1731 = vunpack.c.l.b16 %v1474
        %v1732 = vunpack.c.l.b16 %v1475
        %v1733 = vunpack.c.l.b16 %v1476
        %v1734 = vunpack.c.l.b16 %v1477
        %v1735 = vunpack.c.l.b16 %v1478
        %v1736 = vunpack.c.l.b16 %v1479
        %v1737 = vunpack.c.l.b16 %v1480
        %v1738 = vunpack.c.l.b16 %v1481
        %v1739 = vunpack.c.l.b16 %v1482
        %v1740 = vunpack.c.l.b16 %v1483
        %v1741 = vunpack.c.l.b16 %v1484
        %v1742 = vunpack.c.l.b16 %v1485
        %v1743 = vunpack.c.l.b16 %v1486
        %v1744 = vunpack.c.l.b16 %v1487
        %v1745 = vunpack.c.l.b16 %v1488
        %v1746 = vunpack.c.l.b16 %v1489
        %v1747 = vunpack.c.l.b16 %v1490
        %v1748 = vunpack.c.l.b16 %v1491
        %v1749 = vunpack.c.l.b16 %v1492
        %v1750 = vunpack.c.l.b16 %v1493
        %v1751 = vunpack.c.l.b16 %v1494
        %v1752 = vunpack.c.l.b16 %v1495
        %v1753 = vunpack.c.l.b16 %v1496
        %v1754 = vunpack.c.l.b16 %v1497
        %v1755 = vunpack.c.l.b16 %v1498
        %v1756 = vunpack.c.l.b16 %v1499
        %v1757 = vunpack.c.l.b16 %v1500
        %v1758 = vunpack.c.l.b16 %v1501
        %v1759 = vunpack.c.l.b16 %v1502
        %v1760 = vunpack.c.l.b16 %v1503
        %v1761 = vunpack.c.l.b16 %v1504
        %v1762 = vunpack.c.l.b16 %v1505
        %v1763 = vunpack.c.l.b16 %v1506
        %v1764 = vunpack.c.l.b16 %v1507
        %v1765 = vunpack.c.l.b16 %v1508
        %v1766 = vunpack.c.l.b16 %v1509
        %v1767 = vunpack.c.l.b16 %v1510
        %v1768 = vunpack.c.l.b16 %v1511
        %v1769 = vunpack.c.l.b16 %v1512
        %v1770 = vunpack.c.l.b16 %v1513
        %v1771 = vunpack.c.l.b16 %v1514
        %v1772 = vunpack.c.l.b16 %v1515
        %v1773 = vunpack.c.l.b16 %v1516
        %v1774 = vunpack.c.l.b16 %v1517
        %v1775 = vunpack.c.l.b16 %v1518
        %v1776 = vunpack.c.l.b16 %v1519
        %v1777 = vunpack.c.l.b16 %v1520
        %v1778 = vunpack.c.l.b16 %v1521
        %v1779 = vunpack.c.l.b16 %v1522
        %v1780 = vunpack.c.l.b16 %v1523
        %v1781 = vunpack.c.l.b16 %v1524
        %v1782 = vunpack.c.l.b16 %v1525
        %v1783 = vunpack.c.l.b16 %v1526
        %v1784 = vunpack.c.l.b16 %v1527
        %v1785 = vunpack.c.l.b16 %v1528
        %v1786 = vunpack.c.l.b16 %v1529
        %v1787 = vunpack.c.l.b16 %v1530
        %v1788 = vunpack.c.l.b16 %v1531
        %v1789 = vunpack.c.l.b16 %v1532
        %v1790 = vunpack.c.l.b16 %v1533
        %v1791 = vunpack.c.l.b16 %v1534
        %v1792 = vunpack.c.l.b16 %v1535
        %v1793 = vunpack.c.l.b16 %v1536
        %v1794 = vunpack.c.l.b16 %v1537
        %v1795 = vunpack.c.l.b16 %v1538
        %v1796 = vunpack.c.l.b16 %v1539
        %v1797 = vunpack.c.l.b16 %v1540
        %v1798 = vunpack.c.l.b16 %v1541
        %v1799 = vunpack.c.l.b16 %v1542
        %v1800 = vunpack.c.l.b16 %v1543
        %v1801 = vunpack.c.l.b16 %v1544
        %v1802 = vunpack.c.l.b16 %v1545
        %v1803 = vunpack.c.l.b16 %v1546
        %v1804 = vunpack.c.l.b16 %v1547
        %v1805 = vunpack.c.l.b16 %v1548
        %v1806 = vunpack.c.l.b16 %v1549
        %v1807 = vunpack.c.l.b16 %v1550
        %v1808 = vunpack.c.l.b16 %v1551
        %v1809 = vunpack.c.l.b16 %v1552
        %v1810 = vunpack.c.l.b16 %v1553
        %v1811 = vunpack.c.l.b16 %v1554
        %v1812 = vunpack.c.l.b16 %v1555
        %v1813 = vunpack.c.l.b16 %v1556
        %v1814 = vunpack.c.l.b16 %v1557
        %v1815 = vunpack.c.l.b16 %v1558
        %v1816 = vunpack.c.l.b16 %v1559
        %v1817 = vunpack.c.l.b16 %v1560
        %v1818 = vunpack.c.l.b16 %v1561
        %v1819 = vunpack.c.l.b16 %v1562
        %v1820 = vunpack.c.l.b16 %v1563
        %v1821 = vpack.c.b16 %v1694, %v1693
        %v1822 = vpack.c.b16 %v1696, %v1695
        %v1823 = vpack.c.b16 %v1698, %v1697
        %v1824 = vpack.c.b16 %v1700, %v1699
        %v1825 = vpack.c.b16 %v1702, %v1701
        %v1826 = vpack.c.b16 %v1704, %v1703
        %v1827 = vpack.c.b16 %v1706, %v1705
        %v1828 = vpack.c.b16 %v1708, %v1707
        %v1829 = vpack.c.b16 %v1710, %v1709
        %v1830 = vpack.c.b16 %v1712, %v1711
        %v1831 = vpack.c.b16 %v1714, %v1713
        %v1832 = vpack.c.b16 %v1716, %v1715
        %v1833 = vpack.c.b16 %v1718, %v1717
        %v1834 = vpack.c.b16 %v1720, %v1719
        %v1835 = vpack.c.b16 %v1722, %v1721
        %v1836 = vpack.c.b16 %v1724, %v1723
        %v1837 = vpack.c.b16 %v1726, %v1725
        %v1838 = vpack.c.b16 %v1728, %v1727
        %v1839 = vpack.c.b16 %v1730, %v1729
        %v1840 = vpack.c.b16 %v1732, %v1731
        %v1841 = vpack.c.b16 %v1734, %v1733
        %v1842 = vpack.c.b16 %v1736, %v1735
        %v1843 = vpack.c.b16 %v1738, %v1737
        %v1844 = vpack.c.b16 %v1740, %v1739
        %v1845 = vpack.c.b16 %v1742, %v1741
        %v1846 = vpack.c.b16 %v1744, %v1743
        %v1847 = vpack.c.b16 %v1746, %v1745
        %v1848 = vpack.c.b16 %v1748, %v1747
        %v1849 = vpack.c.b16 %v1750, %v1749
        %v1850 = vpack.c.b16 %v1752, %v1751
        %v1851 = vpack.c.b16 %v1754, %v1753
        %v1852 = vpack.c.b16 %v1756, %v1755
        %v1853 = vpack.c.b16 %v1758, %v1757
        %v1854 = vpack.c.b16 %v1760, %v1759
        %v1855 = vpack.c.b16 %v1762, %v1761
        %v1856 = vpack.c.b16 %v1764, %v1763
        %v1857 = vpack.c.b16 %v1766, %v1765
        %v1858 = vpack.c.b16 %v1768, %v1767
        %v1859 = vpack.c.b16 %v1770, %v1769
        %v1860 = vpack.c.b16 %v1772, %v1771
        %v1861 = vpack.c.b16 %v1774, %v1773
        %v1862 = vpack.c.b16 %v1776, %v1775
        %v1863 = vpack.c.b16 %v1778, %v1777
        %v1864 = vpack.c.b16 %v1780, %v1779
        %v1865 = vpack.c.b16 %v1782, %v1781
        %v1866 = vpack.c.b16 %v1784, %v1783
        %v1867 = vpack.c.b16 %v1786, %v1785
        %v1868 = vpack.c.b16 %v1788, %v1787
        %v1869 = vpack.c.b16 %v1790, %v1789
        %v1870 = vpack.c.b16 %v1792, %v1791
        %v1871 = vpack.c.b16 %v1794, %v1793
        %v1872 = vpack.c.b16 %v1796, %v1795
        %v1873 = vpack.c.b16 %v1798, %v1797
        %v1874 = vpack.c.b16 %v1800, %v1799
        %v1875 = vpack.c.b16 %v1802, %v1801
        %v1876 = vpack.c.b16 %v1804, %v1803
        %v1877 = vpack.c.b16 %v1806, %v1805
        %v1878 = vpack.c.b16 %v1808, %v1807
        %v1879 = vpack.c.b16 %v1810, %v1809
        %v1880 = vpack.c.b16 %v1812, %v1811
        %v1881 = vpack.c.b16 %v1814, %v1813
        %v1882 = vpack.c.b16 %v1816, %v1815
        %v1883 = vpack.c.b16 %v1818, %v1817
        %v1884 = vpack.c.b16 %v1820, %v1819
        %1949 = vmatprep.subr.bf16.mxu0 0
        %1950 = vmatpush1.bf16.msra.mxu0 %v1821
        %1951 = vmatprep.subr.bf16.mxu0 0
        %1952 = vmatpush1.bf16.msra.mxu0 %v1822
        %1953 = vmatprep.subr.bf16.mxu0 0
        %1954 = vmatpush1.bf16.msra.mxu0 %v1823
        %1955 = vmatprep.subr.bf16.mxu0 0
        %1956 = vmatpush1.bf16.msra.mxu0 %v1824
        %1957 = vmatprep.subr.bf16.mxu0 0
        %1958 = vmatpush1.bf16.msra.mxu0 %v1825
        %1959 = vmatprep.subr.bf16.mxu0 0
        %1960 = vmatpush1.bf16.msra.mxu0 %v1826
        %1961 = vmatprep.subr.bf16.mxu0 0
        %1962 = vmatpush1.bf16.msra.mxu0 %v1827
        %1963 = vmatprep.subr.bf16.mxu0 0
        %1964 = vmatpush1.bf16.msra.mxu0 %v1828
        %1965 = vmatprep.subr.bf16.mxu0 0
        %1966 = vmatpush1.bf16.msra.mxu0 %v1829
        %1967 = vmatprep.subr.bf16.mxu0 0
        %1968 = vmatpush1.bf16.msra.mxu0 %v1830
        %1969 = vmatprep.subr.bf16.mxu0 0
        %1970 = vmatpush1.bf16.msra.mxu0 %v1831
        %1971 = vmatprep.subr.bf16.mxu0 0
        %1972 = vmatpush1.bf16.msra.mxu0 %v1832
        %1973 = vmatprep.subr.bf16.mxu0 0
        %1974 = vmatpush1.bf16.msra.mxu0 %v1833
        %1975 = vmatprep.subr.bf16.mxu0 0
        %1976 = vmatpush1.bf16.msra.mxu0 %v1834
        %1977 = vmatprep.subr.bf16.mxu0 0
        %1978 = vmatpush1.bf16.msra.mxu0 %v1835
        %1979 = vmatprep.subr.bf16.mxu0 0
        %1980 = vmatpush1.bf16.msra.mxu0 %v1836
        %1981 = vmatprep.mubr.bf16.mxu0 %v1429
        %1982 = vmatmul.mubr.bf16.gmra.mrb[0].mxu0 %v1428
        %v1983 = vpop.f32.mrb[0].mxu0
        %v1984 = vadd.f32 %v1564, %v1983
        %v1985 = vpop.f32.mrb[0].mxu0
        %v1986 = vpop.f32.mrb[0].mxu0
        %v1987 = vpop.f32.mrb[0].mxu0
        %1988 = vdwg.mxu0
        %1989 = vmatprep.subr.bf16.mxu0 0
        %1990 = vmatpush1.bf16.msra.mxu0 %v1837
        %1991 = vmatprep.subr.bf16.mxu0 0
        %1992 = vmatpush1.bf16.msra.mxu0 %v1838
        %1993 = vmatprep.subr.bf16.mxu0 0
        %1994 = vmatpush1.bf16.msra.mxu0 %v1839
        %1995 = vmatprep.subr.bf16.mxu0 0
        %1996 = vmatpush1.bf16.msra.mxu0 %v1840
        %1997 = vmatprep.subr.bf16.mxu0 0
        %1998 = vmatpush1.bf16.msra.mxu0 %v1841
        %1999 = vmatprep.subr.bf16.mxu0 0
        %2000 = vmatpush1.bf16.msra.mxu0 %v1842
        %2001 = vmatprep.subr.bf16.mxu0 0
        %2002 = vmatpush1.bf16.msra.mxu0 %v1843
        %2003 = vmatprep.subr.bf16.mxu0 0
        %2004 = vmatpush1.bf16.msra.mxu0 %v1844
        %2005 = vmatprep.subr.bf16.mxu0 0
        %2006 = vmatpush1.bf16.msra.mxu0 %v1845
        %2007 = vmatprep.subr.bf16.mxu0 0
        %2008 = vmatpush1.bf16.msra.mxu0 %v1846
        %2009 = vmatprep.subr.bf16.mxu0 0
        %2010 = vmatpush1.bf16.msra.mxu0 %v1847
        %2011 = vmatprep.subr.bf16.mxu0 0
        %2012 = vmatpush1.bf16.msra.mxu0 %v1848
        %2013 = vmatprep.subr.bf16.mxu0 0
        %2014 = vmatpush1.bf16.msra.mxu0 %v1849
        %2015 = vmatprep.subr.bf16.mxu0 0
        %2016 = vmatpush1.bf16.msra.mxu0 %v1850
        %2017 = vmatprep.subr.bf16.mxu0 0
        %2018 = vmatpush1.bf16.msra.mxu0 %v1851
        %2019 = vmatprep.subr.bf16.mxu0 0
        %2020 = vmatpush1.bf16.msra.mxu0 %v1852
        %2021 = vmatprep.mubr.bf16.mxu0 %v1431
        %2022 = vmatmul.mubr.bf16.gmra.mrb[0].mxu0 %v1430
        %v2023 = vpop.f32.mrb[0].mxu0
        %v2024 = vadd.f32 %v1984, %v2023
        %v2025 = vpop.f32.mrb[0].mxu0
        %v2026 = vpop.f32.mrb[0].mxu0
        %v2027 = vpop.f32.mrb[0].mxu0
        %2028 = vdwg.mxu0
        %2029 = vmatprep.subr.bf16.mxu0 0
        %2030 = vmatpush1.bf16.msra.mxu0 %v1853
        %2031 = vmatprep.subr.bf16.mxu0 0
        %2032 = vmatpush1.bf16.msra.mxu0 %v1854
        %2033 = vmatprep.subr.bf16.mxu0 0
        %2034 = vmatpush1.bf16.msra.mxu0 %v1855
        %2035 = vmatprep.subr.bf16.mxu0 0
        %2036 = vmatpush1.bf16.msra.mxu0 %v1856
        %2037 = vmatprep.subr.bf16.mxu0 0
        %2038 = vmatpush1.bf16.msra.mxu0 %v1857
        %2039 = vmatprep.subr.bf16.mxu0 0
        %2040 = vmatpush1.bf16.msra.mxu0 %v1858
        %2041 = vmatprep.subr.bf16.mxu0 0
        %2042 = vmatpush1.bf16.msra.mxu0 %v1859
        %2043 = vmatprep.subr.bf16.mxu0 0
        %2044 = vmatpush1.bf16.msra.mxu0 %v1860
        %2045 = vmatprep.subr.bf16.mxu0 0
        %2046 = vmatpush1.bf16.msra.mxu0 %v1861
        %2047 = vmatprep.subr.bf16.mxu0 0
        %2048 = vmatpush1.bf16.msra.mxu0 %v1862
        %2049 = vmatprep.subr.bf16.mxu0 0
        %2050 = vmatpush1.bf16.msra.mxu0 %v1863
        %2051 = vmatprep.subr.bf16.mxu0 0
        %2052 = vmatpush1.bf16.msra.mxu0 %v1864
        %2053 = vmatprep.subr.bf16.mxu0 0
        %2054 = vmatpush1.bf16.msra.mxu0 %v1865
        %2055 = vmatprep.subr.bf16.mxu0 0
        %2056 = vmatpush1.bf16.msra.mxu0 %v1866
        %2057 = vmatprep.subr.bf16.mxu0 0
        %2058 = vmatpush1.bf16.msra.mxu0 %v1867
        %2059 = vmatprep.subr.bf16.mxu0 0
        %2060 = vmatpush1.bf16.msra.mxu0 %v1868
        %2061 = vmatprep.mubr.bf16.mxu0 %v1433
        %2062 = vmatmul.mubr.bf16.gmra.mrb[0].mxu0 %v1432
        %v2063 = vpop.f32.mrb[0].mxu0
        %v2064 = vadd.f32 %v2024, %v2063
        %v2065 = vpop.f32.mrb[0].mxu0
        %v2066 = vpop.f32.mrb[0].mxu0
        %v2067 = vpop.f32.mrb[0].mxu0
        %2068 = vdwg.mxu0
        %2069 = vmatprep.subr.bf16.mxu0 0
        %2070 = vmatpush1.bf16.msra.mxu0 %v1869
        %2071 = vmatprep.subr.bf16.mxu0 0
        %2072 = vmatpush1.bf16.msra.mxu0 %v1870
        %2073 = vmatprep.subr.bf16.mxu0 0
        %2074 = vmatpush1.bf16.msra.mxu0 %v1871
        %2075 = vmatprep.subr.bf16.mxu0 0
        %2076 = vmatpush1.bf16.msra.mxu0 %v1872
        %2077 = vmatprep.subr.bf16.mxu0 0
        %2078 = vmatpush1.bf16.msra.mxu0 %v1873
        %2079 = vmatprep.subr.bf16.mxu0 0
        %2080 = vmatpush1.bf16.msra.mxu0 %v1874
        %2081 = vmatprep.subr.bf16.mxu0 0
        %2082 = vmatpush1.bf16.msra.mxu0 %v1875
        %2083 = vmatprep.subr.bf16.mxu0 0
        %2084 = vmatpush1.bf16.msra.mxu0 %v1876
        %2085 = vmatprep.subr.bf16.mxu0 0
        %2086 = vmatpush1.bf16.msra.mxu0 %v1877
        %2087 = vmatprep.subr.bf16.mxu0 0
        %2088 = vmatpush1.bf16.msra.mxu0 %v1878
        %2089 = vmatprep.subr.bf16.mxu0 0
        %2090 = vmatpush1.bf16.msra.mxu0 %v1879
        %2091 = vmatprep.subr.bf16.mxu0 0
        %2092 = vmatpush1.bf16.msra.mxu0 %v1880
        %2093 = vmatprep.subr.bf16.mxu0 0
        %2094 = vmatpush1.bf16.msra.mxu0 %v1881
        %2095 = vmatprep.subr.bf16.mxu0 0
        %2096 = vmatpush1.bf16.msra.mxu0 %v1882
        %2097 = vmatprep.subr.bf16.mxu0 0
        %2098 = vmatpush1.bf16.msra.mxu0 %v1883
        %2099 = vmatprep.subr.bf16.mxu0 0
        %2100 = vmatpush1.bf16.msra.mxu0 %v1884
        %2101 = vmatprep.mubr.bf16.mxu0 %v1435
        %2102 = vmatmul.mubr.bf16.gmra.mrb[0].mxu0 %v1434
        %v2103 = vpop.f32.mrb[0].mxu0
        %v2104 = vadd.f32 %v2064, %v2103
        %v2105 = vpop.f32.mrb[0].mxu0
        %v2106 = vpop.f32.mrb[0].mxu0
        %v2107 = vpop.f32.mrb[0].mxu0
        %2108 = vdwg.mxu0
        %v2109 = vmax.f32 %v2104, 0.0
        %2110 = vst [vmem:[%s358] sm:$0x1] %v2109
        %p2111 = scmp.lt.s32.totalorder %s22, 1
        %s2112 = scalar_select %p2111, %s22, 1
        %s2113 = scalar_lea.vmem %s9, %s2112
        // Predicated region
        $region65: #{ae_pointnet_dcg_forward.3} parent=55 // pred_check
          %p2114 = pneg %p234
        $region66: #{ae_pointnet_dcg_forward.3} parent=55 // pred_check_branch
          %2116 = sbr.rel (%p2114) target = $region68
        $region67: #{ae_pointnet_dcg_forward.3} parent=55 // pred_region
          _
        $region68: #{ae_pointnet_dcg_forward.3} parent=55 // pred_fallthru
          _
      $region56: #{ae_pointnet_dcg_forward.3} parent=5 // pred_fallthru
        _
      %p2117 = scmp.le.s32.totalorder 2, %s17
      // Predicated region
      $region69: #{ae_pointnet_dcg_forward.3} parent=5 // pred_check
        %p2118 = pneg %p2117
      $region70: #{ae_pointnet_dcg_forward.3} parent=5 // pred_check_branch
        %2120 = sbr.rel (%p2118) target = $region72
      $region71: #{ae_pointnet_dcg_forward.3} parent=5 // pred_region
        %s2121 = ssub.s32 %s17, 2
        // Predicated region
        $region73: #{ae_pointnet_dcg_forward.3} parent=71 // pred_check
          %p2122 = pneg %p240
        $region74: #{ae_pointnet_dcg_forward.3} parent=71 // pred_check_branch
          %2124 = sbr.rel (%p2122) target = $region76
        $region75: #{ae_pointnet_dcg_forward.3} parent=71 // pred_region
          %p2125 = scmp.lt.s32.totalorder %s23, 1
          %s2126 = scalar_select %p2125, %s23, 1
          %s2127 = scalar_lea.vmem %s9, %s2126
        $region76: #{ae_pointnet_dcg_forward.3} parent=71 // pred_fallthru
          _
      $region72: #{ae_pointnet_dcg_forward.3} parent=5 // pred_fallthru
        _
    $region6: #{ae_pointnet_dcg_forward.3} parent=1 // loop_footer
      %s21 = sadd.s32 1, %s17
    $region7: #{ae_pointnet_dcg_forward.3} parent=1 // loop_footer_branch
      %16 = sbr.rel target = $region3
    $region8: #{ae_pointnet_dcg_forward.3} parent=1 // loop_exit
      _
    %2128 = vsyncpa [#allocation3], 1
    %s2129 = scalar_lea.sflag [#allocation3], 1
    %2130 = vsyncpa %s2129, 1
    %2131 = vsyncpa [#allocation5], 1

// kernel: ae_pointnet_dcg_forward.5
$region0: #{ae_pointnet_dcg_forward.5}
  #allocation0 [shape = 'u32[]', space=smem, size = 0x4, offset = 0x4, fixed_abs, tag = 'smem constant byte address 0x4 - core index']
  #allocation1 [shape = 'u32[144,128]{1,0:T(1,128)}', space=vmem, size = 0x12000, scoped, tag = 'internal scratch']
  %s0 = inlined_call_operand.vmem [shape: f32[64,8], index: 0, kind: input, shape index: {}]
  %s1 = inlined_call_operand.vmem [shape: f32[2,128], index: 1, kind: input, shape index: {}]
  %s2 = inlined_call_operand.vmem [shape: bf16[8,84], index: 2, kind: input, shape index: {}]
  %s3 = inlined_call_operand.vmem [shape: f32[1,84], index: 3, kind: input, shape index: {}]
  %s4 = inlined_call_operand.vmem [shape: bf16[2,8,215], index: 4, kind: input, shape index: {}]
  %s5 = inlined_call_operand.vmem [shape: bf16[2,84,215], index: 5, kind: input, shape index: {}]
  %s6 = inlined_call_operand.vmem [shape: bf16[2,128,215], index: 6, kind: input, shape index: {}]
  %s7 = inlined_call_operand.vmem [shape: f32[2,1,215], index: 7, kind: input, shape index: {}]
  %s8 = inlined_call_operand.vmem [shape: bf16[2,215,107], index: 8, kind: input, shape index: {}]
  %s9 = inlined_call_operand.vmem [shape: f32[2,1,107], index: 9, kind: input, shape index: {}]
  %s10 = inlined_call_operand.vmem [shape: bf16[2,107,53], index: 10, kind: input, shape index: {}]
  %s11 = inlined_call_operand.vmem [shape: f32[2,1,53], index: 11, kind: input, shape index: {}]
  %s12 = inlined_call_operand.vmem [shape: bf16[2,53,8], index: 12, kind: input, shape index: {}]
  %s13 = inlined_call_operand.vmem [shape: f32[2,1,8], index: 13, kind: input, shape index: {}]
  %s14 = inlined_call_operand.vmem [shape: f32[2,64,8], index: 14, kind: output, shape index: {}]
  %s15 = sld [smem:[#allocation0]]
  $region89: #{ae_pointnet_dcg_forward.5} parent=0
    _
  %s17 = ssub.s32 1, %s15
  %s18 = scalar_select 0, %s17, %s15
  loop: start=0, step=1, limit=4
  $region2: #{ae_pointnet_dcg_forward.5} parent=0 // loop_pre_header
    _
  $region3: #{ae_pointnet_dcg_forward.5} parent=0 // loop_header
    %s20 = sphi 0, %s24
    %p21 = scmp.ge.s32.totalorder %s20, 4
    %s28 = sphi 0, %s28
    %s30 = sphi 0, %s28
    %s31 = sphi 0, %s30
    %s45 = sphi 0, %s31
    %s49 = sphi 0, %s49
    %s51 = sphi 0, %s49
    %s52 = sphi 0, %s51
    %s66 = sphi 0, %s52
    %s70 = sphi 0, %s70
    %s72 = sphi 0, %s70
    %s73 = sphi 0, %s72
    %s87 = sphi 0, %s73
    %s91 = sphi 0, %s91
    %s93 = sphi 0, %s91
    %s94 = sphi 0, %s93
    %s108 = sphi 0, %s94
    %s114 = sphi 0, %s116
    %s117 = sphi 0, %s114
    %s118 = sphi 0, %s117
    %s134 = sphi 0, %s118
    %s140 = sphi 0, %s142
    %s143 = sphi 0, %s140
    %s144 = sphi 0, %s143
    %s160 = sphi 0, %s144
    %s166 = sphi 0, %s168
    %s169 = sphi 0, %s166
    %s170 = sphi 0, %s169
    %s186 = sphi 0, %s170
    %s192 = sphi 0, %s194
    %s195 = sphi 0, %s192
    %s196 = sphi 0, %s195
    %s212 = sphi 0, %s196
    %s218 = sphi 0, %s220
    %s221 = sphi 0, %s218
    %s222 = sphi 0, %s221
    %s238 = sphi 0, %s222
    %s244 = sphi 0, %s246
    %s247 = sphi 0, %s244
    %s248 = sphi 0, %s247
    %s264 = sphi 0, %s248
    %s270 = sphi 0, %s272
    %s273 = sphi 0, %s270
    %s274 = sphi 0, %s273
    %s290 = sphi 0, %s274
    %s296 = sphi 0, %s298
    %s299 = sphi 0, %s296
    %s300 = sphi 0, %s299
    %s316 = sphi 0, %s300
    %s322 = sphi 0, %s324
    %s325 = sphi 0, %s322
    %s326 = sphi 0, %s325
    %s342 = sphi 0, %s326
    %s348 = sphi 0, %s350
    %s351 = sphi 0, %s348
    %s352 = sphi 0, %s351
    %s368 = sphi 0, %s352
    %s374 = sphi 0, %s376
    %s377 = sphi 0, %s374
    %s378 = sphi 0, %s377
    %s394 = sphi 0, %s378
  $region4: #{ae_pointnet_dcg_forward.5} parent=0 // loop_header_branch
    %23 = sbr.rel (%p21) target = $region8
  $region5: #{ae_pointnet_dcg_forward.5} parent=0 // loop_body
    %s25 = ssub.s32 %s20, 1
    %s26 = ssub.s32 %s20, 2
    %s27 = sadd.s32 %s20, 1
    %s29 = sadd.s32 %s28, 1
    %p32 = scmp.eq.s32.totalorder %s20, 1
    %p33 = scmp.ne.s32.totalorder %s28, %s30
    %p34 = scmp.eq.s32.totalorder %s20, 0
    %p35 = por %p33, %p34
    %p36 = scmp.ne.s32.totalorder %s28, %s30
    %p37 = scmp.eq.s32.totalorder %s25, 1
    %p38 = por %p36, %p37
    %p39 = scmp.ne.s32.totalorder %s30, %s31
    %p40 = scmp.eq.s32.totalorder %s25, 0
    %p41 = por %p39, %p40
    %p42 = scmp.ne.s32.totalorder %s30, %s31
    %p43 = scmp.eq.s32.totalorder %s26, 1
    %p44 = por %p42, %p43
    %p46 = scmp.ne.s32.totalorder %s31, %s45
    %p47 = scmp.eq.s32.totalorder %s26, 0
    %p48 = por %p46, %p47
    %s50 = sadd.s32 %s49, 1
    %p53 = scmp.eq.s32.totalorder %s20, 1
    %p54 = scmp.ne.s32.totalorder %s49, %s51
    %p55 = scmp.eq.s32.totalorder %s20, 0
    %p56 = por %p54, %p55
    %p57 = scmp.ne.s32.totalorder %s49, %s51
    %p58 = scmp.eq.s32.totalorder %s25, 1
    %p59 = por %p57, %p58
    %p60 = scmp.ne.s32.totalorder %s51, %s52
    %p61 = scmp.eq.s32.totalorder %s25, 0
    %p62 = por %p60, %p61
    %p63 = scmp.ne.s32.totalorder %s51, %s52
    %p64 = scmp.eq.s32.totalorder %s26, 1
    %p65 = por %p63, %p64
    %p67 = scmp.ne.s32.totalorder %s52, %s66
    %p68 = scmp.eq.s32.totalorder %s26, 0
    %p69 = por %p67, %p68
    %s71 = sadd.s32 %s70, 1
    %p74 = scmp.eq.s32.totalorder %s20, 1
    %p75 = scmp.ne.s32.totalorder %s70, %s72
    %p76 = scmp.eq.s32.totalorder %s20, 0
    %p77 = por %p75, %p76
    %p78 = scmp.ne.s32.totalorder %s70, %s72
    %p79 = scmp.eq.s32.totalorder %s25, 1
    %p80 = por %p78, %p79
    %p81 = scmp.ne.s32.totalorder %s72, %s73
    %p82 = scmp.eq.s32.totalorder %s25, 0
    %p83 = por %p81, %p82
    %p84 = scmp.ne.s32.totalorder %s72, %s73
    %p85 = scmp.eq.s32.totalorder %s26, 1
    %p86 = por %p84, %p85
    %p88 = scmp.ne.s32.totalorder %s73, %s87
    %p89 = scmp.eq.s32.totalorder %s26, 0
    %p90 = por %p88, %p89
    %s92 = sadd.s32 %s91, 1
    %p95 = scmp.eq.s32.totalorder %s20, 1
    %p96 = scmp.ne.s32.totalorder %s91, %s93
    %p97 = scmp.eq.s32.totalorder %s20, 0
    %p98 = por %p96, %p97
    %p99 = scmp.ne.s32.totalorder %s91, %s93
    %p100 = scmp.eq.s32.totalorder %s25, 1
    %p101 = por %p99, %p100
    %p102 = scmp.ne.s32.totalorder %s93, %s94
    %p103 = scmp.eq.s32.totalorder %s25, 0
    %p104 = por %p102, %p103
    %p105 = scmp.ne.s32.totalorder %s93, %s94
    %p106 = scmp.eq.s32.totalorder %s26, 1
    %p107 = por %p105, %p106
    %p109 = scmp.ne.s32.totalorder %s94, %s108
    %p110 = scmp.eq.s32.totalorder %s26, 0
    %p111 = por %p109, %p110
    %s112 = ssub.s32 %s20, %s27
    %p113 = scmp.eq.s32.totalorder %s112, 0
    %s115 = sadd.s32 %s114, 1
    %s116 = scalar_select %p113, %s114, %s115
    %p119 = pneg %p113
    %p120 = scmp.eq.s32.totalorder %s20, 1
    %p121 = por %p119, %p120
    %p122 = scmp.ne.s32.totalorder %s114, %s117
    %p123 = scmp.eq.s32.totalorder %s20, 0
    %p124 = por %p122, %p123
    %p125 = scmp.ne.s32.totalorder %s114, %s117
    %p126 = scmp.eq.s32.totalorder %s25, 1
    %p127 = por %p125, %p126
    %p128 = scmp.ne.s32.totalorder %s117, %s118
    %p129 = scmp.eq.s32.totalorder %s25, 0
    %p130 = por %p128, %p129
    %p131 = scmp.ne.s32.totalorder %s117, %s118
    %p132 = scmp.eq.s32.totalorder %s26, 1
    %p133 = por %p131, %p132
    %p135 = scmp.ne.s32.totalorder %s118, %s134
    %p136 = scmp.eq.s32.totalorder %s26, 0
    %p137 = por %p135, %p136
    %s138 = ssub.s32 %s20, %s27
    %p139 = scmp.eq.s32.totalorder %s138, 0
    %s141 = sadd.s32 %s140, 1
    %s142 = scalar_select %p139, %s140, %s141
    %p145 = pneg %p139
    %p146 = scmp.eq.s32.totalorder %s20, 1
    %p147 = por %p145, %p146
    %p148 = scmp.ne.s32.totalorder %s140, %s143
    %p149 = scmp.eq.s32.totalorder %s20, 0
    %p150 = por %p148, %p149
    %p151 = scmp.ne.s32.totalorder %s140, %s143
    %p152 = scmp.eq.s32.totalorder %s25, 1
    %p153 = por %p151, %p152
    %p154 = scmp.ne.s32.totalorder %s143, %s144
    %p155 = scmp.eq.s32.totalorder %s25, 0
    %p156 = por %p154, %p155
    %p157 = scmp.ne.s32.totalorder %s143, %s144
    %p158 = scmp.eq.s32.totalorder %s26, 1
    %p159 = por %p157, %p158
    %p161 = scmp.ne.s32.totalorder %s144, %s160
    %p162 = scmp.eq.s32.totalorder %s26, 0
    %p163 = por %p161, %p162
    %s164 = ssub.s32 %s20, %s27
    %p165 = scmp.eq.s32.totalorder %s164, 0
    %s167 = sadd.s32 %s166, 1
    %s168 = scalar_select %p165, %s166, %s167
    %p171 = pneg %p165
    %p172 = scmp.eq.s32.totalorder %s20, 1
    %p173 = por %p171, %p172
    %p174 = scmp.ne.s32.totalorder %s166, %s169
    %p175 = scmp.eq.s32.totalorder %s20, 0
    %p176 = por %p174, %p175
    %p177 = scmp.ne.s32.totalorder %s166, %s169
    %p178 = scmp.eq.s32.totalorder %s25, 1
    %p179 = por %p177, %p178
    %p180 = scmp.ne.s32.totalorder %s169, %s170
    %p181 = scmp.eq.s32.totalorder %s25, 0
    %p182 = por %p180, %p181
    %p183 = scmp.ne.s32.totalorder %s169, %s170
    %p184 = scmp.eq.s32.totalorder %s26, 1
    %p185 = por %p183, %p184
    %p187 = scmp.ne.s32.totalorder %s170, %s186
    %p188 = scmp.eq.s32.totalorder %s26, 0
    %p189 = por %p187, %p188
    %s190 = ssub.s32 %s20, %s27
    %p191 = scmp.eq.s32.totalorder %s190, 0
    %s193 = sadd.s32 %s192, 1
    %s194 = scalar_select %p191, %s192, %s193
    %p197 = pneg %p191
    %p198 = scmp.eq.s32.totalorder %s20, 1
    %p199 = por %p197, %p198
    %p200 = scmp.ne.s32.totalorder %s192, %s195
    %p201 = scmp.eq.s32.totalorder %s20, 0
    %p202 = por %p200, %p201
    %p203 = scmp.ne.s32.totalorder %s192, %s195
    %p204 = scmp.eq.s32.totalorder %s25, 1
    %p205 = por %p203, %p204
    %p206 = scmp.ne.s32.totalorder %s195, %s196
    %p207 = scmp.eq.s32.totalorder %s25, 0
    %p208 = por %p206, %p207
    %p209 = scmp.ne.s32.totalorder %s195, %s196
    %p210 = scmp.eq.s32.totalorder %s26, 1
    %p211 = por %p209, %p210
    %p213 = scmp.ne.s32.totalorder %s196, %s212
    %p214 = scmp.eq.s32.totalorder %s26, 0
    %p215 = por %p213, %p214
    %s216 = ssub.s32 %s20, %s27
    %p217 = scmp.eq.s32.totalorder %s216, 0
    %s219 = sadd.s32 %s218, 1
    %s220 = scalar_select %p217, %s218, %s219
    %p223 = pneg %p217
    %p224 = scmp.eq.s32.totalorder %s20, 1
    %p225 = por %p223, %p224
    %p226 = scmp.ne.s32.totalorder %s218, %s221
    %p227 = scmp.eq.s32.totalorder %s20, 0
    %p228 = por %p226, %p227
    %p229 = scmp.ne.s32.totalorder %s218, %s221
    %p230 = scmp.eq.s32.totalorder %s25, 1
    %p231 = por %p229, %p230
    %p232 = scmp.ne.s32.totalorder %s221, %s222
    %p233 = scmp.eq.s32.totalorder %s25, 0
    %p234 = por %p232, %p233
    %p235 = scmp.ne.s32.totalorder %s221, %s222
    %p236 = scmp.eq.s32.totalorder %s26, 1
    %p237 = por %p235, %p236
    %p239 = scmp.ne.s32.totalorder %s222, %s238
    %p240 = scmp.eq.s32.totalorder %s26, 0
    %p241 = por %p239, %p240
    %s242 = ssub.s32 %s20, %s27
    %p243 = scmp.eq.s32.totalorder %s242, 0
    %s245 = sadd.s32 %s244, 1
    %s246 = scalar_select %p243, %s244, %s245
    %p249 = pneg %p243
    %p250 = scmp.eq.s32.totalorder %s20, 1
    %p251 = por %p249, %p250
    %p252 = scmp.ne.s32.totalorder %s244, %s247
    %p253 = scmp.eq.s32.totalorder %s20, 0
    %p254 = por %p252, %p253
    %p255 = scmp.ne.s32.totalorder %s244, %s247
    %p256 = scmp.eq.s32.totalorder %s25, 1
    %p257 = por %p255, %p256
    %p258 = scmp.ne.s32.totalorder %s247, %s248
    %p259 = scmp.eq.s32.totalorder %s25, 0
    %p260 = por %p258, %p259
    %p261 = scmp.ne.s32.totalorder %s247, %s248
    %p262 = scmp.eq.s32.totalorder %s26, 1
    %p263 = por %p261, %p262
    %p265 = scmp.ne.s32.totalorder %s248, %s264
    %p266 = scmp.eq.s32.totalorder %s26, 0
    %p267 = por %p265, %p266
    %s268 = ssub.s32 %s20, %s27
    %p269 = scmp.eq.s32.totalorder %s268, 0
    %s271 = sadd.s32 %s270, 1
    %s272 = scalar_select %p269, %s270, %s271
    %p275 = pneg %p269
    %p276 = scmp.eq.s32.totalorder %s20, 1
    %p277 = por %p275, %p276
    %p278 = scmp.ne.s32.totalorder %s270, %s273
    %p279 = scmp.eq.s32.totalorder %s20, 0
    %p280 = por %p278, %p279
    %p281 = scmp.ne.s32.totalorder %s270, %s273
    %p282 = scmp.eq.s32.totalorder %s25, 1
    %p283 = por %p281, %p282
    %p284 = scmp.ne.s32.totalorder %s273, %s274
    %p285 = scmp.eq.s32.totalorder %s25, 0
    %p286 = por %p284, %p285
    %p287 = scmp.ne.s32.totalorder %s273, %s274
    %p288 = scmp.eq.s32.totalorder %s26, 1
    %p289 = por %p287, %p288
    %p291 = scmp.ne.s32.totalorder %s274, %s290
    %p292 = scmp.eq.s32.totalorder %s26, 0
    %p293 = por %p291, %p292
    %s294 = ssub.s32 %s20, %s27
    %p295 = scmp.eq.s32.totalorder %s294, 0
    %s297 = sadd.s32 %s296, 1
    %s298 = scalar_select %p295, %s296, %s297
    %p301 = pneg %p295
    %p302 = scmp.eq.s32.totalorder %s20, 1
    %p303 = por %p301, %p302
    %p304 = scmp.ne.s32.totalorder %s296, %s299
    %p305 = scmp.eq.s32.totalorder %s20, 0
    %p306 = por %p304, %p305
    %p307 = scmp.ne.s32.totalorder %s296, %s299
    %p308 = scmp.eq.s32.totalorder %s25, 1
    %p309 = por %p307, %p308
    %p310 = scmp.ne.s32.totalorder %s299, %s300
    %p311 = scmp.eq.s32.totalorder %s25, 0
    %p312 = por %p310, %p311
    %p313 = scmp.ne.s32.totalorder %s299, %s300
    %p314 = scmp.eq.s32.totalorder %s26, 1
    %p315 = por %p313, %p314
    %p317 = scmp.ne.s32.totalorder %s300, %s316
    %p318 = scmp.eq.s32.totalorder %s26, 0
    %p319 = por %p317, %p318
    %s320 = ssub.s32 %s20, %s27
    %p321 = scmp.eq.s32.totalorder %s320, 0
    %s323 = sadd.s32 %s322, 1
    %s324 = scalar_select %p321, %s322, %s323
    %p327 = pneg %p321
    %p328 = scmp.eq.s32.totalorder %s20, 1
    %p329 = por %p327, %p328
    %p330 = scmp.ne.s32.totalorder %s322, %s325
    %p331 = scmp.eq.s32.totalorder %s20, 0
    %p332 = por %p330, %p331
    %p333 = scmp.ne.s32.totalorder %s322, %s325
    %p334 = scmp.eq.s32.totalorder %s25, 1
    %p335 = por %p333, %p334
    %p336 = scmp.ne.s32.totalorder %s325, %s326
    %p337 = scmp.eq.s32.totalorder %s25, 0
    %p338 = por %p336, %p337
    %p339 = scmp.ne.s32.totalorder %s325, %s326
    %p340 = scmp.eq.s32.totalorder %s26, 1
    %p341 = por %p339, %p340
    %p343 = scmp.ne.s32.totalorder %s326, %s342
    %p344 = scmp.eq.s32.totalorder %s26, 0
    %p345 = por %p343, %p344
    %s346 = ssub.s32 %s20, %s27
    %p347 = scmp.eq.s32.totalorder %s346, 0
    %s349 = sadd.s32 %s348, 1
    %s350 = scalar_select %p347, %s348, %s349
    %p353 = pneg %p347
    %p354 = scmp.eq.s32.totalorder %s20, 1
    %p355 = por %p353, %p354
    %p356 = scmp.ne.s32.totalorder %s348, %s351
    %p357 = scmp.eq.s32.totalorder %s20, 0
    %p358 = por %p356, %p357
    %p359 = scmp.ne.s32.totalorder %s348, %s351
    %p360 = scmp.eq.s32.totalorder %s25, 1
    %p361 = por %p359, %p360
    %p362 = scmp.ne.s32.totalorder %s351, %s352
    %p363 = scmp.eq.s32.totalorder %s25, 0
    %p364 = por %p362, %p363
    %p365 = scmp.ne.s32.totalorder %s351, %s352
    %p366 = scmp.eq.s32.totalorder %s26, 1
    %p367 = por %p365, %p366
    %p369 = scmp.ne.s32.totalorder %s352, %s368
    %p370 = scmp.eq.s32.totalorder %s26, 0
    %p371 = por %p369, %p370
    %s372 = ssub.s32 %s20, %s27
    %p373 = scmp.eq.s32.totalorder %s372, 0
    %s375 = sadd.s32 %s374, 1
    %s376 = scalar_select %p373, %s374, %s375
    %p379 = pneg %p373
    %p380 = scmp.eq.s32.totalorder %s20, 1
    %p381 = por %p379, %p380
    %p382 = scmp.ne.s32.totalorder %s374, %s377
    %p383 = scmp.eq.s32.totalorder %s20, 0
    %p384 = por %p382, %p383
    %p385 = scmp.ne.s32.totalorder %s374, %s377
    %p386 = scmp.eq.s32.totalorder %s25, 1
    %p387 = por %p385, %p386
    %p388 = scmp.ne.s32.totalorder %s377, %s378
    %p389 = scmp.eq.s32.totalorder %s25, 0
    %p390 = por %p388, %p389
    %p391 = scmp.ne.s32.totalorder %s377, %s378
    %p392 = scmp.eq.s32.totalorder %s26, 1
    %p393 = por %p391, %p392
    %p395 = scmp.ne.s32.totalorder %s378, %s394
    %p396 = scmp.eq.s32.totalorder %s26, 0
    %p397 = por %p395, %p396
    %p398 = scmp.le.s32.totalorder 1, %s20
    %p399 = scmp.lt.s32.totalorder %s20, 3
    %p400 = pnand %p398, %p399
    %p401 = pneg %p400
    // Predicated region
    $region9: #{ae_pointnet_dcg_forward.5} parent=5 // pred_check
      _
    $region10: #{ae_pointnet_dcg_forward.5} parent=5 // pred_check_branch
      %403 = sbr.rel (%p400) target = $region12
    $region11: #{ae_pointnet_dcg_forward.5} parent=5 // pred_region
      %s404 = ssub.s32 %s20, 1
      // Predicated region
      $region13: #{ae_pointnet_dcg_forward.5} parent=11 // pred_check
        %p405 = pneg %p41
      $region14: #{ae_pointnet_dcg_forward.5} parent=11 // pred_check_branch
        %407 = sbr.rel (%p405) target = $region16
      $region15: #{ae_pointnet_dcg_forward.5} parent=11 // pred_region
        _
      $region16: #{ae_pointnet_dcg_forward.5} parent=11 // pred_fallthru
        _
      // Predicated region
      $region17: #{ae_pointnet_dcg_forward.5} parent=11 // pred_check
        %p408 = pneg %p62
      $region18: #{ae_pointnet_dcg_forward.5} parent=11 // pred_check_branch
        %410 = sbr.rel (%p408) target = $region20
      $region19: #{ae_pointnet_dcg_forward.5} parent=11 // pred_region
        _
      $region20: #{ae_pointnet_dcg_forward.5} parent=11 // pred_fallthru
        _
      // Predicated region
      $region21: #{ae_pointnet_dcg_forward.5} parent=11 // pred_check
        %p411 = pneg %p83
      $region22: #{ae_pointnet_dcg_forward.5} parent=11 // pred_check_branch
        %413 = sbr.rel (%p411) target = $region24
      $region23: #{ae_pointnet_dcg_forward.5} parent=11 // pred_region
        _
      $region24: #{ae_pointnet_dcg_forward.5} parent=11 // pred_fallthru
        _
      // Predicated region
      $region25: #{ae_pointnet_dcg_forward.5} parent=11 // pred_check
        %p414 = pneg %p104
      $region26: #{ae_pointnet_dcg_forward.5} parent=11 // pred_check_branch
        %416 = sbr.rel (%p414) target = $region28
      $region27: #{ae_pointnet_dcg_forward.5} parent=11 // pred_region
        _
      $region28: #{ae_pointnet_dcg_forward.5} parent=11 // pred_fallthru
        _
    $region12: #{ae_pointnet_dcg_forward.5} parent=5 // pred_fallthru
      _
    %p417 = scmp.lt.s32.totalorder %s20, 2
    // Predicated region
    $region29: #{ae_pointnet_dcg_forward.5} parent=5 // pred_check
      %p418 = pneg %p417
    $region30: #{ae_pointnet_dcg_forward.5} parent=5 // pred_check_branch
      %420 = sbr.rel (%p418) target = $region32
    $region31: #{ae_pointnet_dcg_forward.5} parent=5 // pred_region
      // Predicated region
      $region33: #{ae_pointnet_dcg_forward.5} parent=31 // pred_check
        %p421 = pneg %p124
      $region34: #{ae_pointnet_dcg_forward.5} parent=31 // pred_check_branch
        %423 = sbr.rel (%p421) target = $region36
      $region35: #{ae_pointnet_dcg_forward.5} parent=31 // pred_region
        %p424 = scmp.lt.s32.totalorder %s20, 1
        %s425 = scalar_select %p424, %s20, 1
        %s426 = smul.addr %s425, 2
        %s427 = smul.addr %s426, 4
        %s428 = scalar_lea.vmem %s4, %s427
      $region36: #{ae_pointnet_dcg_forward.5} parent=31 // pred_fallthru
        _
      // Predicated region
      $region37: #{ae_pointnet_dcg_forward.5} parent=31 // pred_check
        %p429 = pneg %p150
      $region38: #{ae_pointnet_dcg_forward.5} parent=31 // pred_check_branch
        %431 = sbr.rel (%p429) target = $region40
      $region39: #{ae_pointnet_dcg_forward.5} parent=31 // pred_region
        %p432 = scmp.lt.s32.totalorder %s20, 1
        %s433 = scalar_select %p432, %s20, 1
        %s434 = smul.addr %s433, 22
        %s435 = smul.addr %s434, 4
        %s436 = scalar_lea.vmem %s5, %s435
      $region40: #{ae_pointnet_dcg_forward.5} parent=31 // pred_fallthru
        _
      // Predicated region
      $region41: #{ae_pointnet_dcg_forward.5} parent=31 // pred_check
        %p437 = pneg %p176
      $region42: #{ae_pointnet_dcg_forward.5} parent=31 // pred_check_branch
        %439 = sbr.rel (%p437) target = $region44
      $region43: #{ae_pointnet_dcg_forward.5} parent=31 // pred_region
        %p440 = scmp.lt.s32.totalorder %s20, 1
        %s441 = scalar_select %p440, %s20, 1
        %s442 = smul.addr %s441, 32
        %s443 = smul.addr %s442, 4
        %s444 = scalar_lea.vmem %s6, %s443
      $region44: #{ae_pointnet_dcg_forward.5} parent=31 // pred_fallthru
        _
      // Predicated region
      $region45: #{ae_pointnet_dcg_forward.5} parent=31 // pred_check
        %p445 = pneg %p202
      $region46: #{ae_pointnet_dcg_forward.5} parent=31 // pred_check_branch
        %447 = sbr.rel (%p445) target = $region48
      $region47: #{ae_pointnet_dcg_forward.5} parent=31 // pred_region
        %p448 = scmp.lt.s32.totalorder %s20, 1
        %s449 = scalar_select %p448, %s20, 1
        %s450 = smul.addr %s449, 2
        %s451 = scalar_lea.vmem %s7, %s450
      $region48: #{ae_pointnet_dcg_forward.5} parent=31 // pred_fallthru
        _
      // Predicated region
      $region49: #{ae_pointnet_dcg_forward.5} parent=31 // pred_check
        %p452 = pneg %p228
      $region50: #{ae_pointnet_dcg_forward.5} parent=31 // pred_check_branch
        %454 = sbr.rel (%p452) target = $region52
      $region51: #{ae_pointnet_dcg_forward.5} parent=31 // pred_region
        %p455 = scmp.lt.s32.totalorder %s20, 1
        %s456 = scalar_select %p455, %s20, 1
        %s457 = smul.addr %s456, 27
        %s458 = smul.addr %s457, 4
        %s459 = scalar_lea.vmem %s8, %s458
      $region52: #{ae_pointnet_dcg_forward.5} parent=31 // pred_fallthru
        _
      // Predicated region
      $region53: #{ae_pointnet_dcg_forward.5} parent=31 // pred_check
        %p460 = pneg %p254
      $region54: #{ae_pointnet_dcg_forward.5} parent=31 // pred_check_branch
        %462 = sbr.rel (%p460) target = $region56
      $region55: #{ae_pointnet_dcg_forward.5} parent=31 // pred_region
        %p463 = scmp.lt.s32.totalorder %s20, 1
        %s464 = scalar_select %p463, %s20, 1
        %s465 = scalar_lea.vmem %s9, %s464
      $region56: #{ae_pointnet_dcg_forward.5} parent=31 // pred_fallthru
        _
      // Predicated region
      $region57: #{ae_pointnet_dcg_forward.5} parent=31 // pred_check
        %p466 = pneg %p280
      $region58: #{ae_pointnet_dcg_forward.5} parent=31 // pred_check_branch
        %468 = sbr.rel (%p466) target = $region60
      $region59: #{ae_pointnet_dcg_forward.5} parent=31 // pred_region
        %p469 = scmp.lt.s32.totalorder %s20, 1
        %s470 = scalar_select %p469, %s20, 1
        %s471 = smul.addr %s470, 14
        %s472 = smul.addr %s471, 4
        %s473 = scalar_lea.vmem %s10, %s472
      $region60: #{ae_pointnet_dcg_forward.5} parent=31 // pred_fallthru
        _
      // Predicated region
      $region61: #{ae_pointnet_dcg_forward.5} parent=31 // pred_check
        %p474 = pneg %p306
      $region62: #{ae_pointnet_dcg_forward.5} parent=31 // pred_check_branch
        %476 = sbr.rel (%p474) target = $region64
      $region63: #{ae_pointnet_dcg_forward.5} parent=31 // pred_region
        %p477 = scmp.lt.s32.totalorder %s20, 1
        %s478 = scalar_select %p477, %s20, 1
        %s479 = scalar_lea.vmem %s11, %s478
      $region64: #{ae_pointnet_dcg_forward.5} parent=31 // pred_fallthru
        _
      // Predicated region
      $region65: #{ae_pointnet_dcg_forward.5} parent=31 // pred_check
        %p480 = pneg %p332
      $region66: #{ae_pointnet_dcg_forward.5} parent=31 // pred_check_branch
        %482 = sbr.rel (%p480) target = $region68
      $region67: #{ae_pointnet_dcg_forward.5} parent=31 // pred_region
        %p483 = scmp.lt.s32.totalorder %s20, 1
        %s484 = scalar_select %p483, %s20, 1
        %s485 = smul.addr %s484, 7
        %s486 = smul.addr %s485, 4
        %s487 = scalar_lea.vmem %s12, %s486
      $region68: #{ae_pointnet_dcg_forward.5} parent=31 // pred_fallthru
        _
      // Predicated region
      $region69: #{ae_pointnet_dcg_forward.5} parent=31 // pred_check
        %p488 = pneg %p358
      $region70: #{ae_pointnet_dcg_forward.5} parent=31 // pred_check_branch
        %490 = sbr.rel (%p488) target = $region72
      $region71: #{ae_pointnet_dcg_forward.5} parent=31 // pred_region
        %p491 = scmp.lt.s32.totalorder %s20, 1
        %s492 = scalar_select %p491, %s20, 1
        %s493 = scalar_lea.vmem %s13, %s492
      $region72: #{ae_pointnet_dcg_forward.5} parent=31 // pred_fallthru
        _
    $region32: #{ae_pointnet_dcg_forward.5} parent=5 // pred_fallthru
      _
    %p494 = scmp.le.s32.totalorder 1, %s20
    %p495 = scmp.lt.s32.totalorder %s20, 3
    %p496 = pnand %p494, %p495
    %p497 = pneg %p496
    // Predicated region
    $region73: #{ae_pointnet_dcg_forward.5} parent=5 // pred_check
      _
    $region74: #{ae_pointnet_dcg_forward.5} parent=5 // pred_check_branch
      %499 = sbr.rel (%p496) target = $region76
    $region75: #{ae_pointnet_dcg_forward.5} parent=5 // pred_region
      %s500 = ssub.s32 %s20, 1
      %p501 = pneg %p41
      %p502 = pneg %p38
      %p503 = pneg %p62
      %p504 = pneg %p59
      %p505 = pneg %p83
      %p506 = pneg %p80
      %p507 = pneg %p104
      %p508 = pneg %p101
      %p509 = scmp.lt.s32.totalorder %s25, 1
      %s510 = scalar_select %p509, %s25, 1
      %s511 = smul.addr %s510, 2
      %s512 = smul.addr %s511, 4
      %s513 = scalar_lea.vmem %s4, %s512
      %p514 = pneg %p130
      %p515 = pneg %p127
      %p516 = scmp.lt.s32.totalorder %s25, 1
      %s517 = scalar_select %p516, %s25, 1
      %s518 = smul.addr %s517, 22
      %s519 = smul.addr %s518, 4
      %s520 = scalar_lea.vmem %s5, %s519
      %p521 = pneg %p156
      %p522 = pneg %p153
      %p523 = scmp.lt.s32.totalorder %s25, 1
      %s524 = scalar_select %p523, %s25, 1
      %s525 = smul.addr %s524, 32
      %s526 = smul.addr %s525, 4
      %s527 = scalar_lea.vmem %s6, %s526
      %p528 = pneg %p182
      %p529 = pneg %p179
      %p530 = scmp.lt.s32.totalorder %s25, 1
      %s531 = scalar_select %p530, %s25, 1
      %s532 = smul.addr %s531, 2
      %s533 = scalar_lea.vmem %s7, %s532
      %p534 = pneg %p208
      %p535 = pneg %p205
      %p536 = scmp.lt.s32.totalorder %s25, 1
      %s537 = scalar_select %p536, %s25, 1
      %s538 = smul.addr %s537, 27
      %s539 = smul.addr %s538, 4
      %s540 = scalar_lea.vmem %s8, %s539
      %p541 = pneg %p234
      %p542 = pneg %p231
      %p543 = scmp.lt.s32.totalorder %s25, 1
      %s544 = scalar_select %p543, %s25, 1
      %s545 = scalar_lea.vmem %s9, %s544
      %p546 = pneg %p260
      %p547 = pneg %p257
      %p548 = scmp.lt.s32.totalorder %s25, 1
      %s549 = scalar_select %p548, %s25, 1
      %s550 = smul.addr %s549, 14
      %s551 = smul.addr %s550, 4
      %s552 = scalar_lea.vmem %s10, %s551
      %p553 = pneg %p286
      %p554 = pneg %p283
      %p555 = scmp.lt.s32.totalorder %s25, 1
      %s556 = scalar_select %p555, %s25, 1
      %s557 = scalar_lea.vmem %s11, %s556
      %p558 = pneg %p312
      %p559 = pneg %p309
      %p560 = scmp.lt.s32.totalorder %s25, 1
      %s561 = scalar_select %p560, %s25, 1
      %s562 = smul.addr %s561, 7
      %s563 = smul.addr %s562, 4
      %s564 = scalar_lea.vmem %s12, %s563
      %p565 = pneg %p338
      %p566 = pneg %p335
      %p567 = scmp.lt.s32.totalorder %s25, 1
      %s568 = scalar_select %p567, %s25, 1
      %s569 = scalar_lea.vmem %s13, %s568
      %p570 = pneg %p364
      %p571 = pneg %p361
      %p572 = pneg %p390
      %p573 = pneg %p387
      %p574 = scmp.lt.s32.totalorder %s25, 1
      %s575 = scalar_select %p574, %s25, 1
      %s576 = smul.addr %s575, 8
      %s577 = smul.addr %s576, 8
      %s578 = scalar_lea.vmem %s14, %s577
      %p579 = scmp.lt.s32.totalorder %s25, 1
      %s580 = scalar_select %p579, %s25, 1
      %s581 = smul.addr %s580, 2
      %s582 = smul.addr %s581, 4
      %s583 = scalar_lea.vmem %s4, %s582
      %p584 = scmp.lt.s32.totalorder %s25, 1
      %s585 = scalar_select %p584, %s25, 1
      %s586 = smul.addr %s585, 22
      %s587 = smul.addr %s586, 4
      %s588 = scalar_lea.vmem %s5, %s587
      %p589 = scmp.lt.s32.totalorder %s25, 1
      %s590 = scalar_select %p589, %s25, 1
      %s591 = smul.addr %s590, 32
      %s592 = smul.addr %s591, 4
      %s593 = scalar_lea.vmem %s6, %s592
      %p594 = scmp.lt.s32.totalorder %s25, 1
      %s595 = scalar_select %p594, %s25, 1
      %s596 = smul.addr %s595, 2
      %s597 = scalar_lea.vmem %s7, %s596
      %p598 = scmp.lt.s32.totalorder %s25, 1
      %s599 = scalar_select %p598, %s25, 1
      %s600 = smul.addr %s599, 27
      %s601 = smul.addr %s600, 4
      %s602 = scalar_lea.vmem %s8, %s601
      %p603 = scmp.lt.s32.totalorder %s25, 1
      %s604 = scalar_select %p603, %s25, 1
      %s605 = scalar_lea.vmem %s9, %s604
      %p606 = scmp.lt.s32.totalorder %s25, 1
      %s607 = scalar_select %p606, %s25, 1
      %s608 = smul.addr %s607, 14
      %s609 = smul.addr %s608, 4
      %s610 = scalar_lea.vmem %s10, %s609
      %p611 = scmp.lt.s32.totalorder %s25, 1
      %s612 = scalar_select %p611, %s25, 1
      %s613 = scalar_lea.vmem %s11, %s612
      %p614 = scmp.lt.s32.totalorder %s25, 1
      %s615 = scalar_select %p614, %s25, 1
      %s616 = smul.addr %s615, 7
      %s617 = smul.addr %s616, 4
      %s618 = scalar_lea.vmem %s12, %s617
      %p619 = scmp.lt.s32.totalorder %s25, 1
      %s620 = scalar_select %p619, %s25, 1
      %s621 = scalar_lea.vmem %s13, %s620
      %p622 = scmp.lt.s32.totalorder %s25, 1
      %s623 = scalar_select %p622, %s25, 1
      %s624 = smul.addr %s623, 8
      %s625 = smul.addr %s624, 8
      %s626 = scalar_lea.vmem %s14, %s625
      %v628 = vld [vmem:[%s0] sm:$0xff]
      %v629 = vld [vmem:[%s0 + $0x8] sm:$0xff]
      %v630 = vld [vmem:[%s0 + $0x10] sm:$0xff]
      %v631 = vld [vmem:[%s0 + $0x18] sm:$0xff]
      %v632 = vld [vmem:[%s0 + $0x20] sm:$0xff]
      %v633 = vld [vmem:[%s0 + $0x28] sm:$0xff]
      %v634 = vld [vmem:[%s0 + $0x30] sm:$0xff]
      %v635 = vld [vmem:[%s0 + $0x38] sm:$0xff]
      %v636 = vpack.c.bf16 %v629, %v628
      %v637 = vpack.c.bf16 %v631, %v630
      %v638 = vpack.c.bf16 %v633, %v632
      %v639 = vpack.c.bf16 %v635, %v634
      %v640 = vld [vmem:[%s2] sm:$0xf]
      %v641 = vld [vmem:[%s3] sm:$0x1]
      %v643 = vlaneseq
      %v644 = vshrl.u32 %v643, 7
      %v645 = vsub.s32 0, %v644
      %v646 = vrot.slane %v641, %v645
      %vm648 = vcmask 64512
      %v650 = vsel %vm648, %v636, 0
      %v653 = vsel %vm648, %v637, 0
      %v656 = vsel %vm648, %v638, 0
      %v659 = vsel %vm648, %v639, 0
      %vm661 = vcmask 1043456
      %v663 = vsel %vm661, %v640, 0
      %665 = vmatprep.subr.bf16.mxu0 0
      %666 = vmatpush1.bf16.msra.mxu0 %v663
      %667 = vmatprep.subr.bf16.mxu0 0
      %668 = vmatpush1.bf16.msra.mxu0 0
      %669 = vmatprep.subr.bf16.mxu0 0
      %670 = vmatpush1.bf16.msra.mxu0 0
      %671 = vmatprep.subr.bf16.mxu0 0
      %672 = vmatpush1.bf16.msra.mxu0 0
      %673 = vmatprep.subr.bf16.mxu0 0
      %674 = vmatpush1.bf16.msra.mxu0 0
      %675 = vmatprep.subr.bf16.mxu0 0
      %676 = vmatpush1.bf16.msra.mxu0 0
      %677 = vmatprep.subr.bf16.mxu0 0
      %678 = vmatpush1.bf16.msra.mxu0 0
      %679 = vmatprep.subr.bf16.mxu0 0
      %680 = vmatpush1.bf16.msra.mxu0 0
      %681 = vmatprep.subr.bf16.mxu0 0
      %682 = vmatpush1.bf16.msra.mxu0 0
      %683 = vmatprep.subr.bf16.mxu0 0
      %684 = vmatpush1.bf16.msra.mxu0 0
      %685 = vmatprep.subr.bf16.mxu0 0
      %686 = vmatpush1.bf16.msra.mxu0 0
      %687 = vmatprep.subr.bf16.mxu0 0
      %688 = vmatpush1.bf16.msra.mxu0 0
      %689 = vmatprep.subr.bf16.mxu0 0
      %690 = vmatpush1.bf16.msra.mxu0 0
      %691 = vmatprep.subr.bf16.mxu0 0
      %692 = vmatpush1.bf16.msra.mxu0 0
      %693 = vmatprep.subr.bf16.mxu0 0
      %694 = vmatpush1.bf16.msra.mxu0 0
      %695 = vmatprep.subr.bf16.mxu0 0
      %696 = vmatpush1.bf16.msra.mxu0 0
      %697 = vmatprep.mubr.bf16.mxu0 0
      %698 = vmatmul.mubr.bf16.gmra.mrb[0].mxu0 %v650
      %v699 = vpop.f32.mrb[0].mxu0
      %v700 = vadd.f32 %v646, %v699
      %v701 = vpop.f32.mrb[0].mxu0
      %v702 = vpop.f32.mrb[0].mxu0
      %v703 = vadd.f32 %v646, %v702
      %v704 = vpop.f32.mrb[0].mxu0
      %705 = vmatprep.mubr.bf16.mxu0 0
      %706 = vmatmul.mubr.bf16.gmra.mrb[0].mxu0 %v653
      %v707 = vpop.f32.mrb[0].mxu0
      %v708 = vadd.f32 %v646, %v707
      %v709 = vpop.f32.mrb[0].mxu0
      %v710 = vpop.f32.mrb[0].mxu0
      %v711 = vadd.f32 %v646, %v710
      %v712 = vpop.f32.mrb[0].mxu0
      %713 = vmatprep.mubr.bf16.mxu0 0
      %714 = vmatmul.mubr.bf16.gmra.mrb[0].mxu0 %v656
      %v715 = vpop.f32.mrb[0].mxu0
      %v716 = vadd.f32 %v646, %v715
      %v717 = vpop.f32.mrb[0].mxu0
      %v718 = vpop.f32.mrb[0].mxu0
      %v719 = vadd.f32 %v646, %v718
      %v720 = vpop.f32.mrb[0].mxu0
      %721 = vmatprep.mubr.bf16.mxu0 0
      %722 = vmatmul.mubr.bf16.gmra.mrb[0].mxu0 %v659
      %v723 = vpop.f32.mrb[0].mxu0
      %v724 = vadd.f32 %v646, %v723
      %v725 = vpop.f32.mrb[0].mxu0
      %v726 = vpop.f32.mrb[0].mxu0
      %v727 = vadd.f32 %v646, %v726
      %v728 = vpop.f32.mrb[0].mxu0
      %729 = vdwg.mxu0
      %v730 = vmax.f32 %v700, 0.0
      %v731 = vmax.f32 %v703, 0.0
      %v732 = vmax.f32 %v708, 0.0
      %v733 = vmax.f32 %v711, 0.0
      %v734 = vmax.f32 %v716, 0.0
      %v735 = vmax.f32 %v719, 0.0
      %v736 = vmax.f32 %v724, 0.0
      %v737 = vmax.f32 %v727, 0.0
      %v738 = vld [vmem:[%s1] sm:$0x3]
      %v739 = vpack.c.bf16 %v738, %v738
      %v740 = vld [vmem:[%s593] sm:$0xff]
      %v741 = vld [vmem:[%s593 + $0x8] sm:$0xff]
      %v742 = vld [vmem:[%s593 + $0x10] sm:$0xff]
      %v743 = vld [vmem:[%s593 + $0x18] sm:$0xff]
      %v744 = vld [vmem:[%s593 + $0x20] sm:$0xff]
      %v745 = vld [vmem:[%s593 + $0x28] sm:$0xff]
      %v746 = vld [vmem:[%s593 + $0x30] sm:$0xff]
      %v747 = vld [vmem:[%s593 + $0x38] sm:$0xff]
      %v748 = vld [vmem:[%s593 + $0x40] sm:$0xff]
      %v749 = vld [vmem:[%s593 + $0x48] sm:$0xff]
      %v750 = vld [vmem:[%s593 + $0x50] sm:$0xff]
      %v751 = vld [vmem:[%s593 + $0x58] sm:$0xff]
      %v752 = vld [vmem:[%s593 + $0x60] sm:$0xff]
      %v753 = vld [vmem:[%s593 + $0x68] sm:$0xff]
      %v754 = vld [vmem:[%s593 + $0x70] sm:$0xff]
      %v755 = vld [vmem:[%s593 + $0x78] sm:$0xff]
      %v772 = vunpack.c.l.b16 %v740
      %v773 = vunpack.c.h.b16 %v740
      %v774 = vunpack.c.l.b16 %v741
      %v775 = vunpack.c.h.b16 %v741
      %v776 = vunpack.c.l.b16 %v742
      %v777 = vunpack.c.h.b16 %v742
      %v778 = vunpack.c.l.b16 %v743
      %v779 = vunpack.c.h.b16 %v743
      %v780 = vunpack.c.l.b16 %v744
      %v781 = vunpack.c.h.b16 %v744
      %v782 = vunpack.c.l.b16 %v745
      %v783 = vunpack.c.h.b16 %v745
      %v784 = vunpack.c.l.b16 %v746
      %v785 = vunpack.c.h.b16 %v746
      %v786 = vunpack.c.l.b16 %v747
      %v787 = vunpack.c.h.b16 %v747
      %v788 = vunpack.c.l.b16 %v748
      %v789 = vunpack.c.h.b16 %v748
      %v790 = vunpack.c.l.b16 %v749
      %v791 = vunpack.c.h.b16 %v749
      %v792 = vunpack.c.l.b16 %v750
      %v793 = vunpack.c.h.b16 %v750
      %v794 = vunpack.c.l.b16 %v751
      %v795 = vunpack.c.h.b16 %v751
      %v796 = vunpack.c.l.b16 %v752
      %v797 = vunpack.c.h.b16 %v752
      %v798 = vunpack.c.l.b16 %v753
      %v799 = vunpack.c.h.b16 %v753
      %v800 = vunpack.c.l.b16 %v754
      %v801 = vunpack.c.h.b16 %v754
      %v802 = vunpack.c.l.b16 %v755
      %v803 = vunpack.c.h.b16 %v755
      %v804 = vpack.c.b16 %v774, %v772
      %v805 = vpack.c.b16 %v775, %v773
      %v806 = vpack.c.b16 %v778, %v776
      %v807 = vpack.c.b16 %v779, %v777
      %v808 = vpack.c.b16 %v782, %v780
      %v809 = vpack.c.b16 %v783, %v781
      %v810 = vpack.c.b16 %v786, %v784
      %v811 = vpack.c.b16 %v787, %v785
      %v812 = vpack.c.b16 %v790, %v788
      %v813 = vpack.c.b16 %v791, %v789
      %v814 = vpack.c.b16 %v794, %v792
      %v815 = vpack.c.b16 %v795, %v793
      %v816 = vpack.c.b16 %v798, %v796
      %v817 = vpack.c.b16 %v799, %v797
      %v818 = vpack.c.b16 %v802, %v800
      %v819 = vpack.c.b16 %v803, %v801
      %836 = vmatprep.subr.bf16.mxu0 %v805
      %837 = vmatpush1.bf16.msra.mxu0 %v804
      %838 = vmatprep.subr.bf16.mxu0 %v807
      %839 = vmatpush1.bf16.msra.mxu0 %v806
      %840 = vmatprep.subr.bf16.mxu0 %v809
      %841 = vmatpush1.bf16.msra.mxu0 %v808
      %842 = vmatprep.subr.bf16.mxu0 %v811
      %843 = vmatpush1.bf16.msra.mxu0 %v810
      %844 = vmatprep.subr.bf16.mxu0 %v813
      %845 = vmatpush1.bf16.msra.mxu0 %v812
      %846 = vmatprep.subr.bf16.mxu0 %v815
      %847 = vmatpush1.bf16.msra.mxu0 %v814
      %848 = vmatprep.subr.bf16.mxu0 %v817
      %849 = vmatpush1.bf16.msra.mxu0 %v816
      %850 = vmatprep.subr.bf16.mxu0 %v819
      %851 = vmatpush1.bf16.msra.mxu0 %v818
      %852 = vmatprep.subr.bf16.mxu0 0
      %853 = vmatpush1.bf16.msra.mxu0 0
      %854 = vmatprep.subr.bf16.mxu0 0
      %855 = vmatpush1.bf16.msra.mxu0 0
      %856 = vmatprep.subr.bf16.mxu0 0
      %857 = vmatpush1.bf16.msra.mxu0 0
      %858 = vmatprep.subr.bf16.mxu0 0
      %859 = vmatpush1.bf16.msra.mxu0 0
      %860 = vmatprep.subr.bf16.mxu0 0
      %861 = vmatpush1.bf16.msra.mxu0 0
      %862 = vmatprep.subr.bf16.mxu0 0
      %863 = vmatpush1.bf16.msra.mxu0 0
      %864 = vmatprep.subr.bf16.mxu0 0
      %865 = vmatpush1.bf16.msra.mxu0 0
      %866 = vmatprep.subr.bf16.mxu0 0
      %867 = vmatpush1.bf16.msra.mxu0 0
      %868 = vmatprep.mubr.bf16.mxu0 0
      %869 = vmatmul.mubr.bf16.gmra.mrb[0].mxu0 %v739
      %v870 = vpop.f32.mrb[0].mxu0
      %v871 = vadd.f32 0.0, %v870
      %v872 = vpop.f32.mrb[0].mxu0
      %v873 = vadd.f32 0.0, %v872
      %v874 = vpop.f32.mrb[0].mxu0
      %v875 = vpop.f32.mrb[0].mxu0
      %876 = vdwg.mxu0
      %v877 = vlaneseq
      %v878 = vshrl.u32 %v877, 7
      %v879 = vadd.s32 %v878, 8
      %v880 = vadd.s32 %v878, 16
      %v881 = vadd.s32 %v878, 24
      %v882 = vadd.s32 %v878, 32
      %v883 = vadd.s32 %v878, 40
      %v884 = vadd.s32 %v878, 48
      %v885 = vadd.s32 %v878, 56
      %v886 = vlaneseq
      %v887 = vand.u32 %v886, 127
      %v888 = vmul.u32 %v887, 32
      %vm889 = vcmp.ge.s32.totalorder %v878, %v888
      %vm890 = vcmp.ge.s32.totalorder %v879, %v888
      %vm891 = vcmp.ge.s32.totalorder %v880, %v888
      %vm892 = vcmp.ge.s32.totalorder %v881, %v888
      %vm893 = vcmp.ge.s32.totalorder %v882, %v888
      %vm894 = vcmp.ge.s32.totalorder %v883, %v888
      %vm895 = vcmp.ge.s32.totalorder %v884, %v888
      %vm896 = vcmp.ge.s32.totalorder %v885, %v888
      %v897 = vadd.s32 %v888, 32
      %vm898 = vcmp.lt.s32.totalorder %v878, %v897
      %vm899 = vcmp.lt.s32.totalorder %v879, %v897
      %vm900 = vcmp.lt.s32.totalorder %v880, %v897
      %vm901 = vcmp.lt.s32.totalorder %v881, %v897
      %vm902 = vcmp.lt.s32.totalorder %v882, %v897
      %vm903 = vcmp.lt.s32.totalorder %v883, %v897
      %vm904 = vcmp.lt.s32.totalorder %v884, %v897
      %vm905 = vcmp.lt.s32.totalorder %v885, %v897
      %vm906 = vmand %vm889, %vm898
      %vm907 = vmand %vm890, %vm899
      %vm908 = vmand %vm891, %vm900
      %vm909 = vmand %vm892, %vm901
      %vm910 = vmand %vm893, %vm902
      %vm911 = vmand %vm894, %vm903
      %vm912 = vmand %vm895, %vm904
      %vm913 = vmand %vm896, %vm905
      %v914 = vsel %vm906, 1, 0
      %v915 = vsel %vm907, 1, 0
      %v916 = vsel %vm908, 1, 0
      %v917 = vsel %vm909, 1, 0
      %v918 = vsel %vm910, 1, 0
      %v919 = vsel %vm911, 1, 0
      %v920 = vsel %vm912, 1, 0
      %v921 = vsel %vm913, 1, 0
      %v922 = vcvt.s32.f32 %v914
      %v923 = vcvt.s32.f32 %v915
      %v924 = vcvt.s32.f32 %v916
      %v925 = vcvt.s32.f32 %v917
      %v926 = vcvt.s32.f32 %v918
      %v927 = vcvt.s32.f32 %v919
      %v928 = vcvt.s32.f32 %v920
      %v929 = vcvt.s32.f32 %v921
      %vm930 = vcmask 15360
      %v932 = vsel %vm930, %v922, 0
      %v935 = vsel %vm930, %v923, 0
      %v938 = vsel %vm930, %v924, 0
      %v941 = vsel %vm930, %v925, 0
      %v944 = vsel %vm930, %v926, 0
      %v947 = vsel %vm930, %v927, 0
      %v950 = vsel %vm930, %v928, 0
      %v953 = vsel %vm930, %v929, 0
      %vm955 = vcmask 1041408
      %v957 = vsel %vm955, %v871, 0
      %v960 = vsel %vm955, %v873, 0
      %962 = vmatprep.subr.mxu0 %v960
      %963 = vmatpush1.msra.mxu0 %v957
      %964 = vmatprep.subr.mxu0 0.0
      %965 = vmatpush1.msra.mxu0 0.0
      %966 = vmatprep.subr.mxu0 0.0
      %967 = vmatpush1.msra.mxu0 0.0
      %968 = vmatprep.subr.mxu0 0.0
      %969 = vmatpush1.msra.mxu0 0.0
      %970 = vmatprep.subr.mxu0 0.0
      %971 = vmatpush1.msra.mxu0 0.0
      %972 = vmatprep.subr.mxu0 0.0
      %973 = vmatpush1.msra.mxu0 0.0
      %974 = vmatprep.subr.mxu0 0.0
      %975 = vmatpush1.msra.mxu0 0.0
      %976 = vmatprep.subr.mxu0 0.0
      %977 = vmatpush1.msra.mxu0 0.0
      %978 = vmatprep.subr.mxu0 0.0
      %979 = vmatpush1.msra.mxu0 0.0
      %980 = vmatprep.subr.mxu0 0.0
      %981 = vmatpush1.msra.mxu0 0.0
      %982 = vmatprep.subr.mxu0 0.0
      %983 = vmatpush1.msra.mxu0 0.0
      %984 = vmatprep.subr.mxu0 0.0
      %985 = vmatpush1.msra.mxu0 0.0
      %986 = vmatprep.subr.mxu0 0.0
      %987 = vmatpush1.msra.mxu0 0.0
      %988 = vmatprep.subr.mxu0 0.0
      %989 = vmatpush1.msra.mxu0 0.0
      %990 = vmatprep.subr.mxu0 0.0
      %991 = vmatpush1.msra.mxu0 0.0
      %992 = vmatprep.subr.mxu0 0.0
      %993 = vmatpush1.msra.mxu0 0.0
      %994 = vmatprep.subr.mxu0 0.0
      %995 = vmatpush1.msra.mxu0 0.0
      %996 = vmatprep.subr.mxu0 0.0
      %997 = vmatpush1.msra.mxu0 0.0
      %998 = vmatprep.subr.mxu0 0.0
      %999 = vmatpush1.msra.mxu0 0.0
      %1000 = vmatprep.subr.mxu0 0.0
      %1001 = vmatpush1.msra.mxu0 0.0
      %1002 = vmatprep.subr.mxu0 0.0
      %1003 = vmatpush1.msra.mxu0 0.0
      %1004 = vmatprep.subr.mxu0 0.0
      %1005 = vmatpush1.msra.mxu0 0.0
      %1006 = vmatprep.subr.mxu0 0.0
      %1007 = vmatpush1.msra.mxu0 0.0
      %1008 = vmatprep.subr.mxu0 0.0
      %1009 = vmatpush1.msra.mxu0 0.0
      %1010 = vmatprep.subr.mxu0 0.0
      %1011 = vmatpush1.msra.mxu0 0.0
      %1012 = vmatprep.subr.mxu0 0.0
      %1013 = vmatpush1.msra.mxu0 0.0
      %1014 = vmatprep.subr.mxu0 0.0
      %1015 = vmatpush1.msra.mxu0 0.0
      %1016 = vmatprep.subr.mxu0 0.0
      %1017 = vmatpush1.msra.mxu0 0.0
      %1018 = vmatprep.subr.mxu0 0.0
      %1019 = vmatpush1.msra.mxu0 0.0
      %1020 = vmatprep.subr.mxu0 0.0
      %1021 = vmatpush1.msra.mxu0 0.0
      %1022 = vmatprep.subr.mxu0 0.0
      %1023 = vmatpush1.msra.mxu0 0.0
      %1024 = vmatprep.subr.mxu0 0.0
      %1025 = vmatpush1.msra.mxu0 0.0
      %1026 = vmatprep.mubr.f32.mxu0 0.0
      %1027 = vmatmul.mubr.f32.gmra.mrb[0].mxu0 %v932
      %v1028 = vpop.f32.mrb[0].mxu0
      %v1029 = vadd.f32 0.0, %v1028
      %v1030 = vpop.f32.mrb[0].mxu0
      %v1031 = vadd.f32 0.0, %v1030
      %1032 = vmatprep.mubr.f32.mxu0 0.0
      %1033 = vmatmul.mubr.f32.gmra.mrb[0].mxu0 %v935
      %v1034 = vpop.f32.mrb[0].mxu0
      %v1035 = vadd.f32 0.0, %v1034
      %v1036 = vpop.f32.mrb[0].mxu0
      %v1037 = vadd.f32 0.0, %v1036
      %1038 = vmatprep.mubr.f32.mxu0 0.0
      %1039 = vmatmul.mubr.f32.gmra.mrb[0].mxu0 %v938
      %v1040 = vpop.f32.mrb[0].mxu0
      %v1041 = vadd.f32 0.0, %v1040
      %v1042 = vpop.f32.mrb[0].mxu0
      %v1043 = vadd.f32 0.0, %v1042
      %1044 = vmatprep.mubr.f32.mxu0 0.0
      %1045 = vmatmul.mubr.f32.gmra.mrb[0].mxu0 %v941
      %v1046 = vpop.f32.mrb[0].mxu0
      %v1047 = vadd.f32 0.0, %v1046
      %v1048 = vpop.f32.mrb[0].mxu0
      %v1049 = vadd.f32 0.0, %v1048
      %1050 = vmatprep.mubr.f32.mxu0 0.0
      %1051 = vmatmul.mubr.f32.gmra.mrb[0].mxu0 %v944
      %v1052 = vpop.f32.mrb[0].mxu0
      %v1053 = vadd.f32 0.0, %v1052
      %v1054 = vpop.f32.mrb[0].mxu0
      %v1055 = vadd.f32 0.0, %v1054
      %1056 = vmatprep.mubr.f32.mxu0 0.0
      %1057 = vmatmul.mubr.f32.gmra.mrb[0].mxu0 %v947
      %v1058 = vpop.f32.mrb[0].mxu0
      %v1059 = vadd.f32 0.0, %v1058
      %v1060 = vpop.f32.mrb[0].mxu0
      %v1061 = vadd.f32 0.0, %v1060
      %1062 = vmatprep.mubr.f32.mxu0 0.0
      %1063 = vmatmul.mubr.f32.gmra.mrb[0].mxu0 %v950
      %v1064 = vpop.f32.mrb[0].mxu0
      %v1065 = vadd.f32 0.0, %v1064
      %v1066 = vpop.f32.mrb[0].mxu0
      %v1067 = vadd.f32 0.0, %v1066
      %1068 = vmatprep.mubr.f32.mxu0 0.0
      %1069 = vmatmul.mubr.f32.gmra.mrb[0].mxu0 %v953
      %v1070 = vpop.f32.mrb[0].mxu0
      %v1071 = vadd.f32 0.0, %v1070
      %v1072 = vpop.f32.mrb[0].mxu0
      %v1073 = vadd.f32 0.0, %v1072
      %1074 = vdwg.mxu0
      %v1075 = vld [vmem:[%s583] sm:$0xff]
      %v1076 = vpack.c.bf16 %v731, %v730
      %v1077 = vpack.c.bf16 %v733, %v732
      %v1078 = vpack.c.bf16 %v735, %v734
      %v1079 = vpack.c.bf16 %v737, %v736
      %v1080 = vld [vmem:[%s588] sm:$0xff]
      %v1081 = vld [vmem:[%s588 + $0x8] sm:$0xff]
      %v1082 = vld [vmem:[%s588 + $0x10] sm:$0xff]
      %v1083 = vld [vmem:[%s588 + $0x18] sm:$0xff]
      %v1084 = vld [vmem:[%s588 + $0x20] sm:$0xff]
      %v1085 = vld [vmem:[%s588 + $0x28] sm:$0xff]
      %v1086 = vld [vmem:[%s588 + $0x30] sm:$0xff]
      %v1087 = vld [vmem:[%s588 + $0x38] sm:$0xff]
      %v1088 = vld [vmem:[%s588 + $0x40] sm:$0xff]
      %v1089 = vld [vmem:[%s588 + $0x48] sm:$0xff]
      %v1090 = vld [vmem:[%s588 + $0x50] sm:$0x33]
      %v1102 = vunpack.c.l.b16 %v1080
      %v1103 = vunpack.c.h.b16 %v1080
      %v1104 = vunpack.c.l.b16 %v1081
      %v1105 = vunpack.c.h.b16 %v1081
      %v1106 = vunpack.c.l.b16 %v1082
      %v1107 = vunpack.c.h.b16 %v1082
      %v1108 = vunpack.c.l.b16 %v1083
      %v1109 = vunpack.c.h.b16 %v1083
      %v1110 = vunpack.c.l.b16 %v1084
      %v1111 = vunpack.c.h.b16 %v1084
      %v1112 = vunpack.c.l.b16 %v1085
      %v1113 = vunpack.c.h.b16 %v1085
      %v1114 = vunpack.c.l.b16 %v1086
      %v1115 = vunpack.c.h.b16 %v1086
      %v1116 = vunpack.c.l.b16 %v1087
      %v1117 = vunpack.c.h.b16 %v1087
      %v1118 = vunpack.c.l.b16 %v1088
      %v1119 = vunpack.c.h.b16 %v1088
      %v1120 = vunpack.c.l.b16 %v1089
      %v1121 = vunpack.c.h.b16 %v1089
      %v1122 = vunpack.c.l.b16 %v1090
      %v1123 = vunpack.c.h.b16 %v1090
      %v1124 = vpack.c.b16 %v1104, %v1102
      %v1125 = vpack.c.b16 %v1105, %v1103
      %v1126 = vpack.c.b16 %v1108, %v1106
      %v1127 = vpack.c.b16 %v1109, %v1107
      %v1128 = vpack.c.b16 %v1112, %v1110
      %v1129 = vpack.c.b16 %v1113, %v1111
      %v1130 = vpack.c.b16 %v1116, %v1114
      %v1131 = vpack.c.b16 %v1117, %v1115
      %v1132 = vpack.c.b16 %v1120, %v1118
      %v1133 = vpack.c.b16 %v1121, %v1119
      %v1134 = vpack.c.b16 %v1122, %v1122
      %v1135 = vpack.c.b16 %v1123, %v1123
      %vm1146 = vcmask 687104
      %v1148 = vsel %vm1146, %v1076, 0
      %v1151 = vsel %vm1146, %v1077, 0
      %v1154 = vsel %vm1146, %v1078, 0
      %v1157 = vsel %vm1146, %v1079, 0
      %v1160 = vsel %vm955, %v1134, 0
      %v1163 = vsel %vm955, %v1135, 0
      %1165 = vmatprep.subr.bf16.mxu0 %v1125
      %1166 = vmatpush1.bf16.msra.mxu0 %v1124
      %1167 = vmatprep.subr.bf16.mxu0 %v1127
      %1168 = vmatpush1.bf16.msra.mxu0 %v1126
      %1169 = vmatprep.subr.bf16.mxu0 %v1129
      %1170 = vmatpush1.bf16.msra.mxu0 %v1128
      %1171 = vmatprep.subr.bf16.mxu0 %v1131
      %1172 = vmatpush1.bf16.msra.mxu0 %v1130
      %1173 = vmatprep.subr.bf16.mxu0 %v1133
      %1174 = vmatpush1.bf16.msra.mxu0 %v1132
      %1175 = vmatprep.subr.bf16.mxu0 %v1163
      %1176 = vmatpush1.bf16.msra.mxu0 %v1160
      %1177 = vmatprep.subr.bf16.mxu0 0
      %1178 = vmatpush1.bf16.msra.mxu0 0
      %1179 = vmatprep.subr.bf16.mxu0 0
      %1180 = vmatpush1.bf16.msra.mxu0 0
      %1181 = vmatprep.subr.bf16.mxu0 0
      %1182 = vmatpush1.bf16.msra.mxu0 0
      %1183 = vmatprep.subr.bf16.mxu0 0
      %1184 = vmatpush1.bf16.msra.mxu0 0
      %1185 = vmatprep.subr.bf16.mxu0 0
      %1186 = vmatpush1.bf16.msra.mxu0 0
      %1187 = vmatprep.subr.bf16.mxu0 0
      %1188 = vmatpush1.bf16.msra.mxu0 0
      %1189 = vmatprep.subr.bf16.mxu0 0
      %1190 = vmatpush1.bf16.msra.mxu0 0
      %1191 = vmatprep.subr.bf16.mxu0 0
      %1192 = vmatpush1.bf16.msra.mxu0 0
      %1193 = vmatprep.subr.bf16.mxu0 0
      %1194 = vmatpush1.bf16.msra.mxu0 0
      %1195 = vmatprep.subr.bf16.mxu0 0
      %1196 = vmatpush1.bf16.msra.mxu0 0
      %1197 = vmatprep.mubr.bf16.mxu0 0
      %1198 = vmatmul.mubr.bf16.gmra.mrb[0].mxu0 %v1148
      %v1199 = vpop.f32.mrb[0].mxu0
      %v1200 = vadd.f32 0.0, %v1199
      %v1201 = vpop.f32.mrb[0].mxu0
      %v1202 = vadd.f32 0.0, %v1201
      %v1203 = vpop.f32.mrb[0].mxu0
      %v1204 = vadd.f32 0.0, %v1203
      %v1205 = vpop.f32.mrb[0].mxu0
      %v1206 = vadd.f32 0.0, %v1205
      %1207 = vmatprep.mubr.bf16.mxu0 0
      %1208 = vmatmul.mubr.bf16.gmra.mrb[0].mxu0 %v1151
      %v1209 = vpop.f32.mrb[0].mxu0
      %v1210 = vadd.f32 0.0, %v1209
      %v1211 = vpop.f32.mrb[0].mxu0
      %v1212 = vadd.f32 0.0, %v1211
      %v1213 = vpop.f32.mrb[0].mxu0
      %v1214 = vadd.f32 0.0, %v1213
      %v1215 = vpop.f32.mrb[0].mxu0
      %v1216 = vadd.f32 0.0, %v1215
      %1217 = vmatprep.mubr.bf16.mxu0 0
      %1218 = vmatmul.mubr.bf16.gmra.mrb[0].mxu0 %v1154
      %v1219 = vpop.f32.mrb[0].mxu0
      %v1220 = vadd.f32 0.0, %v1219
      %v1221 = vpop.f32.mrb[0].mxu0
      %v1222 = vadd.f32 0.0, %v1221
      %v1223 = vpop.f32.mrb[0].mxu0
      %v1224 = vadd.f32 0.0, %v1223
      %v1225 = vpop.f32.mrb[0].mxu0
      %v1226 = vadd.f32 0.0, %v1225
      %1227 = vmatprep.mubr.bf16.mxu0 0
      %1228 = vmatmul.mubr.bf16.gmra.mrb[0].mxu0 %v1157
      %v1229 = vpop.f32.mrb[0].mxu0
      %v1230 = vadd.f32 0.0, %v1229
      %v1231 = vpop.f32.mrb[0].mxu0
      %v1232 = vadd.f32 0.0, %v1231
      %v1233 = vpop.f32.mrb[0].mxu0
      %v1234 = vadd.f32 0.0, %v1233
      %v1235 = vpop.f32.mrb[0].mxu0
      %v1236 = vadd.f32 0.0, %v1235
      %1237 = vdwg.mxu0
      %v1239 = vunpack.c.l.b16 %v1075
      %v1240 = vunpack.c.h.b16 %v1075
      %v1241 = vpack.c.b16 %v1239, %v1239
      %v1242 = vpack.c.b16 %v1240, %v1240
      %v1244 = vsel %vm661, %v1241, 0
      %v1247 = vsel %vm661, %v1242, 0
      %1249 = vmatprep.subr.bf16.mxu0 %v1247
      %1250 = vmatpush1.bf16.msra.mxu0 %v1244
      %1251 = vmatprep.subr.bf16.mxu0 0
      %1252 = vmatpush1.bf16.msra.mxu0 0
      %1253 = vmatprep.subr.bf16.mxu0 0
      %1254 = vmatpush1.bf16.msra.mxu0 0
      %1255 = vmatprep.subr.bf16.mxu0 0
      %1256 = vmatpush1.bf16.msra.mxu0 0
      %1257 = vmatprep.subr.bf16.mxu0 0
      %1258 = vmatpush1.bf16.msra.mxu0 0
      %1259 = vmatprep.subr.bf16.mxu0 0
      %1260 = vmatpush1.bf16.msra.mxu0 0
      %1261 = vmatprep.subr.bf16.mxu0 0
      %1262 = vmatpush1.bf16.msra.mxu0 0
      %1263 = vmatprep.subr.bf16.mxu0 0
      %1264 = vmatpush1.bf16.msra.mxu0 0
      %1265 = vmatprep.subr.bf16.mxu0 0
      %1266 = vmatpush1.bf16.msra.mxu0 0
      %1267 = vmatprep.subr.bf16.mxu0 0
      %1268 = vmatpush1.bf16.msra.mxu0 0
      %1269 = vmatprep.subr.bf16.mxu0 0
      %1270 = vmatpush1.bf16.msra.mxu0 0
      %1271 = vmatprep.subr.bf16.mxu0 0
      %1272 = vmatpush1.bf16.msra.mxu0 0
      %1273 = vmatprep.subr.bf16.mxu0 0
      %1274 = vmatpush1.bf16.msra.mxu0 0
      %1275 = vmatprep.subr.bf16.mxu0 0
      %1276 = vmatpush1.bf16.msra.mxu0 0
      %1277 = vmatprep.subr.bf16.mxu0 0
      %1278 = vmatpush1.bf16.msra.mxu0 0
      %1279 = vmatprep.subr.bf16.mxu0 0
      %1280 = vmatpush1.bf16.msra.mxu0 0
      %1281 = vmatprep.mubr.bf16.mxu0 0
      %1282 = vmatmul.mubr.bf16.gmra.mrb[0].mxu0 %v650
      %v1283 = vpop.f32.mrb[0].mxu0
      %v1284 = vadd.f32 %v1200, %v1283
      %v1285 = vpop.f32.mrb[0].mxu0
      %v1286 = vadd.f32 %v1202, %v1285
      %v1287 = vpop.f32.mrb[0].mxu0
      %v1288 = vadd.f32 %v1204, %v1287
      %v1289 = vpop.f32.mrb[0].mxu0
      %v1290 = vadd.f32 %v1206, %v1289
      %1291 = vmatprep.mubr.bf16.mxu0 0
      %1292 = vmatmul.mubr.bf16.gmra.mrb[0].mxu0 %v653
      %v1293 = vpop.f32.mrb[0].mxu0
      %v1294 = vadd.f32 %v1210, %v1293
      %v1295 = vpop.f32.mrb[0].mxu0
      %v1296 = vadd.f32 %v1212, %v1295
      %v1297 = vpop.f32.mrb[0].mxu0
      %v1298 = vadd.f32 %v1214, %v1297
      %v1299 = vpop.f32.mrb[0].mxu0
      %v1300 = vadd.f32 %v1216, %v1299
      %1301 = vmatprep.mubr.bf16.mxu0 0
      %1302 = vmatmul.mubr.bf16.gmra.mrb[0].mxu0 %v656
      %v1303 = vpop.f32.mrb[0].mxu0
      %v1304 = vadd.f32 %v1220, %v1303
      %v1305 = vpop.f32.mrb[0].mxu0
      %v1306 = vadd.f32 %v1222, %v1305
      %v1307 = vpop.f32.mrb[0].mxu0
      %v1308 = vadd.f32 %v1224, %v1307
      %v1309 = vpop.f32.mrb[0].mxu0
      %v1310 = vadd.f32 %v1226, %v1309
      %1311 = vmatprep.mubr.bf16.mxu0 0
      %1312 = vmatmul.mubr.bf16.gmra.mrb[0].mxu0 %v659
      %v1313 = vpop.f32.mrb[0].mxu0
      %v1314 = vadd.f32 %v1230, %v1313
      %v1315 = vpop.f32.mrb[0].mxu0
      %v1316 = vadd.f32 %v1232, %v1315
      %v1317 = vpop.f32.mrb[0].mxu0
      %v1318 = vadd.f32 %v1234, %v1317
      %v1319 = vpop.f32.mrb[0].mxu0
      %v1320 = vadd.f32 %v1236, %v1319
      %1321 = vdwg.mxu0
      %v1322 = vadd.f32 %v1284, %v1029
      %v1323 = vadd.f32 %v1286, %v1031
      %v1324 = vadd.f32 %v1288, %v1035
      %v1325 = vadd.f32 %v1290, %v1037
      %v1326 = vadd.f32 %v1294, %v1041
      %v1327 = vadd.f32 %v1296, %v1043
      %v1328 = vadd.f32 %v1298, %v1047
      %v1329 = vadd.f32 %v1300, %v1049
      %v1330 = vadd.f32 %v1304, %v1053
      %v1331 = vadd.f32 %v1306, %v1055
      %v1332 = vadd.f32 %v1308, %v1059
      %v1333 = vadd.f32 %v1310, %v1061
      %v1334 = vadd.f32 %v1314, %v1065
      %v1335 = vadd.f32 %v1316, %v1067
      %v1336 = vadd.f32 %v1318, %v1071
      %v1337 = vadd.f32 %v1320, %v1073
      %v1338 = vld [vmem:[%s597] sm:$0x3]
      %v1340 = vlaneseq
      %v1341 = vshrl.u32 %v1340, 7
      %v1342 = vsub.s32 0, %v1341
      %v1343 = vrot.slane %v1338, %v1342
      %v1344 = vlaneseq
      %v1345 = vshrl.u32 %v1344, 7
      %v1346 = vsub.s32 1, %v1345
      %v1347 = vrot.slane %v1338, %v1346
      %v1350 = vadd.f32 %v1322, %v1343
      %v1351 = vadd.f32 %v1323, %v1347
      %v1352 = vadd.f32 %v1324, %v1343
      %v1353 = vadd.f32 %v1325, %v1347
      %v1354 = vadd.f32 %v1326, %v1343
      %v1355 = vadd.f32 %v1327, %v1347
      %v1356 = vadd.f32 %v1328, %v1343
      %v1357 = vadd.f32 %v1329, %v1347
      %v1358 = vadd.f32 %v1330, %v1343
      %v1359 = vadd.f32 %v1331, %v1347
      %v1360 = vadd.f32 %v1332, %v1343
      %v1361 = vadd.f32 %v1333, %v1347
      %v1362 = vadd.f32 %v1334, %v1343
      %v1363 = vadd.f32 %v1335, %v1347
      %v1364 = vadd.f32 %v1336, %v1343
      %v1365 = vadd.f32 %v1337, %v1347
      %v1366 = vmax.f32 %v1350, 0.0
      %v1367 = vmax.f32 %v1351, 0.0
      %v1368 = vmax.f32 %v1352, 0.0
      %v1369 = vmax.f32 %v1353, 0.0
      %v1370 = vmax.f32 %v1354, 0.0
      %v1371 = vmax.f32 %v1355, 0.0
      %v1372 = vmax.f32 %v1356, 0.0
      %v1373 = vmax.f32 %v1357, 0.0
      %v1374 = vmax.f32 %v1358, 0.0
      %v1375 = vmax.f32 %v1359, 0.0
      %v1376 = vmax.f32 %v1360, 0.0
      %v1377 = vmax.f32 %v1361, 0.0
      %v1378 = vmax.f32 %v1362, 0.0
      %v1379 = vmax.f32 %v1363, 0.0
      %v1380 = vmax.f32 %v1364, 0.0
      %v1381 = vmax.f32 %v1365, 0.0
      %v1382 = vpack.c.bf16 %v1368, %v1366
      %v1383 = vpack.c.bf16 %v1369, %v1367
      %v1384 = vpack.c.bf16 %v1372, %v1370
      %v1385 = vpack.c.bf16 %v1373, %v1371
      %v1386 = vpack.c.bf16 %v1376, %v1374
      %v1387 = vpack.c.bf16 %v1377, %v1375
      %v1388 = vpack.c.bf16 %v1380, %v1378
      %v1389 = vpack.c.bf16 %v1381, %v1379
      %v1390 = vld [vmem:[%s602] sm:$0xf]
      %v1391 = vld [vmem:[%s602 + $0x4] sm:$0xf]
      %v1392 = vld [vmem:[%s602 + $0x8] sm:$0xf]
      %v1393 = vld [vmem:[%s602 + $0xc] sm:$0xf]
      %v1394 = vld [vmem:[%s602 + $0x10] sm:$0xf]
      %v1395 = vld [vmem:[%s602 + $0x14] sm:$0xf]
      %v1396 = vld [vmem:[%s602 + $0x18] sm:$0xf]
      %v1397 = vld [vmem:[%s602 + $0x1c] sm:$0xf]
      %v1398 = vld [vmem:[%s602 + $0x20] sm:$0xf]
      %v1399 = vld [vmem:[%s602 + $0x24] sm:$0xf]
      %v1400 = vld [vmem:[%s602 + $0x28] sm:$0xf]
      %v1401 = vld [vmem:[%s602 + $0x2c] sm:$0xf]
      %v1402 = vld [vmem:[%s602 + $0x30] sm:$0xf]
      %v1403 = vld [vmem:[%s602 + $0x34] sm:$0xf]
      %v1404 = vld [vmem:[%s602 + $0x38] sm:$0xf]
      %v1405 = vld [vmem:[%s602 + $0x3c] sm:$0xf]
      %v1406 = vld [vmem:[%s602 + $0x40] sm:$0xf]
      %v1407 = vld [vmem:[%s602 + $0x44] sm:$0xf]
      %v1408 = vld [vmem:[%s602 + $0x48] sm:$0xf]
      %v1409 = vld [vmem:[%s602 + $0x4c] sm:$0xf]
      %v1410 = vld [vmem:[%s602 + $0x50] sm:$0xf]
      %v1411 = vld [vmem:[%s602 + $0x54] sm:$0xf]
      %v1412 = vld [vmem:[%s602 + $0x58] sm:$0xf]
      %v1413 = vld [vmem:[%s602 + $0x5c] sm:$0xf]
      %v1414 = vld [vmem:[%s602 + $0x60] sm:$0xf]
      %v1415 = vld [vmem:[%s602 + $0x64] sm:$0xf]
      %v1416 = vld [vmem:[%s602 + $0x68] sm:$0xf]
      %v1417 = vld [vmem:[%s605] sm:$0x1]
      %v1419 = vlaneseq
      %v1420 = vshrl.u32 %v1419, 7
      %v1421 = vsub.s32 0, %v1420
      %v1422 = vrot.slane %v1417, %v1421
      %v1451 = vunpack.c.l.b16 %v1390
      %v1452 = vunpack.c.l.b16 %v1391
      %v1453 = vunpack.c.l.b16 %v1392
      %v1454 = vunpack.c.l.b16 %v1393
      %v1455 = vunpack.c.l.b16 %v1394
      %v1456 = vunpack.c.l.b16 %v1395
      %v1457 = vunpack.c.l.b16 %v1396
      %v1458 = vunpack.c.l.b16 %v1397
      %v1459 = vunpack.c.l.b16 %v1398
      %v1460 = vunpack.c.l.b16 %v1399
      %v1461 = vunpack.c.l.b16 %v1400
      %v1462 = vunpack.c.l.b16 %v1401
      %v1463 = vunpack.c.l.b16 %v1402
      %v1464 = vunpack.c.l.b16 %v1403
      %v1465 = vunpack.c.l.b16 %v1404
      %v1466 = vunpack.c.l.b16 %v1405
      %v1467 = vunpack.c.l.b16 %v1406
      %v1468 = vunpack.c.l.b16 %v1407
      %v1469 = vunpack.c.l.b16 %v1408
      %v1470 = vunpack.c.l.b16 %v1409
      %v1471 = vunpack.c.l.b16 %v1410
      %v1472 = vunpack.c.l.b16 %v1411
      %v1473 = vunpack.c.l.b16 %v1412
      %v1474 = vunpack.c.l.b16 %v1413
      %v1475 = vunpack.c.l.b16 %v1414
      %v1476 = vunpack.c.l.b16 %v1415
      %v1477 = vunpack.c.l.b16 %v1416
      %v1478 = vpack.c.b16 %v1452, %v1451
      %v1479 = vpack.c.b16 %v1454, %v1453
      %v1480 = vpack.c.b16 %v1456, %v1455
      %v1481 = vpack.c.b16 %v1458, %v1457
      %v1482 = vpack.c.b16 %v1460, %v1459
      %v1483 = vpack.c.b16 %v1462, %v1461
      %v1484 = vpack.c.b16 %v1464, %v1463
      %v1485 = vpack.c.b16 %v1466, %v1465
      %v1486 = vpack.c.b16 %v1468, %v1467
      %v1487 = vpack.c.b16 %v1470, %v1469
      %v1488 = vpack.c.b16 %v1472, %v1471
      %v1489 = vpack.c.b16 %v1474, %v1473
      %v1490 = vpack.c.b16 %v1476, %v1475
      %v1491 = vpack.c.b16 %v1477, %v1477
      %vm1505 = vcmask 711680
      %v1507 = vsel %vm1505, %v1383, 0
      %v1510 = vsel %vm1505, %v1385, 0
      %v1513 = vsel %vm1505, %v1387, 0
      %v1516 = vsel %vm1505, %v1389, 0
      %vm1518 = vcmask 1042432
      %v1519 = vsel %vm1518, 4294967295, 65535
      %v1520 = vsel %vm661, %v1519, 0
      %v1522 = vand.u32 %v1491, %v1520
      %1524 = vmatprep.subr.bf16.mxu0 0
      %1525 = vmatpush1.bf16.msra.mxu0 %v1478
      %1526 = vmatprep.subr.bf16.mxu0 0
      %1527 = vmatpush1.bf16.msra.mxu0 %v1479
      %1528 = vmatprep.subr.bf16.mxu0 0
      %1529 = vmatpush1.bf16.msra.mxu0 %v1480
      %1530 = vmatprep.subr.bf16.mxu0 0
      %1531 = vmatpush1.bf16.msra.mxu0 %v1481
      %1532 = vmatprep.subr.bf16.mxu0 0
      %1533 = vmatpush1.bf16.msra.mxu0 %v1482
      %1534 = vmatprep.subr.bf16.mxu0 0
      %1535 = vmatpush1.bf16.msra.mxu0 %v1483
      %1536 = vmatprep.subr.bf16.mxu0 0
      %1537 = vmatpush1.bf16.msra.mxu0 %v1484
      %1538 = vmatprep.subr.bf16.mxu0 0
      %1539 = vmatpush1.bf16.msra.mxu0 %v1485
      %1540 = vmatprep.subr.bf16.mxu0 0
      %1541 = vmatpush1.bf16.msra.mxu0 %v1486
      %1542 = vmatprep.subr.bf16.mxu0 0
      %1543 = vmatpush1.bf16.msra.mxu0 %v1487
      %1544 = vmatprep.subr.bf16.mxu0 0
      %1545 = vmatpush1.bf16.msra.mxu0 %v1488
      %1546 = vmatprep.subr.bf16.mxu0 0
      %1547 = vmatpush1.bf16.msra.mxu0 %v1489
      %1548 = vmatprep.subr.bf16.mxu0 0
      %1549 = vmatpush1.bf16.msra.mxu0 %v1490
      %1550 = vmatprep.subr.bf16.mxu0 0
      %1551 = vmatpush1.bf16.msra.mxu0 %v1522
      %1552 = vmatprep.subr.bf16.mxu0 0
      %1553 = vmatpush1.bf16.msra.mxu0 0
      %1554 = vmatprep.subr.bf16.mxu0 0
      %1555 = vmatpush1.bf16.msra.mxu0 0
      %1556 = vmatprep.mubr.bf16.mxu0 %v1507
      %1557 = vmatmul.mubr.bf16.gmra.mrb[0].mxu0 %v1382
      %v1558 = vpop.f32.mrb[0].mxu0
      %v1559 = vadd.f32 %v1422, %v1558
      %v1560 = vpop.f32.mrb[0].mxu0
      %v1561 = vpop.f32.mrb[0].mxu0
      %v1562 = vadd.f32 %v1422, %v1561
      %v1563 = vpop.f32.mrb[0].mxu0
      %1564 = vmatprep.mubr.bf16.mxu0 %v1510
      %1565 = vmatmul.mubr.bf16.gmra.mrb[0].mxu0 %v1384
      %v1566 = vpop.f32.mrb[0].mxu0
      %v1567 = vadd.f32 %v1422, %v1566
      %v1568 = vpop.f32.mrb[0].mxu0
      %v1569 = vpop.f32.mrb[0].mxu0
      %v1570 = vadd.f32 %v1422, %v1569
      %v1571 = vpop.f32.mrb[0].mxu0
      %1572 = vmatprep.mubr.bf16.mxu0 %v1513
      %1573 = vmatmul.mubr.bf16.gmra.mrb[0].mxu0 %v1386
      %v1574 = vpop.f32.mrb[0].mxu0
      %v1575 = vadd.f32 %v1422, %v1574
      %v1576 = vpop.f32.mrb[0].mxu0
      %v1577 = vpop.f32.mrb[0].mxu0
      %v1578 = vadd.f32 %v1422, %v1577
      %v1579 = vpop.f32.mrb[0].mxu0
      %1580 = vmatprep.mubr.bf16.mxu0 %v1516
      %1581 = vmatmul.mubr.bf16.gmra.mrb[0].mxu0 %v1388
      %v1582 = vpop.f32.mrb[0].mxu0
      %v1583 = vadd.f32 %v1422, %v1582
      %v1584 = vpop.f32.mrb[0].mxu0
      %v1585 = vpop.f32.mrb[0].mxu0
      %v1586 = vadd.f32 %v1422, %v1585
      %v1587 = vpop.f32.mrb[0].mxu0
      %1588 = vdwg.mxu0
      %v1589 = vmax.f32 %v1559, 0.0
      %v1590 = vmax.f32 %v1562, 0.0
      %v1591 = vmax.f32 %v1567, 0.0
      %v1592 = vmax.f32 %v1570, 0.0
      %v1593 = vmax.f32 %v1575, 0.0
      %v1594 = vmax.f32 %v1578, 0.0
      %v1595 = vmax.f32 %v1583, 0.0
      %v1596 = vmax.f32 %v1586, 0.0
      %v1597 = vpack.c.bf16 %v1590, %v1589
      %v1598 = vpack.c.bf16 %v1592, %v1591
      %v1599 = vpack.c.bf16 %v1594, %v1593
      %v1600 = vpack.c.bf16 %v1596, %v1595
      %v1601 = vld [vmem:[%s610] sm:$0xf]
      %v1602 = vld [vmem:[%s610 + $0x4] sm:$0xf]
      %v1603 = vld [vmem:[%s610 + $0x8] sm:$0xf]
      %v1604 = vld [vmem:[%s610 + $0xc] sm:$0xf]
      %v1605 = vld [vmem:[%s610 + $0x10] sm:$0xf]
      %v1606 = vld [vmem:[%s610 + $0x14] sm:$0xf]
      %v1607 = vld [vmem:[%s610 + $0x18] sm:$0xf]
      %v1608 = vld [vmem:[%s610 + $0x1c] sm:$0xf]
      %v1609 = vld [vmem:[%s610 + $0x20] sm:$0xf]
      %v1610 = vld [vmem:[%s610 + $0x24] sm:$0xf]
      %v1611 = vld [vmem:[%s610 + $0x28] sm:$0xf]
      %v1612 = vld [vmem:[%s610 + $0x2c] sm:$0xf]
      %v1613 = vld [vmem:[%s610 + $0x30] sm:$0xf]
      %v1614 = vld [vmem:[%s610 + $0x34] sm:$0x3]
      %v1615 = vld [vmem:[%s613] sm:$0x1]
      %v1617 = vlaneseq
      %v1618 = vshrl.u32 %v1617, 7
      %v1619 = vsub.s32 0, %v1618
      %v1620 = vrot.slane %v1615, %v1619
      %v1636 = vunpack.c.l.b16 %v1601
      %v1637 = vunpack.c.l.b16 %v1602
      %v1638 = vunpack.c.l.b16 %v1603
      %v1639 = vunpack.c.l.b16 %v1604
      %v1640 = vunpack.c.l.b16 %v1605
      %v1641 = vunpack.c.l.b16 %v1606
      %v1642 = vunpack.c.l.b16 %v1607
      %v1643 = vunpack.c.l.b16 %v1608
      %v1644 = vunpack.c.l.b16 %v1609
      %v1645 = vunpack.c.l.b16 %v1610
      %v1646 = vunpack.c.l.b16 %v1611
      %v1647 = vunpack.c.l.b16 %v1612
      %v1648 = vunpack.c.l.b16 %v1613
      %v1649 = vunpack.c.l.b16 %v1614
      %v1650 = vpack.c.b16 %v1637, %v1636
      %v1651 = vpack.c.b16 %v1639, %v1638
      %v1652 = vpack.c.b16 %v1641, %v1640
      %v1653 = vpack.c.b16 %v1643, %v1642
      %v1654 = vpack.c.b16 %v1645, %v1644
      %v1655 = vpack.c.b16 %v1647, %v1646
      %v1656 = vpack.c.b16 %v1649, %v1648
      %vm1663 = vcmask 875520
      %v1665 = vsel %vm1663, %v1597, 0
      %v1668 = vsel %vm1663, %v1598, 0
      %v1671 = vsel %vm1663, %v1599, 0
      %v1674 = vsel %vm1663, %v1600, 0
      %vm1676 = vcmask 1044480
      %vm1677 = vcmask 1045504
      %v1678 = vsel %vm1676, 4294967295, 65535
      %v1679 = vsel %vm1677, %v1678, 0
      %v1681 = vand.u32 %v1656, %v1679
      %1683 = vmatprep.subr.bf16.mxu0 0
      %1684 = vmatpush1.bf16.msra.mxu0 %v1650
      %1685 = vmatprep.subr.bf16.mxu0 0
      %1686 = vmatpush1.bf16.msra.mxu0 %v1651
      %1687 = vmatprep.subr.bf16.mxu0 0
      %1688 = vmatpush1.bf16.msra.mxu0 %v1652
      %1689 = vmatprep.subr.bf16.mxu0 0
      %1690 = vmatpush1.bf16.msra.mxu0 %v1653
      %1691 = vmatprep.subr.bf16.mxu0 0
      %1692 = vmatpush1.bf16.msra.mxu0 %v1654
      %1693 = vmatprep.subr.bf16.mxu0 0
      %1694 = vmatpush1.bf16.msra.mxu0 %v1655
      %1695 = vmatprep.subr.bf16.mxu0 0
      %1696 = vmatpush1.bf16.msra.mxu0 %v1681
      %1697 = vmatprep.subr.bf16.mxu0 0
      %1698 = vmatpush1.bf16.msra.mxu0 0
      %1699 = vmatprep.subr.bf16.mxu0 0
      %1700 = vmatpush1.bf16.msra.mxu0 0
      %1701 = vmatprep.subr.bf16.mxu0 0
      %1702 = vmatpush1.bf16.msra.mxu0 0
      %1703 = vmatprep.subr.bf16.mxu0 0
      %1704 = vmatpush1.bf16.msra.mxu0 0
      %1705 = vmatprep.subr.bf16.mxu0 0
      %1706 = vmatpush1.bf16.msra.mxu0 0
      %1707 = vmatprep.subr.bf16.mxu0 0
      %1708 = vmatpush1.bf16.msra.mxu0 0
      %1709 = vmatprep.subr.bf16.mxu0 0
      %1710 = vmatpush1.bf16.msra.mxu0 0
      %1711 = vmatprep.subr.bf16.mxu0 0
      %1712 = vmatpush1.bf16.msra.mxu0 0
      %1713 = vmatprep.subr.bf16.mxu0 0
      %1714 = vmatpush1.bf16.msra.mxu0 0
      %1715 = vmatprep.mubr.bf16.mxu0 0
      %1716 = vmatmul.mubr.bf16.gmra.mrb[0].mxu0 %v1665
      %v1717 = vpop.f32.mrb[0].mxu0
      %v1718 = vadd.f32 %v1620, %v1717
      %v1719 = vpop.f32.mrb[0].mxu0
      %v1720 = vpop.f32.mrb[0].mxu0
      %v1721 = vadd.f32 %v1620, %v1720
      %v1722 = vpop.f32.mrb[0].mxu0
      %1723 = vmatprep.mubr.bf16.mxu0 0
      %1724 = vmatmul.mubr.bf16.gmra.mrb[0].mxu0 %v1668
      %v1725 = vpop.f32.mrb[0].mxu0
      %v1726 = vadd.f32 %v1620, %v1725
      %v1727 = vpop.f32.mrb[0].mxu0
      %v1728 = vpop.f32.mrb[0].mxu0
      %v1729 = vadd.f32 %v1620, %v1728
      %v1730 = vpop.f32.mrb[0].mxu0
      %1731 = vmatprep.mubr.bf16.mxu0 0
      %1732 = vmatmul.mubr.bf16.gmra.mrb[0].mxu0 %v1671
      %v1733 = vpop.f32.mrb[0].mxu0
      %v1734 = vadd.f32 %v1620, %v1733
      %v1735 = vpop.f32.mrb[0].mxu0
      %v1736 = vpop.f32.mrb[0].mxu0
      %v1737 = vadd.f32 %v1620, %v1736
      %v1738 = vpop.f32.mrb[0].mxu0
      %1739 = vmatprep.mubr.bf16.mxu0 0
      %1740 = vmatmul.mubr.bf16.gmra.mrb[0].mxu0 %v1674
      %v1741 = vpop.f32.mrb[0].mxu0
      %v1742 = vadd.f32 %v1620, %v1741
      %v1743 = vpop.f32.mrb[0].mxu0
      %v1744 = vpop.f32.mrb[0].mxu0
      %v1745 = vadd.f32 %v1620, %v1744
      %v1746 = vpop.f32.mrb[0].mxu0
      %1747 = vdwg.mxu0
      %v1748 = vmax.f32 %v1718, 0.0
      %v1749 = vmax.f32 %v1721, 0.0
      %v1750 = vmax.f32 %v1726, 0.0
      %v1751 = vmax.f32 %v1729, 0.0
      %v1752 = vmax.f32 %v1734, 0.0
      %v1753 = vmax.f32 %v1737, 0.0
      %v1754 = vmax.f32 %v1742, 0.0
      %v1755 = vmax.f32 %v1745, 0.0
      %v1756 = vpack.c.bf16 %v1749, %v1748
      %v1757 = vpack.c.bf16 %v1751, %v1750
      %v1758 = vpack.c.bf16 %v1753, %v1752
      %v1759 = vpack.c.bf16 %v1755, %v1754
      %v1760 = vld [vmem:[%s618] sm:$0xf]
      %v1761 = vld [vmem:[%s618 + $0x4] sm:$0xf]
      %v1762 = vld [vmem:[%s618 + $0x8] sm:$0xf]
      %v1763 = vld [vmem:[%s618 + $0xc] sm:$0xf]
      %v1764 = vld [vmem:[%s618 + $0x10] sm:$0xf]
      %v1765 = vld [vmem:[%s618 + $0x14] sm:$0xf]
      %v1766 = vld [vmem:[%s618 + $0x18] sm:$0x7]
      %v1767 = vld [vmem:[%s621] sm:$0x1]
      %v1769 = vlaneseq
      %v1770 = vshrl.u32 %v1769, 7
      %v1771 = vsub.s32 0, %v1770
      %v1772 = vrot.slane %v1767, %v1771
      %v1781 = vunpack.c.l.b16 %v1760
      %v1782 = vunpack.c.l.b16 %v1761
      %v1783 = vunpack.c.l.b16 %v1762
      %v1784 = vunpack.c.l.b16 %v1763
      %v1785 = vunpack.c.l.b16 %v1764
      %v1786 = vunpack.c.l.b16 %v1765
      %v1787 = vunpack.c.l.b16 %v1766
      %v1788 = vpack.c.b16 %v1782, %v1781
      %v1789 = vpack.c.b16 %v1784, %v1783
      %v1790 = vpack.c.b16 %v1786, %v1785
      %v1791 = vpack.c.b16 %v1787, %v1787
      %vm1795 = vcmask 433152
      %v1797 = vsel %vm1795, %v1756, 0
      %v1800 = vsel %vm1795, %v1757, 0
      %v1803 = vsel %vm1795, %v1758, 0
      %v1806 = vsel %vm1795, %v1759, 0
      %v1808 = vsel %vm955, 4294967295, 65535
      %v1809 = vsel %vm1518, %v1808, 0
      %v1811 = vand.u32 %v1791, %v1809
      %1813 = vmatprep.subr.bf16.mxu0 0
      %1814 = vmatpush1.bf16.msra.mxu0 %v1788
      %1815 = vmatprep.subr.bf16.mxu0 0
      %1816 = vmatpush1.bf16.msra.mxu0 %v1789
      %1817 = vmatprep.subr.bf16.mxu0 0
      %1818 = vmatpush1.bf16.msra.mxu0 %v1790
      %1819 = vmatprep.subr.bf16.mxu0 0
      %1820 = vmatpush1.bf16.msra.mxu0 %v1811
      %1821 = vmatprep.subr.bf16.mxu0 0
      %1822 = vmatpush1.bf16.msra.mxu0 0
      %1823 = vmatprep.subr.bf16.mxu0 0
      %1824 = vmatpush1.bf16.msra.mxu0 0
      %1825 = vmatprep.subr.bf16.mxu0 0
      %1826 = vmatpush1.bf16.msra.mxu0 0
      %1827 = vmatprep.subr.bf16.mxu0 0
      %1828 = vmatpush1.bf16.msra.mxu0 0
      %1829 = vmatprep.subr.bf16.mxu0 0
      %1830 = vmatpush1.bf16.msra.mxu0 0
      %1831 = vmatprep.subr.bf16.mxu0 0
      %1832 = vmatpush1.bf16.msra.mxu0 0
      %1833 = vmatprep.subr.bf16.mxu0 0
      %1834 = vmatpush1.bf16.msra.mxu0 0
      %1835 = vmatprep.subr.bf16.mxu0 0
      %1836 = vmatpush1.bf16.msra.mxu0 0
      %1837 = vmatprep.subr.bf16.mxu0 0
      %1838 = vmatpush1.bf16.msra.mxu0 0
      %1839 = vmatprep.subr.bf16.mxu0 0
      %1840 = vmatpush1.bf16.msra.mxu0 0
      %1841 = vmatprep.subr.bf16.mxu0 0
      %1842 = vmatpush1.bf16.msra.mxu0 0
      %1843 = vmatprep.subr.bf16.mxu0 0
      %1844 = vmatpush1.bf16.msra.mxu0 0
      %1845 = vmatprep.mubr.bf16.mxu0 0
      %1846 = vmatmul.mubr.bf16.gmra.mrb[0].mxu0 %v1797
      %v1847 = vpop.f32.mrb[0].mxu0
      %v1848 = vadd.f32 %v1772, %v1847
      %v1849 = vpop.f32.mrb[0].mxu0
      %v1850 = vpop.f32.mrb[0].mxu0
      %v1851 = vadd.f32 %v1772, %v1850
      %v1852 = vpop.f32.mrb[0].mxu0
      %1853 = vmatprep.mubr.bf16.mxu0 0
      %1854 = vmatmul.mubr.bf16.gmra.mrb[0].mxu0 %v1800
      %v1855 = vpop.f32.mrb[0].mxu0
      %v1856 = vadd.f32 %v1772, %v1855
      %v1857 = vpop.f32.mrb[0].mxu0
      %v1858 = vpop.f32.mrb[0].mxu0
      %v1859 = vadd.f32 %v1772, %v1858
      %v1860 = vpop.f32.mrb[0].mxu0
      %1861 = vmatprep.mubr.bf16.mxu0 0
      %1862 = vmatmul.mubr.bf16.gmra.mrb[0].mxu0 %v1803
      %v1863 = vpop.f32.mrb[0].mxu0
      %v1864 = vadd.f32 %v1772, %v1863
      %v1865 = vpop.f32.mrb[0].mxu0
      %v1866 = vpop.f32.mrb[0].mxu0
      %v1867 = vadd.f32 %v1772, %v1866
      %v1868 = vpop.f32.mrb[0].mxu0
      %1869 = vmatprep.mubr.bf16.mxu0 0
      %1870 = vmatmul.mubr.bf16.gmra.mrb[0].mxu0 %v1806
      %v1871 = vpop.f32.mrb[0].mxu0
      %v1872 = vadd.f32 %v1772, %v1871
      %v1873 = vpop.f32.mrb[0].mxu0
      %v1874 = vpop.f32.mrb[0].mxu0
      %v1875 = vadd.f32 %v1772, %v1874
      %v1876 = vpop.f32.mrb[0].mxu0
      %1877 = vdwg.mxu0
      %v1878 = vtanh.pop %v1848
      %v1879 = vtanh.pop %v1851
      %v1880 = vtanh.pop %v1856
      %v1881 = vtanh.pop %v1859
      %v1882 = vtanh.pop %v1864
      %v1883 = vtanh.pop %v1867
      %v1884 = vtanh.pop %v1872
      %v1885 = vtanh.pop %v1875
      %v1886 = vadd.f32 %v1878, %v628
      %v1887 = vadd.f32 %v1879, %v629
      %v1888 = vadd.f32 %v1880, %v630
      %v1889 = vadd.f32 %v1881, %v631
      %v1890 = vadd.f32 %v1882, %v632
      %v1891 = vadd.f32 %v1883, %v633
      %v1892 = vadd.f32 %v1884, %v634
      %v1893 = vadd.f32 %v1885, %v635
      %1894 = vst.msk [vmem:[%s626] sm:$0xff] %vm648, %v1886
      %1895 = vst.msk [vmem:[%s626 + $0x8] sm:$0xff] %vm648, %v1887
      %1896 = vst.msk [vmem:[%s626 + $0x10] sm:$0xff] %vm648, %v1888
      %1897 = vst.msk [vmem:[%s626 + $0x18] sm:$0xff] %vm648, %v1889
      %1898 = vst.msk [vmem:[%s626 + $0x20] sm:$0xff] %vm648, %v1890
      %1899 = vst.msk [vmem:[%s626 + $0x28] sm:$0xff] %vm648, %v1891
      %1900 = vst.msk [vmem:[%s626 + $0x30] sm:$0xff] %vm648, %v1892
      %1901 = vst.msk [vmem:[%s626 + $0x38] sm:$0xff] %vm648, %v1893
      %p1902 = scmp.lt.s32.totalorder %s25, 1
      %s1903 = scalar_select %p1902, %s25, 1
      %s1904 = smul.addr %s1903, 8
      %s1905 = smul.addr %s1904, 8
      %s1906 = scalar_lea.vmem %s14, %s1905
      // Predicated region
      $region77: #{ae_pointnet_dcg_forward.5} parent=75 // pred_check
        %p1907 = pneg %p387
      $region78: #{ae_pointnet_dcg_forward.5} parent=75 // pred_check_branch
        %1909 = sbr.rel (%p1907) target = $region80
      $region79: #{ae_pointnet_dcg_forward.5} parent=75 // pred_region
        _
      $region80: #{ae_pointnet_dcg_forward.5} parent=75 // pred_fallthru
        _
    $region76: #{ae_pointnet_dcg_forward.5} parent=5 // pred_fallthru
      _
    %p1910 = scmp.le.s32.totalorder 2, %s20
    // Predicated region
    $region81: #{ae_pointnet_dcg_forward.5} parent=5 // pred_check
      %p1911 = pneg %p1910
    $region82: #{ae_pointnet_dcg_forward.5} parent=5 // pred_check_branch
      %1913 = sbr.rel (%p1911) target = $region84
    $region83: #{ae_pointnet_dcg_forward.5} parent=5 // pred_region
      %s1914 = ssub.s32 %s20, 2
      // Predicated region
      $region85: #{ae_pointnet_dcg_forward.5} parent=83 // pred_check
        %p1915 = pneg %p393
      $region86: #{ae_pointnet_dcg_forward.5} parent=83 // pred_check_branch
        %1917 = sbr.rel (%p1915) target = $region88
      $region87: #{ae_pointnet_dcg_forward.5} parent=83 // pred_region
        %p1918 = scmp.lt.s32.totalorder %s26, 1
        %s1919 = scalar_select %p1918, %s26, 1
        %s1920 = smul.addr %s1919, 8
        %s1921 = smul.addr %s1920, 8
        %s1922 = scalar_lea.vmem %s14, %s1921
      $region88: #{ae_pointnet_dcg_forward.5} parent=83 // pred_fallthru
        _
    $region84: #{ae_pointnet_dcg_forward.5} parent=5 // pred_fallthru
      _
  $region6: #{ae_pointnet_dcg_forward.5} parent=0 // loop_footer
    %s24 = sadd.s32 1, %s20
  $region7: #{ae_pointnet_dcg_forward.5} parent=0 // loop_footer_branch
    %19 = sbr.rel target = $region3
  $region8: #{ae_pointnet_dcg_forward.5} parent=0 // loop_exit
    _

</llo_original>
